<compile_context>
chip_gen: v5e
topology: v5e:2x2
jax: 0.10.0
libtpu: 0.0.40
codegen_flags: <defaults>
</compile_context>

<pallas_src>
import numpy as np
import jax
import jax.numpy as jnp
from jax import lax
from jax.experimental import pallas as pl
from jax.experimental.pallas import tpu as pltpu

_BN_EPS = 1e-5
_LANE = 128


def _round_up(x, m):
    return (x + m - 1) // m * m


# ----------------------------------------------------------------------------
# Host-side construction of the structured operands fed to the fused kernel
# ----------------------------------------------------------------------------
def _fold_bn(gamma, beta, mean, var, conv_bias):
    s = gamma / jnp.sqrt(var + _BN_EPS)
    return s, beta + s * (conv_bias - mean)


def _build_banded_conv(wconv, k_rows, win, pad_out):
    """Banded conv matrices B[dy] so that   y = sum_dy act[dy:dy+R-2] @ B[dy]
    yields, for every conv-center row, the post-conv values at *both* 2x2-pool
    column offsets (stacked along lanes), already laid out in the next stage's
    (zero-)padded, 128-lane-aligned column format.

    wconv  : (3, 3, Cin, Cout)  [ky, kx, ci, co]
    k_rows : column width of the incoming activation layout (>= (win+2)*Cin)
    returns: (3, k_rows, 2*wc_pad), wc_pad
    """
    cin, cout = int(wconv.shape[2]), int(wconv.shape[3])
    wout = win // 2
    po = 1 if pad_out else 0
    assert k_rows >= (win + 2) * cin
    wc = (wout + 2 * po) * cout
    wc_pad = _round_up(wc, _LANE)

    pj, xo, dx, ci, co = np.meshgrid(np.arange(2), np.arange(wout),
                                     np.arange(3), np.arange(cin),
                                     np.arange(cout), indexing='ij')
    rows = ((2 * xo + pj + dx) * cin + ci).reshape(-1)
    cols = (pj * wc_pad + (xo + po) * cout + co).reshape(-1)
    dxf, cif, cof = dx.reshape(-1), ci.reshape(-1), co.reshape(-1)

    mats = []
    for dy in range(3):
        vals = wconv[dy][dxf, cif, cof]
        mats.append(jnp.zeros((k_rows, 2 * wc_pad), jnp.float32)
                    .at[rows, cols].set(vals))
    return jnp.stack(mats, axis=0), wc_pad


def _build_affine(scale_c, bias_c, win, pad_out, wc_pad):
    """Per-column BN scale/bias vectors matching the banded output layout.
    Pad columns get scale=bias=0 so relu(0*0+0)=0 keeps the padding exact."""
    cout = scale_c.shape[0]
    wout = win // 2
    po = 1 if pad_out else 0

    def block(v):
        zpad = jnp.zeros((po * cout,), jnp.float32)
        tail = jnp.zeros((wc_pad - (wout + 2 * po) * cout,), jnp.float32)
        return jnp.concatenate([zpad, jnp.tile(v, wout), zpad, tail])

    s = jnp.tile(block(scale_c.astype(jnp.float32)), 2).reshape(1, 2 * wc_pad)
    b = jnp.tile(block(bias_c.astype(jnp.float32)), 2).reshape(1, 2 * wc_pad)
    return s, b


def _build_row_pool(bt, hin, pad_out):
    """0/1 selection matrices S[pi] : (bt*PoutRows, bt*(hin+2)-2) such that
    max(S[0]@Y, S[1]@Y) is the 2x2-row-pooled activation, already embedded in
    the next stage's row-padded layout (pad rows come out exactly zero)."""
    pin = hin + 2
    hout = hin // 2
    po = 1 if pad_out else 0
    prows = hout + 2 * po
    r = bt * pin
    b, yo = np.meshgrid(np.arange(bt), np.arange(hout), indexing='ij')
    orow = (b * prows + yo + po).reshape(-1)
    mats = []
    for pi in range(2):
        irow = (b * pin + 2 * yo + pi).reshape(-1)
        mats.append(jnp.zeros((bt * prows, r - 2), jnp.float32)
                    .at[orow, irow].set(1.0))
    return jnp.stack(mats, axis=0)


def _build_classifier(fc_w, bt, hf, wf, feat_wpad):
    """Fold AdaptiveAvgPool((2,2)) (equal bins) + channel-first flatten + FC
    into per-row-of-feature-map matrices G[yo] plus per-image row selectors."""
    nc = int(fc_w.shape[0])
    cch = int(fc_w.shape[1]) // 4
    binh, binw = hf // 2, wf // 2
    xo, co = np.meshgrid(np.arange(wf), np.arange(cch), indexing='ij')
    gs = []
    for yo in range(hf):
        by = yo // binh
        bx = xo // binw
        flat = (co * 4 + by * 2 + bx).reshape(-1)          # torch (C,2,2) flatten
        g = fc_w[:, flat].T.astype(jnp.float32) / float(binh * binw)
        gs.append(jnp.zeros((feat_wpad, nc), jnp.float32).at[:wf * cch, :].set(g))
    g_stack = jnp.stack(gs, axis=0)                        # (hf, feat_wpad, nc)

    sels = []
    for yo in range(hf):
        sels.append(jnp.zeros((bt, bt * hf), jnp.float32)
                    .at[np.arange(bt), np.arange(bt) * hf + yo].set(1.0))
    return g_stack, jnp.stack(sels, axis=0)                # (hf, bt, bt*hf)


# ----------------------------------------------------------------------------
# The single fused Pallas kernel
# ----------------------------------------------------------------------------
def _make_kernel(bt, h, w):
    p1, p2, p3 = h + 2, h // 2 + 2, h // 4 + 2
    hf = h // 8
    r1, r2, r3 = bt * p1, bt * p2, bt * p3

    def conv_pool_stage(act_ref, rows, bm_ref, sc_ref, bi_ref, pool_ref):
        a = act_ref[...]
        y = jnp.dot(a[0:rows - 2, :], bm_ref[0],
                    preferred_element_type=jnp.float32)
        y = y + jnp.dot(a[1:rows - 1, :], bm_ref[1],
                        preferred_element_type=jnp.float32)
        y = y + jnp.dot(a[2:rows, :], bm_ref[2],
                        preferred_element_type=jnp.float32)
        y = jnp.maximum(y * sc_ref[...] + bi_ref[...], 0.0)   # BN + ReLU (f32 VPU)
        half = y.shape[1] // 2                                # 128-aligned split
        yc = jnp.maximum(y[:, :half], y[:, half:])            # pool: columns
        return jnp.maximum(                                   # pool: rows (+pad)
            jnp.dot(pool_ref[0], yc, preferred_element_type=jnp.float32),
            jnp.dot(pool_ref[1], yc, preferred_element_type=jnp.float32))

    def kernel(x_ref,
               bm1, sc1, bi1, pool1,
               bm2, sc2, bi2, pool2,
               bm3, sc3, bi3, pool3,
               g_ref, sel_ref, bfc_ref,
               out_ref, act2_ref, act3_ref):
        # block 1 / block 2 / block 3 -- all intermediates stay in VMEM
        act2_ref[...] = conv_pool_stage(x_ref, r1, bm1, sc1, bi1, pool1)
        act3_ref[...] = conv_pool_stage(act2_ref, r2, bm2, sc2, bi2, pool2)
        feat = conv_pool_stage(act3_ref, r3, bm3, sc3, bi3, pool3)  # (bt*hf, wc3)

        # classifier: avg-pool + flatten + Linear folded into G / Sel matrices
        logits = bfc_ref[...]
        for yo in range(hf):
            per_img = jnp.dot(sel_ref[yo], feat,
                              preferred_element_type=jnp.float32)   # (bt, wc3)
            logits = logits + jnp.dot(per_img, g_ref[yo],
                                      preferred_element_type=jnp.float32)
        out_ref[...] = logits

    return kernel


# ----------------------------------------------------------------------------
# Public forward (NCHW input, like the PyTorch module)
# ----------------------------------------------------------------------------
def compact_student_net_forward(x_nchw, params):
    n, cin, h, w = x_nchw.shape
    num_classes = int(params['fc_w'].shape[0])
    if cin != 1:
        raise ValueError("CompactStudentNet expects a single input channel")
    if h % 16 != 0 or w % 16 != 0:
        # TODO(synk): AdaptiveAvgPool2d((2,2)) with unequal/overlapping bins
        # (odd feature maps, e.g. 28x28 inputs) is not implemented.
        raise ValueError("H and W must be multiples of 16")

    # ---- fold parameters into per-stage effective 3x3 conv + affine --------
    w1 = jnp.transpose(params['conv1_w'], (2, 3, 1, 0))          # (3,3,1,16)
    cs1, cb1 = _fold_bn(params['bn1_gamma'], params['bn1_beta'],
                        params['bn1_mean'], params['bn1_var'], params['conv1_b'])
    w2 = jnp.transpose(params['conv2_w'], (2, 3, 1, 0))          # (3,3,16,32)
    cs2, cb2 = _fold_bn(params['bn2_gamma'], params['bn2_beta'],
                        params['bn2_mean'], params['bn2_var'], params['conv2_b'])
    # depthwise o pointwise (both linear, no activation in between) -> exact
    # fold into a single dense 3x3 conv with 64 outputs.
    dwk = jnp.transpose(params['dw_w'][:, 0], (1, 2, 0))         # (3,3,32)
    pwm = params['pw_w'][:, :, 0, 0].T                           # (32,64)
    w3 = dwk[:, :, :, None] * pwm[None, None, :, :]              # (3,3,32,64)
    b3 = params['dw_b'] @ pwm + params['pw_b']                   # (64,)
    cs3, cb3 = _fold_bn(params['bn3_gamma'], params['bn3_beta'],
                        params['bn3_mean'], params['bn3_var'], b3)

    # ---- batch tiling (grid axis is "parallel" -> v7x megacore) ------------
    bt = n if n <= 8 else 8
    n_pad = _round_up(n, bt)
    grid = n_pad // bt

    # ---- host-built structured operands -------------------------------------
    bm1, wc1 = _build_banded_conv(w1, w + 2, w, True)
    sc1v, bi1v = _build_affine(cs1, cb1, w, True, wc1)
    pool1 = _build_row_pool(bt, h, True)

    bm2, wc2 = _build_banded_conv(w2, wc1, w // 2, True)
    sc2v, bi2v = _build_affine(cs2, cb2, w // 2, True, wc2)
    pool2 = _build_row_pool(bt, h // 2, True)

    bm3, wc3 = _build_banded_conv(w3, wc2, w // 4, False)
    sc3v, bi3v = _build_affine(cs3, cb3, w // 4, False, wc3)
    pool3 = _build_row_pool(bt, h // 4, False)

    gmat, selmat = _build_classifier(params['fc_w'], bt, h // 8, w // 8, wc3)
    bfc = params['fc_b'].reshape(1, num_classes).astype(jnp.float32)

    # ---- input layout: rows = (image, padded_row), cols = padded_col --------
    x = x_nchw[:, 0].astype(jnp.float32)
    if n_pad != n:
        x = jnp.concatenate([x, jnp.zeros((n_pad - n, h, w), jnp.float32)], 0)
    x2d = jnp.pad(x, ((0, 0), (1, 1), (1, 1))).reshape(n_pad * (h + 2), w + 2)

    operands = [x2d, bm1, sc1v, bi1v, pool1, bm2, sc2v, bi2v, pool2,
                bm3, sc3v, bi3v, pool3, gmat, selmat, bfc]

    def _const_spec(arr):
        zeros = (0,) * arr.ndim
        return pl.BlockSpec(arr.shape, lambda i, _z=zeros: _z)

    in_specs = ([pl.BlockSpec((bt * (h + 2), w + 2), lambda i: (i, 0))]
                + [_const_spec(a) for a in operands[1:]])
    out_specs = pl.BlockSpec((bt, num_classes), lambda i: (i, 0))
    scratch = [pltpu.VMEM((bt * (h // 2 + 2), wc1), jnp.float32),
               pltpu.VMEM((bt * (h // 4 + 2), wc2), jnp.float32)]

    out = pl.pallas_call(
        _make_kernel(bt, h, w),
        out_shape=jax.ShapeDtypeStruct((n_pad, num_classes), jnp.float32),
        grid_spec=pltpu.PrefetchScalarGridSpec(
            num_scalar_prefetch=0,
            grid=(grid,),
            in_specs=in_specs,
            out_specs=out_specs,
            scratch_shapes=scratch),
        compiler_params=pltpu.CompilerParams(
            dimension_semantics=("parallel",),
            vmem_limit_bytes=32 * 1024 * 1024),
    )(*operands)
    return out[:n]


# ----------------------------------------------------------------------------
# Deterministic parameter init (PyTorch layouts)
# ----------------------------------------------------------------------------
def init_torch_params(key, num_classes=10):
    ks = iter(jax.random.split(key, 22))

    def nrm(shape, s=0.1):
        return s * jax.random.normal(next(ks), shape, dtype=jnp.float32)

    def uni(shape, lo=0.5, hi=1.5):
        return jax.random.uniform(next(ks), shape, jnp.float32, lo, hi)

    p = {}
    p['conv1_w'] = nrm((16, 1, 3, 3));  p['conv1_b'] = nrm((16,))
    p['bn1_gamma'] = uni((16,), 0.8, 1.2); p['bn1_beta'] = nrm((16,))
    p['bn1_mean'] = nrm((16,));         p['bn1_var'] = uni((16,))
    p['conv2_w'] = nrm((32, 16, 3, 3)); p['conv2_b'] = nrm((32,))
    p['bn2_gamma'] = uni((32,), 0.8, 1.2); p['bn2_beta'] = nrm((32,))
    p['bn2_mean'] = nrm((32,));         p['bn2_var'] = uni((32,))
    p['dw_w'] = nrm((32, 1, 3, 3));     p['dw_b'] = nrm((32,))
    p['pw_w'] = nrm((64, 32, 1, 1));    p['pw_b'] = nrm((64,))
    p['bn3_gamma'] = uni((64,), 0.8, 1.2); p['bn3_beta'] = nrm((64,))
    p['bn3_mean'] = nrm((64,));         p['bn3_var'] = uni((64,))
    p['fc_w'] = nrm((num_classes, 64 * 2 * 2)); p['fc_b'] = nrm((num_classes,))
    return p


# ----------------------------------------------------------------------------
# Pure-JAX reference (same semantics as the PyTorch module in eval mode)
# ----------------------------------------------------------------------------
def ref_forward(x_nchw, p):
    x = jnp.transpose(x_nchw, (0, 2, 3, 1)).astype(jnp.float32)
    dn = ('NHWC', 'OIHW', 'NHWC')

    def conv(x, wgt, b, groups=1):
        pad = ((1, 1), (1, 1)) if wgt.shape[-1] == 3 else ((0, 0), (0, 0))
        y = lax.conv_general_dilated(x, wgt, (1, 1), pad, dimension_numbers=dn,
                                     feature_group_count=groups,
                                     precision=lax.Precision.HIGHEST)
        return y + b.reshape(1, 1, 1, -1)

    def bn(x, g, bt, m, v):
        return (x - m) / jnp.sqrt(v + _BN_EPS) * g + bt

    def pool(x):
        return lax.reduce_window(x, -jnp.inf, lax.max, (1, 2, 2, 1),
                                 (1, 2, 2, 1), 'VALID')

    x = pool(jax.nn.relu(bn(conv(x, p['conv1_w'], p['conv1_b']),
                            p['bn1_gamma'], p['bn1_beta'],
                            p['bn1_mean'], p['bn1_var'])))
    x = pool(jax.nn.relu(bn(conv(x, p['conv2_w'], p['conv2_b']),
                            p['bn2_gamma'], p['bn2_beta'],
                            p['bn2_mean'], p['bn2_var'])))
    x = conv(x, p['dw_w'], p['dw_b'], groups=32)
    x = conv(x, p['pw_w'], p['pw_b'])
    x = pool(jax.nn.relu(bn(x, p['bn3_gamma'], p['bn3_beta'],
                            p['bn3_mean'], p['bn3_var'])))
    n, hf, wf, c = x.shape
    x = x.reshape(n, 2, hf // 2, 2, wf // 2, c).mean(axis=(2, 4))   # (n,2,2,c)
    x = jnp.transpose(x, (0, 3, 1, 2)).reshape(n, -1)               # torch flatten
    return x @ p['fc_w'].T + p['fc_b']


if __name__ == "__main__":
    key = jax.random.PRNGKey(0)
    pkey, xkey = jax.random.split(key)

    params = init_torch_params(pkey, num_classes=10)

    # NCHW input, single channel, small spatial size.
    x = jax.random.normal(xkey, (2, 1, 16, 16), dtype=jnp.float32)

    fwd = jax.jit(compact_student_net_forward)
    out = jax.block_until_ready(fwd(x, params))

    ref = ref_forward(x, params)
    np.testing.assert_allclose(np.asarray(out), np.asarray(ref),
                               rtol=2e-2, atol=2e-2)
    assert out.shape == (2, 10)
    print("KERNEL_OK")
</pallas_src>

<mosaic_0001>
module attributes {stable_mosaic.version = 11 : i64} {
  func.func @kernel(%arg0: i32, %arg1: memref<36x18xf32, #tpu.memory_space<vmem>>, %arg2: memref<3x18x512xf32, #tpu.memory_space<vmem>>, %arg3: memref<1x512xf32, #tpu.memory_space<vmem>>, %arg4: memref<1x512xf32, #tpu.memory_space<vmem>>, %arg5: memref<2x20x34xf32, #tpu.memory_space<vmem>>, %arg6: memref<3x256x512xf32, #tpu.memory_space<vmem>>, %arg7: memref<1x512xf32, #tpu.memory_space<vmem>>, %arg8: memref<1x512xf32, #tpu.memory_space<vmem>>, %arg9: memref<2x12x18xf32, #tpu.memory_space<vmem>>, %arg10: memref<3x256x256xf32, #tpu.memory_space<vmem>>, %arg11: memref<1x256xf32, #tpu.memory_space<vmem>>, %arg12: memref<1x256xf32, #tpu.memory_space<vmem>>, %arg13: memref<2x4x10xf32, #tpu.memory_space<vmem>>, %arg14: memref<2x128x10xf32, #tpu.memory_space<vmem>>, %arg15: memref<2x2x4xf32, #tpu.memory_space<vmem>>, %arg16: memref<1x10xf32, #tpu.memory_space<vmem>>, %arg17: memref<2x10xf32, #tpu.memory_space<vmem>>, %arg18: memref<20x256xf32, #tpu.memory_space<vmem>>, %arg19: memref<12x256xf32, #tpu.memory_space<vmem>>) attributes {dimension_semantics = [#tpu.dimension_semantics<parallel>], iteration_bounds = array<i64: 1>, scalar_prefetch = 0 : i64, scratch_operands = 2 : i64, tpu.core_type = #tpu.core_type<tc>, window_params = [{transform_indices = @transform_0, window_bounds = array<i64: 36, 18>}, {pipeline_mode = #tpu.pipeline_mode<synchronous>, transform_indices = @transform_1, window_bounds = array<i64: 3, 18, 512>}, {pipeline_mode = #tpu.pipeline_mode<synchronous>, transform_indices = @transform_2, window_bounds = array<i64: 1, 512>}, {pipeline_mode = #tpu.pipeline_mode<synchronous>, transform_indices = @transform_3, window_bounds = array<i64: 1, 512>}, {pipeline_mode = #tpu.pipeline_mode<synchronous>, transform_indices = @transform_4, window_bounds = array<i64: 2, 20, 34>}, {pipeline_mode = #tpu.pipeline_mode<synchronous>, transform_indices = @transform_5, window_bounds = array<i64: 3, 256, 512>}, {pipeline_mode = #tpu.pipeline_mode<synchronous>, transform_indices = @transform_6, window_bounds = array<i64: 1, 512>}, {pipeline_mode = #tpu.pipeline_mode<synchronous>, transform_indices = @transform_7, window_bounds = array<i64: 1, 512>}, {pipeline_mode = #tpu.pipeline_mode<synchronous>, transform_indices = @transform_8, window_bounds = array<i64: 2, 12, 18>}, {pipeline_mode = #tpu.pipeline_mode<synchronous>, transform_indices = @transform_9, window_bounds = array<i64: 3, 256, 256>}, {pipeline_mode = #tpu.pipeline_mode<synchronous>, transform_indices = @transform_10, window_bounds = array<i64: 1, 256>}, {pipeline_mode = #tpu.pipeline_mode<synchronous>, transform_indices = @transform_11, window_bounds = array<i64: 1, 256>}, {pipeline_mode = #tpu.pipeline_mode<synchronous>, transform_indices = @transform_12, window_bounds = array<i64: 2, 4, 10>}, {pipeline_mode = #tpu.pipeline_mode<synchronous>, transform_indices = @transform_13, window_bounds = array<i64: 2, 128, 10>}, {pipeline_mode = #tpu.pipeline_mode<synchronous>, transform_indices = @transform_14, window_bounds = array<i64: 2, 2, 4>}, {pipeline_mode = #tpu.pipeline_mode<synchronous>, transform_indices = @transform_15, window_bounds = array<i64: 1, 10>}, {transform_indices = @transform_16, window_bounds = array<i64: 2, 10>}]} {
    %c0 = arith.constant 0 : index
    %c0_0 = arith.constant 0 : index
    %0 = vector.load %arg1[%c0, %c0_0] : memref<36x18xf32, #tpu.memory_space<vmem>>, vector<36x18xf32>
    %1 = vector.extract_strided_slice %0 {offsets = [0, 0], sizes = [34, 18], strides = [1, 1]} : vector<36x18xf32> to vector<34x18xf32>
    %c0_1 = arith.constant 0 : index
    %c0_2 = arith.constant 0 : index
    %c0_3 = arith.constant 0 : index
    %2 = vector.load %arg2[%c0_1, %c0_2, %c0_3] : memref<3x18x512xf32, #tpu.memory_space<vmem>>, vector<1x18x512xf32>
    %3 = vector.shape_cast %2 : vector<1x18x512xf32> to vector<18x512xf32>
    %cst = arith.constant dense<0.000000e+00> : vector<34x512xf32>
    %4 = tpu.matmul %1, %3, %cst {dimension_numbers = #tpu.dot_dimension_numbers<[1], [0], [0], [1], [0, 0, 1, 1], [], []>} : vector<34x18xf32>, vector<18x512xf32>, vector<34x512xf32> -> vector<34x512xf32>
    %5 = vector.extract_strided_slice %0 {offsets = [1, 0], sizes = [34, 18], strides = [1, 1]} : vector<36x18xf32> to vector<34x18xf32>
    %c1 = arith.constant 1 : index
    %c0_4 = arith.constant 0 : index
    %c0_5 = arith.constant 0 : index
    %6 = vector.load %arg2[%c1, %c0_4, %c0_5] : memref<3x18x512xf32, #tpu.memory_space<vmem>>, vector<1x18x512xf32>
    %7 = vector.shape_cast %6 : vector<1x18x512xf32> to vector<18x512xf32>
    %cst_6 = arith.constant dense<0.000000e+00> : vector<34x512xf32>
    %8 = tpu.matmul %5, %7, %cst_6 {dimension_numbers = #tpu.dot_dimension_numbers<[1], [0], [0], [1], [0, 0, 1, 1], [], []>} : vector<34x18xf32>, vector<18x512xf32>, vector<34x512xf32> -> vector<34x512xf32>
    %9 = arith.addf %4, %8 : vector<34x512xf32>
    %10 = vector.extract_strided_slice %0 {offsets = [2, 0], sizes = [34, 18], strides = [1, 1]} : vector<36x18xf32> to vector<34x18xf32>
    %c2 = arith.constant 2 : index
    %c0_7 = arith.constant 0 : index
    %c0_8 = arith.constant 0 : index
    %11 = vector.load %arg2[%c2, %c0_7, %c0_8] : memref<3x18x512xf32, #tpu.memory_space<vmem>>, vector<1x18x512xf32>
    %12 = vector.shape_cast %11 : vector<1x18x512xf32> to vector<18x512xf32>
    %cst_9 = arith.constant dense<0.000000e+00> : vector<34x512xf32>
    %13 = tpu.matmul %10, %12, %cst_9 {dimension_numbers = #tpu.dot_dimension_numbers<[1], [0], [0], [1], [0, 0, 1, 1], [], []>} : vector<34x18xf32>, vector<18x512xf32>, vector<34x512xf32> -> vector<34x512xf32>
    %14 = arith.addf %9, %13 : vector<34x512xf32>
    %c0_10 = arith.constant 0 : index
    %c0_11 = arith.constant 0 : index
    %15 = vector.load %arg3[%c0_10, %c0_11] : memref<1x512xf32, #tpu.memory_space<vmem>>, vector<1x512xf32>
    %16 = vector.broadcast %15 : vector<1x512xf32> to vector<34x512xf32>
    %17 = arith.mulf %14, %16 : vector<34x512xf32>
    %c0_12 = arith.constant 0 : index
    %c0_13 = arith.constant 0 : index
    %18 = vector.load %arg4[%c0_12, %c0_13] : memref<1x512xf32, #tpu.memory_space<vmem>>, vector<1x512xf32>
    %19 = vector.broadcast %18 : vector<1x512xf32> to vector<34x512xf32>
    %20 = arith.addf %17, %19 : vector<34x512xf32>
    %cst_14 = arith.constant 0.000000e+00 : f32
    %21 = vector.broadcast %cst_14 : f32 to vector<34x512xf32>
    %22 = arith.maximumf %20, %21 : vector<34x512xf32>
    %23 = vector.extract_strided_slice %22 {offsets = [0, 0], sizes = [34, 256], strides = [1, 1]} : vector<34x512xf32> to vector<34x256xf32>
    %24 = vector.extract_strided_slice %22 {offsets = [0, 256], sizes = [34, 256], strides = [1, 1]} : vector<34x512xf32> to vector<34x256xf32>
    %25 = arith.maximumf %23, %24 : vector<34x256xf32>
    %c0_15 = arith.constant 0 : index
    %c0_16 = arith.constant 0 : index
    %c0_17 = arith.constant 0 : index
    %26 = vector.load %arg5[%c0_15, %c0_16, %c0_17] : memref<2x20x34xf32, #tpu.memory_space<vmem>>, vector<1x20x34xf32>
    %27 = vector.shape_cast %26 : vector<1x20x34xf32> to vector<20x34xf32>
    %cst_18 = arith.constant dense<0.000000e+00> : vector<20x256xf32>
    %28 = tpu.matmul %27, %25, %cst_18 {dimension_numbers = #tpu.dot_dimension_numbers<[1], [0], [0], [1], [0, 0, 1, 1], [], []>} : vector<20x34xf32>, vector<34x256xf32>, vector<20x256xf32> -> vector<20x256xf32>
    %c1_19 = arith.constant 1 : index
    %c0_20 = arith.constant 0 : index
    %c0_21 = arith.constant 0 : index
    %29 = vector.load %arg5[%c1_19, %c0_20, %c0_21] : memref<2x20x34xf32, #tpu.memory_space<vmem>>, vector<1x20x34xf32>
    %30 = vector.shape_cast %29 : vector<1x20x34xf32> to vector<20x34xf32>
    %cst_22 = arith.constant dense<0.000000e+00> : vector<20x256xf32>
    %31 = tpu.matmul %30, %25, %cst_22 {dimension_numbers = #tpu.dot_dimension_numbers<[1], [0], [0], [1], [0, 0, 1, 1], [], []>} : vector<20x34xf32>, vector<34x256xf32>, vector<20x256xf32> -> vector<20x256xf32>
    %32 = arith.maximumf %28, %31 : vector<20x256xf32>
    %c0_23 = arith.constant 0 : index
    %c0_24 = arith.constant 0 : index
    %33 = vector.load %arg18[%c0_23, %c0_24] : memref<20x256xf32, #tpu.memory_space<vmem>>, vector<20x256xf32>
    tpu.vector_store %arg18[%c0_23, %c0_24], %32 {strides = array<i32>} : memref<20x256xf32, #tpu.memory_space<vmem>>, vector<20x256xf32>,
    %c0_25 = arith.constant 0 : index
    %c0_26 = arith.constant 0 : index
    %34 = vector.load %arg18[%c0_25, %c0_26] : memref<20x256xf32, #tpu.memory_space<vmem>>, vector<20x256xf32>
    %35 = vector.extract_strided_slice %34 {offsets = [0, 0], sizes = [18, 256], strides = [1, 1]} : vector<20x256xf32> to vector<18x256xf32>
    %c0_27 = arith.constant 0 : index
    %c0_28 = arith.constant 0 : index
    %c0_29 = arith.constant 0 : index
    %36 = vector.load %arg6[%c0_27, %c0_28, %c0_29] : memref<3x256x512xf32, #tpu.memory_space<vmem>>, vector<1x256x512xf32>
    %37 = vector.shape_cast %36 : vector<1x256x512xf32> to vector<256x512xf32>
    %cst_30 = arith.constant dense<0.000000e+00> : vector<18x512xf32>
    %38 = tpu.matmul %35, %37, %cst_30 {dimension_numbers = #tpu.dot_dimension_numbers<[1], [0], [0], [1], [0, 0, 1, 1], [], []>} : vector<18x256xf32>, vector<256x512xf32>, vector<18x512xf32> -> vector<18x512xf32>
    %39 = vector.extract_strided_slice %34 {offsets = [1, 0], sizes = [18, 256], strides = [1, 1]} : vector<20x256xf32> to vector<18x256xf32>
    %c1_31 = arith.constant 1 : index
    %c0_32 = arith.constant 0 : index
    %c0_33 = arith.constant 0 : index
    %40 = vector.load %arg6[%c1_31, %c0_32, %c0_33] : memref<3x256x512xf32, #tpu.memory_space<vmem>>, vector<1x256x512xf32>
    %41 = vector.shape_cast %40 : vector<1x256x512xf32> to vector<256x512xf32>
    %cst_34 = arith.constant dense<0.000000e+00> : vector<18x512xf32>
    %42 = tpu.matmul %39, %41, %cst_34 {dimension_numbers = #tpu.dot_dimension_numbers<[1], [0], [0], [1], [0, 0, 1, 1], [], []>} : vector<18x256xf32>, vector<256x512xf32>, vector<18x512xf32> -> vector<18x512xf32>
    %43 = arith.addf %38, %42 : vector<18x512xf32>
    %44 = vector.extract_strided_slice %34 {offsets = [2, 0], sizes = [18, 256], strides = [1, 1]} : vector<20x256xf32> to vector<18x256xf32>
    %c2_35 = arith.constant 2 : index
    %c0_36 = arith.constant 0 : index
    %c0_37 = arith.constant 0 : index
    %45 = vector.load %arg6[%c2_35, %c0_36, %c0_37] : memref<3x256x512xf32, #tpu.memory_space<vmem>>, vector<1x256x512xf32>
    %46 = vector.shape_cast %45 : vector<1x256x512xf32> to vector<256x512xf32>
    %cst_38 = arith.constant dense<0.000000e+00> : vector<18x512xf32>
    %47 = tpu.matmul %44, %46, %cst_38 {dimension_numbers = #tpu.dot_dimension_numbers<[1], [0], [0], [1], [0, 0, 1, 1], [], []>} : vector<18x256xf32>, vector<256x512xf32>, vector<18x512xf32> -> vector<18x512xf32>
    %48 = arith.addf %43, %47 : vector<18x512xf32>
    %c0_39 = arith.constant 0 : index
    %c0_40 = arith.constant 0 : index
    %49 = vector.load %arg7[%c0_39, %c0_40] : memref<1x512xf32, #tpu.memory_space<vmem>>, vector<1x512xf32>
    %50 = vector.broadcast %49 : vector<1x512xf32> to vector<18x512xf32>
    %51 = arith.mulf %48, %50 : vector<18x512xf32>
    %c0_41 = arith.constant 0 : index
    %c0_42 = arith.constant 0 : index
    %52 = vector.load %arg8[%c0_41, %c0_42] : memref<1x512xf32, #tpu.memory_space<vmem>>, vector<1x512xf32>
    %53 = vector.broadcast %52 : vector<1x512xf32> to vector<18x512xf32>
    %54 = arith.addf %51, %53 : vector<18x512xf32>
    %cst_43 = arith.constant 0.000000e+00 : f32
    %55 = vector.broadcast %cst_43 : f32 to vector<18x512xf32>
    %56 = arith.maximumf %54, %55 : vector<18x512xf32>
    %57 = vector.extract_strided_slice %56 {offsets = [0, 0], sizes = [18, 256], strides = [1, 1]} : vector<18x512xf32> to vector<18x256xf32>
    %58 = vector.extract_strided_slice %56 {offsets = [0, 256], sizes = [18, 256], strides = [1, 1]} : vector<18x512xf32> to vector<18x256xf32>
    %59 = arith.maximumf %57, %58 : vector<18x256xf32>
    %c0_44 = arith.constant 0 : index
    %c0_45 = arith.constant 0 : index
    %c0_46 = arith.constant 0 : index
    %60 = vector.load %arg9[%c0_44, %c0_45, %c0_46] : memref<2x12x18xf32, #tpu.memory_space<vmem>>, vector<1x12x18xf32>
    %61 = vector.shape_cast %60 : vector<1x12x18xf32> to vector<12x18xf32>
    %cst_47 = arith.constant dense<0.000000e+00> : vector<12x256xf32>
    %62 = tpu.matmul %61, %59, %cst_47 {dimension_numbers = #tpu.dot_dimension_numbers<[1], [0], [0], [1], [0, 0, 1, 1], [], []>} : vector<12x18xf32>, vector<18x256xf32>, vector<12x256xf32> -> vector<12x256xf32>
    %c1_48 = arith.constant 1 : index
    %c0_49 = arith.constant 0 : index
    %c0_50 = arith.constant 0 : index
    %63 = vector.load %arg9[%c1_48, %c0_49, %c0_50] : memref<2x12x18xf32, #tpu.memory_space<vmem>>, vector<1x12x18xf32>
    %64 = vector.shape_cast %63 : vector<1x12x18xf32> to vector<12x18xf32>
    %cst_51 = arith.constant dense<0.000000e+00> : vector<12x256xf32>
    %65 = tpu.matmul %64, %59, %cst_51 {dimension_numbers = #tpu.dot_dimension_numbers<[1], [0], [0], [1], [0, 0, 1, 1], [], []>} : vector<12x18xf32>, vector<18x256xf32>, vector<12x256xf32> -> vector<12x256xf32>
    %66 = arith.maximumf %62, %65 : vector<12x256xf32>
    %c0_52 = arith.constant 0 : index
    %c0_53 = arith.constant 0 : index
    %67 = vector.load %arg19[%c0_52, %c0_53] : memref<12x256xf32, #tpu.memory_space<vmem>>, vector<12x256xf32>
    tpu.vector_store %arg19[%c0_52, %c0_53], %66 {strides = array<i32>} : memref<12x256xf32, #tpu.memory_space<vmem>>, vector<12x256xf32>,
    %c0_54 = arith.constant 0 : index
    %c0_55 = arith.constant 0 : index
    %68 = vector.load %arg19[%c0_54, %c0_55] : memref<12x256xf32, #tpu.memory_space<vmem>>, vector<12x256xf32>
    %69 = vector.extract_strided_slice %68 {offsets = [0, 0], sizes = [10, 256], strides = [1, 1]} : vector<12x256xf32> to vector<10x256xf32>
    %c0_56 = arith.constant 0 : index
    %c0_57 = arith.constant 0 : index
    %c0_58 = arith.constant 0 : index
    %70 = vector.load %arg10[%c0_56, %c0_57, %c0_58] : memref<3x256x256xf32, #tpu.memory_space<vmem>>, vector<1x256x256xf32>
    %71 = vector.shape_cast %70 : vector<1x256x256xf32> to vector<256x256xf32>
    %cst_59 = arith.constant dense<0.000000e+00> : vector<10x256xf32>
    %72 = tpu.matmul %69, %71, %cst_59 {dimension_numbers = #tpu.dot_dimension_numbers<[1], [0], [0], [1], [0, 0, 1, 1], [], []>} : vector<10x256xf32>, vector<256x256xf32>, vector<10x256xf32> -> vector<10x256xf32>
    %73 = vector.extract_strided_slice %68 {offsets = [1, 0], sizes = [10, 256], strides = [1, 1]} : vector<12x256xf32> to vector<10x256xf32>
    %c1_60 = arith.constant 1 : index
    %c0_61 = arith.constant 0 : index
    %c0_62 = arith.constant 0 : index
    %74 = vector.load %arg10[%c1_60, %c0_61, %c0_62] : memref<3x256x256xf32, #tpu.memory_space<vmem>>, vector<1x256x256xf32>
    %75 = vector.shape_cast %74 : vector<1x256x256xf32> to vector<256x256xf32>
    %cst_63 = arith.constant dense<0.000000e+00> : vector<10x256xf32>
    %76 = tpu.matmul %73, %75, %cst_63 {dimension_numbers = #tpu.dot_dimension_numbers<[1], [0], [0], [1], [0, 0, 1, 1], [], []>} : vector<10x256xf32>, vector<256x256xf32>, vector<10x256xf32> -> vector<10x256xf32>
    %77 = arith.addf %72, %76 : vector<10x256xf32>
    %78 = vector.extract_strided_slice %68 {offsets = [2, 0], sizes = [10, 256], strides = [1, 1]} : vector<12x256xf32> to vector<10x256xf32>
    %c2_64 = arith.constant 2 : index
    %c0_65 = arith.constant 0 : index
    %c0_66 = arith.constant 0 : index
    %79 = vector.load %arg10[%c2_64, %c0_65, %c0_66] : memref<3x256x256xf32, #tpu.memory_space<vmem>>, vector<1x256x256xf32>
    %80 = vector.shape_cast %79 : vector<1x256x256xf32> to vector<256x256xf32>
    %cst_67 = arith.constant dense<0.000000e+00> : vector<10x256xf32>
    %81 = tpu.matmul %78, %80, %cst_67 {dimension_numbers = #tpu.dot_dimension_numbers<[1], [0], [0], [1], [0, 0, 1, 1], [], []>} : vector<10x256xf32>, vector<256x256xf32>, vector<10x256xf32> -> vector<10x256xf32>
    %82 = arith.addf %77, %81 : vector<10x256xf32>
    %c0_68 = arith.constant 0 : index
    %c0_69 = arith.constant 0 : index
    %83 = vector.load %arg11[%c0_68, %c0_69] : memref<1x256xf32, #tpu.memory_space<vmem>>, vector<1x256xf32>
    %84 = vector.broadcast %83 : vector<1x256xf32> to vector<10x256xf32>
    %85 = arith.mulf %82, %84 : vector<10x256xf32>
    %c0_70 = arith.constant 0 : index
    %c0_71 = arith.constant 0 : index
    %86 = vector.load %arg12[%c0_70, %c0_71] : memref<1x256xf32, #tpu.memory_space<vmem>>, vector<1x256xf32>
    %87 = vector.broadcast %86 : vector<1x256xf32> to vector<10x256xf32>
    %88 = arith.addf %85, %87 : vector<10x256xf32>
    %cst_72 = arith.constant 0.000000e+00 : f32
    %89 = vector.broadcast %cst_72 : f32 to vector<10x256xf32>
    %90 = arith.maximumf %88, %89 : vector<10x256xf32>
    %91 = vector.extract_strided_slice %90 {offsets = [0, 0], sizes = [10, 128], strides = [1, 1]} : vector<10x256xf32> to vector<10x128xf32>
    %92 = vector.extract_strided_slice %90 {offsets = [0, 128], sizes = [10, 128], strides = [1, 1]} : vector<10x256xf32> to vector<10x128xf32>
    %93 = arith.maximumf %91, %92 : vector<10x128xf32>
    %c0_73 = arith.constant 0 : index
    %c0_74 = arith.constant 0 : index
    %c0_75 = arith.constant 0 : index
    %94 = vector.load %arg13[%c0_73, %c0_74, %c0_75] : memref<2x4x10xf32, #tpu.memory_space<vmem>>, vector<1x4x10xf32>
    %95 = vector.shape_cast %94 : vector<1x4x10xf32> to vector<4x10xf32>
    %cst_76 = arith.constant dense<0.000000e+00> : vector<4x128xf32>
    %96 = tpu.matmul %95, %93, %cst_76 {dimension_numbers = #tpu.dot_dimension_numbers<[1], [0], [0], [1], [0, 0, 1, 1], [], []>} : vector<4x10xf32>, vector<10x128xf32>, vector<4x128xf32> -> vector<4x128xf32>
    %c1_77 = arith.constant 1 : index
    %c0_78 = arith.constant 0 : index
    %c0_79 = arith.constant 0 : index
    %97 = vector.load %arg13[%c1_77, %c0_78, %c0_79] : memref<2x4x10xf32, #tpu.memory_space<vmem>>, vector<1x4x10xf32>
    %98 = vector.shape_cast %97 : vector<1x4x10xf32> to vector<4x10xf32>
    %cst_80 = arith.constant dense<0.000000e+00> : vector<4x128xf32>
    %99 = tpu.matmul %98, %93, %cst_80 {dimension_numbers = #tpu.dot_dimension_numbers<[1], [0], [0], [1], [0, 0, 1, 1], [], []>} : vector<4x10xf32>, vector<10x128xf32>, vector<4x128xf32> -> vector<4x128xf32>
    %100 = arith.maximumf %96, %99 : vector<4x128xf32>
    %c0_81 = arith.constant 0 : index
    %c0_82 = arith.constant 0 : index
    %101 = vector.load %arg16[%c0_81, %c0_82] : memref<1x10xf32, #tpu.memory_space<vmem>>, vector<1x10xf32>
    %c0_83 = arith.constant 0 : index
    %c0_84 = arith.constant 0 : index
    %c0_85 = arith.constant 0 : index
    %102 = vector.load %arg15[%c0_83, %c0_84, %c0_85] : memref<2x2x4xf32, #tpu.memory_space<vmem>>, vector<1x2x4xf32>
    %103 = vector.shape_cast %102 : vector<1x2x4xf32> to vector<2x4xf32>
    %cst_86 = arith.constant dense<0.000000e+00> : vector<2x128xf32>
    %104 = tpu.matmul %103, %100, %cst_86 {dimension_numbers = #tpu.dot_dimension_numbers<[1], [0], [0], [1], [0, 0, 1, 1], [], []>} : vector<2x4xf32>, vector<4x128xf32>, vector<2x128xf32> -> vector<2x128xf32>
    %c0_87 = arith.constant 0 : index
    %c0_88 = arith.constant 0 : index
    %c0_89 = arith.constant 0 : index
    %105 = vector.load %arg14[%c0_87, %c0_88, %c0_89] : memref<2x128x10xf32, #tpu.memory_space<vmem>>, vector<1x128x10xf32>
    %106 = vector.shape_cast %105 : vector<1x128x10xf32> to vector<128x10xf32>
    %cst_90 = arith.constant dense<0.000000e+00> : vector<2x10xf32>
    %107 = tpu.matmul %104, %106, %cst_90 {dimension_numbers = #tpu.dot_dimension_numbers<[1], [0], [0], [1], [0, 0, 1, 1], [], []>} : vector<2x128xf32>, vector<128x10xf32>, vector<2x10xf32> -> vector<2x10xf32>
    %108 = vector.broadcast %101 : vector<1x10xf32> to vector<2x10xf32>
    %109 = arith.addf %108, %107 : vector<2x10xf32>
    %c1_91 = arith.constant 1 : index
    %c0_92 = arith.constant 0 : index
    %c0_93 = arith.constant 0 : index
    %110 = vector.load %arg15[%c1_91, %c0_92, %c0_93] : memref<2x2x4xf32, #tpu.memory_space<vmem>>, vector<1x2x4xf32>
    %111 = vector.shape_cast %110 : vector<1x2x4xf32> to vector<2x4xf32>
    %cst_94 = arith.constant dense<0.000000e+00> : vector<2x128xf32>
    %112 = tpu.matmul %111, %100, %cst_94 {dimension_numbers = #tpu.dot_dimension_numbers<[1], [0], [0], [1], [0, 0, 1, 1], [], []>} : vector<2x4xf32>, vector<4x128xf32>, vector<2x128xf32> -> vector<2x128xf32>
    %c1_95 = arith.constant 1 : index
    %c0_96 = arith.constant 0 : index
    %c0_97 = arith.constant 0 : index
    %113 = vector.load %arg14[%c1_95, %c0_96, %c0_97] : memref<2x128x10xf32, #tpu.memory_space<vmem>>, vector<1x128x10xf32>
    %114 = vector.shape_cast %113 : vector<1x128x10xf32> to vector<128x10xf32>
    %cst_98 = arith.constant dense<0.000000e+00> : vector<2x10xf32>
    %115 = tpu.matmul %112, %114, %cst_98 {dimension_numbers = #tpu.dot_dimension_numbers<[1], [0], [0], [1], [0, 0, 1, 1], [], []>} : vector<2x128xf32>, vector<128x10xf32>, vector<2x10xf32> -> vector<2x10xf32>
    %116 = arith.addf %109, %115 : vector<2x10xf32>
    %c0_99 = arith.constant 0 : index
    %c0_100 = arith.constant 0 : index
    %117 = vector.load %arg17[%c0_99, %c0_100] : memref<2x10xf32, #tpu.memory_space<vmem>>, vector<2x10xf32>
    tpu.vector_store %arg17[%c0_99, %c0_100], %116 {strides = array<i32>} : memref<2x10xf32, #tpu.memory_space<vmem>>, vector<2x10xf32>,
    return
  }
  func.func @transform_0(%arg0: i32) -> (i32, i32) {
    %c0_i32 = arith.constant 0 : i32
    %c0_i32_0 = arith.constant 0 : i32
    return %arg0, %c0_i32 : i32, i32
  }
  func.func @transform_1(%arg0: i32) -> (i32, i32, i32) {
    %c0_i32 = arith.constant 0 : i32
    %c0_i32_0 = arith.constant 0 : i32
    %c0_i32_1 = arith.constant 0 : i32
    %c0_i32_2 = arith.constant 0 : i32
    return %c0_i32, %c0_i32_0, %c0_i32_1 : i32, i32, i32
  }
  func.func @transform_2(%arg0: i32) -> (i32, i32) {
    %c0_i32 = arith.constant 0 : i32
    %c0_i32_0 = arith.constant 0 : i32
    %c0_i32_1 = arith.constant 0 : i32
    return %c0_i32, %c0_i32_0 : i32, i32
  }
  func.func @transform_3(%arg0: i32) -> (i32, i32) {
    %c0_i32 = arith.constant 0 : i32
    %c0_i32_0 = arith.constant 0 : i32
    %c0_i32_1 = arith.constant 0 : i32
    return %c0_i32, %c0_i32_0 : i32, i32
  }
  func.func @transform_4(%arg0: i32) -> (i32, i32, i32) {
    %c0_i32 = arith.constant 0 : i32
    %c0_i32_0 = arith.constant 0 : i32
    %c0_i32_1 = arith.constant 0 : i32
    %c0_i32_2 = arith.constant 0 : i32
    return %c0_i32, %c0_i32_0, %c0_i32_1 : i32, i32, i32
  }
  func.func @transform_5(%arg0: i32) -> (i32, i32, i32) {
    %c0_i32 = arith.constant 0 : i32
    %c0_i32_0 = arith.constant 0 : i32
    %c0_i32_1 = arith.constant 0 : i32
    %c0_i32_2 = arith.constant 0 : i32
    return %c0_i32, %c0_i32_0, %c0_i32_1 : i32, i32, i32
  }
  func.func @transform_6(%arg0: i32) -> (i32, i32) {
    %c0_i32 = arith.constant 0 : i32
    %c0_i32_0 = arith.constant 0 : i32
    %c0_i32_1 = arith.constant 0 : i32
    return %c0_i32, %c0_i32_0 : i32, i32
  }
  func.func @transform_7(%arg0: i32) -> (i32, i32) {
    %c0_i32 = arith.constant 0 : i32
    %c0_i32_0 = arith.constant 0 : i32
    %c0_i32_1 = arith.constant 0 : i32
    return %c0_i32, %c0_i32_0 : i32, i32
  }
  func.func @transform_8(%arg0: i32) -> (i32, i32, i32) {
    %c0_i32 = arith.constant 0 : i32
    %c0_i32_0 = arith.constant 0 : i32
    %c0_i32_1 = arith.constant 0 : i32
    %c0_i32_2 = arith.constant 0 : i32
    return %c0_i32, %c0_i32_0, %c0_i32_1 : i32, i32, i32
  }
  func.func @transform_9(%arg0: i32) -> (i32, i32, i32) {
    %c0_i32 = arith.constant 0 : i32
    %c0_i32_0 = arith.constant 0 : i32
    %c0_i32_1 = arith.constant 0 : i32
    %c0_i32_2 = arith.constant 0 : i32
    return %c0_i32, %c0_i32_0, %c0_i32_1 : i32, i32, i32
  }
  func.func @transform_10(%arg0: i32) -> (i32, i32) {
    %c0_i32 = arith.constant 0 : i32
    %c0_i32_0 = arith.constant 0 : i32
    %c0_i32_1 = arith.constant 0 : i32
    return %c0_i32, %c0_i32_0 : i32, i32
  }
  func.func @transform_11(%arg0: i32) -> (i32, i32) {
    %c0_i32 = arith.constant 0 : i32
    %c0_i32_0 = arith.constant 0 : i32
    %c0_i32_1 = arith.constant 0 : i32
    return %c0_i32, %c0_i32_0 : i32, i32
  }
  func.func @transform_12(%arg0: i32) -> (i32, i32, i32) {
    %c0_i32 = arith.constant 0 : i32
    %c0_i32_0 = arith.constant 0 : i32
    %c0_i32_1 = arith.constant 0 : i32
    %c0_i32_2 = arith.constant 0 : i32
    return %c0_i32, %c0_i32_0, %c0_i32_1 : i32, i32, i32
  }
  func.func @transform_13(%arg0: i32) -> (i32, i32, i32) {
    %c0_i32 = arith.constant 0 : i32
    %c0_i32_0 = arith.constant 0 : i32
    %c0_i32_1 = arith.constant 0 : i32
    %c0_i32_2 = arith.constant 0 : i32
    return %c0_i32, %c0_i32_0, %c0_i32_1 : i32, i32, i32
  }
  func.func @transform_14(%arg0: i32) -> (i32, i32, i32) {
    %c0_i32 = arith.constant 0 : i32
    %c0_i32_0 = arith.constant 0 : i32
    %c0_i32_1 = arith.constant 0 : i32
    %c0_i32_2 = arith.constant 0 : i32
    return %c0_i32, %c0_i32_0, %c0_i32_1 : i32, i32, i32
  }
  func.func @transform_15(%arg0: i32) -> (i32, i32) {
    %c0_i32 = arith.constant 0 : i32
    %c0_i32_0 = arith.constant 0 : i32
    %c0_i32_1 = arith.constant 0 : i32
    return %c0_i32, %c0_i32_0 : i32, i32
  }
  func.func @transform_16(%arg0: i32) -> (i32, i32) {
    %c0_i32 = arith.constant 0 : i32
    %c0_i32_0 = arith.constant 0 : i32
    return %arg0, %c0_i32 : i32, i32
  }
}

</mosaic_0001>

<llo_original>
// kernel: tile.61
$region0: #{tile.61}
  #allocation0 [shape = 's32[1]{0}', space=sflag, size = 0x4, scoped, tag = 'scoped memory for tile.61']
  %s0 = inlined_call_operand.vmem [shape: f32[16], index: 0, kind: input, shape index: {}]
  %s1 = inlined_call_operand.vmem [shape: f32[8,16], index: 1, kind: output, shape index: {}]
  // Predicated region
  $region2: #{tile.61} parent=0 // pred_check
    _
  $region3: #{tile.61} parent=0 // pred_check_branch
    %3 = sbr.rel (0) target = $region5
  $region4: #{tile.61} parent=0 // pred_region
    _
  $region5: #{tile.61} parent=0 // pred_fallthru
    _
  %v4 = vld [vmem:[%s0] ss:$0 sm:$0xff]
  %5 = vst [vmem:[%s1] sm:$0xff] %v4

// kernel: tile.62
$region0: #{tile.62}
  %s0 = inlined_call_operand.vmem [shape: f32[8,16], index: 0, kind: input, shape index: {}]
  %s1 = inlined_call_operand.vmem [shape: f32[128], index: 1, kind: output, shape index: {}]
  $region1: #{tile.62} parent=0
    #allocation0 [shape = 'u8[4096]{0}', space=vmem, size = 0x1000, scoped, tag = 'scoped mem for output reshape']
    %v2 = vld [vmem:[%s0] sm:$0x1]
    %vm3 = vcmask 130048
    %4 = vst.msk [vmem:[#allocation0] sm:$0x1] %vm3, %v2
    %s5 = scalar_lea.vmem %s0, 7
    %v6 = vld [vmem:[%s5] sm:$0x1]
    %7 = vrot.lane.b32.xlu0 %v6, 112
    %v8 = vpop.permute.xlu0 %7
    %vm9 = vcmask 1048448
    %10 = vst.msk [vmem:[#allocation0] sm:$0x1] %vm9, %v8
    %s11 = scalar_lea.vmem %s0, 6
    %v12 = vld [vmem:[%s11] sm:$0x1]
    %13 = vrot.lane.b32.xlu0 %v12, 96
    %v14 = vpop.permute.xlu0 %13
    %vm15 = vcmask 917248
    %16 = vst.msk [vmem:[#allocation0] sm:$0x1] %vm15, %v14
    %s17 = scalar_lea.vmem %s0, 5
    %v18 = vld [vmem:[%s17] sm:$0x1]
    %19 = vrot.lane.b32.xlu0 %v18, 80
    %v20 = vpop.permute.xlu0 %19
    %vm21 = vcmask 786048
    %22 = vst.msk [vmem:[#allocation0] sm:$0x1] %vm21, %v20
    %s23 = scalar_lea.vmem %s0, 4
    %v24 = vld [vmem:[%s23] sm:$0x1]
    %25 = vrot.lane.b32.xlu0 %v24, 64
    %v26 = vpop.permute.xlu0 %25
    %vm27 = vcmask 654848
    %28 = vst.msk [vmem:[#allocation0] sm:$0x1] %vm27, %v26
    %s29 = scalar_lea.vmem %s0, 3
    %v30 = vld [vmem:[%s29] sm:$0x1]
    %31 = vrot.lane.b32.xlu0 %v30, 48
    %v32 = vpop.permute.xlu0 %31
    %vm33 = vcmask 523648
    %34 = vst.msk [vmem:[#allocation0] sm:$0x1] %vm33, %v32
    %s35 = scalar_lea.vmem %s0, 2
    %v36 = vld [vmem:[%s35] sm:$0x1]
    %37 = vrot.lane.b32.xlu0 %v36, 32
    %v38 = vpop.permute.xlu0 %37
    %vm39 = vcmask 392448
    %40 = vst.msk [vmem:[#allocation0] sm:$0x1] %vm39, %v38
    %s41 = scalar_lea.vmem %s0, 1
    %v42 = vld [vmem:[%s41] sm:$0x1]
    %43 = vrot.lane.b32.xlu0 %v42, 16
    %v44 = vpop.permute.xlu0 %43
    %vm45 = vcmask 261248
    %46 = vst.msk [vmem:[#allocation0] sm:$0x1] %vm45, %v44
    %s48 = ssub.s32 2, 1
    %v49 = vld [vmem:[#allocation0] sm:%s48]
    %s51 = ssub.s32 2, 1
    %52 = vst [vmem:[%s1] sm:%s51] %v49

// kernel: tile.81
$region0: #{tile.81}
  #allocation0 [shape = 's32[1]{0}', space=sflag, size = 0x4, scoped, tag = 'scoped memory for tile.81']
  %s0 = inlined_call_operand.vmem [shape: f32[32], index: 0, kind: input, shape index: {}]
  %s1 = inlined_call_operand.vmem [shape: f32[4,32], index: 1, kind: output, shape index: {}]
  // Predicated region
  $region2: #{tile.81} parent=0 // pred_check
    _
  $region3: #{tile.81} parent=0 // pred_check_branch
    %3 = sbr.rel (0) target = $region5
  $region4: #{tile.81} parent=0 // pred_region
    _
  $region5: #{tile.81} parent=0 // pred_fallthru
    _
  %v4 = vld [vmem:[%s0] ss:$0 sm:$0xff]
  %5 = vst [vmem:[%s1] sm:$0xf] %v4

// kernel: tile.82
$region0: #{tile.82}
  %s0 = inlined_call_operand.vmem [shape: f32[4,32], index: 0, kind: input, shape index: {}]
  %s1 = inlined_call_operand.vmem [shape: f32[128], index: 1, kind: output, shape index: {}]
  $region1: #{tile.82} parent=0
    #allocation0 [shape = 'u8[4096]{0}', space=vmem, size = 0x1000, scoped, tag = 'scoped mem for output reshape']
    #allocation1 [shape = 'u8[4096]{0}', space=vmem, size = 0x1000, scoped, tag = 'scoped mem for input reshape']
    %s3 = ssub.s32 16, 1
    %v4 = vld [vmem:[%s0] sm:%s3]
    %5 = vst [vmem:[#allocation1] sm:%s3] %v4
    %v6 = vld [vmem:[#allocation1] sm:$0x1]
    %vm7 = vcmask 261120
    %8 = vst.msk [vmem:[#allocation0] sm:$0x1] %vm7, %v6
    %s9 = scalar_lea.vmem [#allocation1], 3
    %v10 = vld [vmem:[%s9] sm:$0x1]
    %11 = vrot.lane.b32.xlu0 %v10, 96
    %v12 = vpop.permute.xlu0 %11
    %vm13 = vcmask 1048320
    %14 = vst.msk [vmem:[#allocation0] sm:$0x1] %vm13, %v12
    %s15 = scalar_lea.vmem [#allocation1], 2
    %v16 = vld [vmem:[%s15] sm:$0x1]
    %17 = vrot.lane.b32.xlu0 %v16, 64
    %v18 = vpop.permute.xlu0 %17
    %vm19 = vcmask 785920
    %20 = vst.msk [vmem:[#allocation0] sm:$0x1] %vm19, %v18
    %s21 = scalar_lea.vmem [#allocation1], 1
    %v22 = vld [vmem:[%s21] sm:$0x1]
    %23 = vrot.lane.b32.xlu0 %v22, 32
    %v24 = vpop.permute.xlu0 %23
    %vm25 = vcmask 523520
    %26 = vst.msk [vmem:[#allocation0] sm:$0x1] %vm25, %v24
    %s28 = ssub.s32 2, 1
    %v29 = vld [vmem:[#allocation0] sm:%s28]
    %s31 = ssub.s32 2, 1
    %32 = vst [vmem:[%s1] sm:%s31] %v29

// kernel: tile.101
$region0: #{tile.101}
  #allocation0 [shape = 's32[1]{0}', space=sflag, size = 0x4, scoped, tag = 'scoped memory for tile.101']
  %s0 = inlined_call_operand.vmem [shape: f32[64], index: 0, kind: input, shape index: {}]
  %s1 = inlined_call_operand.vmem [shape: f32[2,64], index: 1, kind: output, shape index: {}]
  // Predicated region
  $region2: #{tile.101} parent=0 // pred_check
    _
  $region3: #{tile.101} parent=0 // pred_check_branch
    %3 = sbr.rel (0) target = $region5
  $region4: #{tile.101} parent=0 // pred_region
    _
  $region5: #{tile.101} parent=0 // pred_fallthru
    _
  %v4 = vld [vmem:[%s0] ss:$0 sm:$0xff]
  %5 = vst [vmem:[%s1] sm:$0x3] %v4

// kernel: tile.104
$region0: #{tile.104}
  %s0 = inlined_call_operand.vmem [shape: f32[2,64], index: 0, kind: input, shape index: {}]
  %s1 = inlined_call_operand.vmem [shape: f32[128], index: 1, kind: output, shape index: {}]
  $region1: #{tile.104} parent=0
    #allocation0 [shape = 'u8[4096]{0}', space=vmem, size = 0x1000, scoped, tag = 'scoped mem for output reshape']
    #allocation1 [shape = 'u8[4096]{0}', space=vmem, size = 0x1000, scoped, tag = 'scoped mem for input reshape']
    %s3 = ssub.s32 4, 1
    %v4 = vld [vmem:[%s0] sm:%s3]
    %5 = vst [vmem:[#allocation1] sm:%s3] %v4
    %v6 = vld [vmem:[#allocation1] sm:$0x1]
    %vm7 = vcmask 523264
    %8 = vst.msk [vmem:[#allocation0] sm:$0x1] %vm7, %v6
    %s9 = scalar_lea.vmem [#allocation1], 1
    %v10 = vld [vmem:[%s9] sm:$0x1]
    %11 = vrot.lane.b32.xlu0 %v10, 64
    %v12 = vpop.permute.xlu0 %11
    %vm13 = vcmask 1048064
    %14 = vst.msk [vmem:[#allocation0] sm:$0x1] %vm13, %v12
    %s16 = ssub.s32 2, 1
    %v17 = vld [vmem:[#allocation0] sm:%s16]
    %s19 = ssub.s32 2, 1
    %20 = vst [vmem:[%s1] sm:%s19] %v17

// kernel: tile.105
$region0: #{tile.105}
  #allocation0 [shape = 's32[1]{0}', space=sflag, size = 0x4, scoped, tag = 'scoped memory for tile.105']
  %s0 = inlined_call_operand.vmem [shape: f32[128], index: 0, kind: input, shape index: {}]
  %s1 = inlined_call_operand.vmem [shape: f32[2,128], index: 1, kind: output, shape index: {}]
  // Predicated region
  $region2: #{tile.105} parent=0 // pred_check
    _
  $region3: #{tile.105} parent=0 // pred_check_branch
    %3 = sbr.rel (0) target = $region5
  $region4: #{tile.105} parent=0 // pred_region
    _
  $region5: #{tile.105} parent=0 // pred_fallthru
    _
  %v4 = vld [vmem:[%s0] ss:$0 sm:$0xff]
  %5 = vst [vmem:[%s1] sm:$0x3] %v4

// kernel: compact_student_net_forward.1
$region0: #{compact_student_net_forward.1}
  #allocation0 [shape = 'u32[]', space=smem, size = 0x4, offset = 0x4, fixed_abs, tag = 'smem constant byte address 0x4 - core index']
  #allocation1 [shape = 'u32[72,128]{1,0:T(1,128)}', space=vmem, size = 0x9000, scoped, tag = 'internal scratch']
  #allocation2 [shape = 'f32[20,256]{1,0:T(8,128)}', space=vmem, size = 0x6000, scoped, tag = 'scratch operand']
  #allocation3 [shape = 'f32[12,256]{1,0:T(8,128)}', space=vmem, size = 0x4000, scoped, tag = 'scratch operand']
  %s0 = inlined_call_operand.vmem [shape: f32[36,18], index: 0, kind: input, shape index: {}]
  %s1 = inlined_call_operand.vmem [shape: f32[3,18,512], index: 1, kind: input, shape index: {}]
  %s2 = inlined_call_operand.vmem [shape: f32[1,512], index: 2, kind: input, shape index: {}]
  %s3 = inlined_call_operand.vmem [shape: f32[1,512], index: 3, kind: input, shape index: {}]
  %s4 = inlined_call_operand.vmem [shape: f32[2,20,34], index: 4, kind: input, shape index: {}]
  %s5 = inlined_call_operand.vmem [shape: f32[3,256,512], index: 5, kind: input, shape index: {}]
  %s6 = inlined_call_operand.vmem [shape: f32[1,512], index: 6, kind: input, shape index: {}]
  %s7 = inlined_call_operand.vmem [shape: f32[1,512], index: 7, kind: input, shape index: {}]
  %s8 = inlined_call_operand.vmem [shape: f32[2,12,18], index: 8, kind: input, shape index: {}]
  %s9 = inlined_call_operand.vmem [shape: f32[3,256,256], index: 9, kind: input, shape index: {}]
  %s10 = inlined_call_operand.vmem [shape: f32[1,256], index: 10, kind: input, shape index: {}]
  %s11 = inlined_call_operand.vmem [shape: f32[1,256], index: 11, kind: input, shape index: {}]
  %s12 = inlined_call_operand.vmem [shape: f32[2,4,10], index: 12, kind: input, shape index: {}]
  %s13 = inlined_call_operand.vmem [shape: f32[2,128,10], index: 13, kind: input, shape index: {}]
  %s14 = inlined_call_operand.vmem [shape: f32[2,2,4], index: 14, kind: input, shape index: {}]
  %s15 = inlined_call_operand.vmem [shape: f32[1,10], index: 15, kind: input, shape index: {}]
  %s16 = inlined_call_operand.hbm [shape: f32[2,10], index: 16, kind: output, shape index: {}]
  %s17 = sld [smem:[#allocation0]]
  $region74: #{compact_student_net_forward.1} parent=0
    _
  %s19 = ssub.s32 1, %s17
  %s20 = scalar_select 0, %s19, %s17
  $region1: #{compact_student_net_forward.1} parent=0
    #allocation4 [shape = 'u8[1024]{0}', space=vmem, size = 0x400, scoped, tag = 'output window, operand 0, single buffered']
    #allocation5 [shape = 's32[1]{0}', space=sflag, size = 0x4, scoped, tag = 'scoped memory for compact_student_net_forward.1']
    %21 = vsyncpa [#allocation5], 0
    // Predicated region
    $region2: #{compact_student_net_forward.1} parent=1 // pred_check
      _
    $region3: #{compact_student_net_forward.1} parent=1 // pred_check_branch
      %23 = sbr.rel (0) target = $region5
    $region4: #{compact_student_net_forward.1} parent=1 // pred_region
      _
    $region5: #{compact_student_net_forward.1} parent=1 // pred_fallthru
      _
    // Predicated region
    $region6: #{compact_student_net_forward.1} parent=1 // pred_check
      _
    $region7: #{compact_student_net_forward.1} parent=1 // pred_check_branch
      %25 = sbr.rel (0) target = $region9
    $region8: #{compact_student_net_forward.1} parent=1 // pred_region
      _
    $region9: #{compact_student_net_forward.1} parent=1 // pred_fallthru
      _
    // Predicated region
    $region10: #{compact_student_net_forward.1} parent=1 // pred_check
      _
    $region11: #{compact_student_net_forward.1} parent=1 // pred_check_branch
      %27 = sbr.rel (0) target = $region13
    $region12: #{compact_student_net_forward.1} parent=1 // pred_region
      _
    $region13: #{compact_student_net_forward.1} parent=1 // pred_fallthru
      _
    // Predicated region
    $region14: #{compact_student_net_forward.1} parent=1 // pred_check
      _
    $region15: #{compact_student_net_forward.1} parent=1 // pred_check_branch
      %29 = sbr.rel (0) target = $region17
    $region16: #{compact_student_net_forward.1} parent=1 // pred_region
      _
    $region17: #{compact_student_net_forward.1} parent=1 // pred_fallthru
      _
    // Predicated region
    $region18: #{compact_student_net_forward.1} parent=1 // pred_check
      _
    $region19: #{compact_student_net_forward.1} parent=1 // pred_check_branch
      %31 = sbr.rel (0) target = $region21
    $region20: #{compact_student_net_forward.1} parent=1 // pred_region
      _
    $region21: #{compact_student_net_forward.1} parent=1 // pred_fallthru
      _
    // Predicated region
    $region22: #{compact_student_net_forward.1} parent=1 // pred_check
      _
    $region23: #{compact_student_net_forward.1} parent=1 // pred_check_branch
      %33 = sbr.rel (0) target = $region25
    $region24: #{compact_student_net_forward.1} parent=1 // pred_region
      _
    $region25: #{compact_student_net_forward.1} parent=1 // pred_fallthru
      _
    // Predicated region
    $region26: #{compact_student_net_forward.1} parent=1 // pred_check
      _
    $region27: #{compact_student_net_forward.1} parent=1 // pred_check_branch
      %35 = sbr.rel (0) target = $region29
    $region28: #{compact_student_net_forward.1} parent=1 // pred_region
      _
    $region29: #{compact_student_net_forward.1} parent=1 // pred_fallthru
      _
    // Predicated region
    $region30: #{compact_student_net_forward.1} parent=1 // pred_check
      _
    $region31: #{compact_student_net_forward.1} parent=1 // pred_check_branch
      %37 = sbr.rel (0) target = $region33
    $region32: #{compact_student_net_forward.1} parent=1 // pred_region
      _
    $region33: #{compact_student_net_forward.1} parent=1 // pred_fallthru
      _
    // Predicated region
    $region34: #{compact_student_net_forward.1} parent=1 // pred_check
      _
    $region35: #{compact_student_net_forward.1} parent=1 // pred_check_branch
      %39 = sbr.rel (0) target = $region37
    $region36: #{compact_student_net_forward.1} parent=1 // pred_region
      _
    $region37: #{compact_student_net_forward.1} parent=1 // pred_fallthru
      _
    // Predicated region
    $region38: #{compact_student_net_forward.1} parent=1 // pred_check
      _
    $region39: #{compact_student_net_forward.1} parent=1 // pred_check_branch
      %41 = sbr.rel (0) target = $region41
    $region40: #{compact_student_net_forward.1} parent=1 // pred_region
      _
    $region41: #{compact_student_net_forward.1} parent=1 // pred_fallthru
      _
    // Predicated region
    $region42: #{compact_student_net_forward.1} parent=1 // pred_check
      _
    $region43: #{compact_student_net_forward.1} parent=1 // pred_check_branch
      %43 = sbr.rel (0) target = $region45
    $region44: #{compact_student_net_forward.1} parent=1 // pred_region
      _
    $region45: #{compact_student_net_forward.1} parent=1 // pred_fallthru
      _
    // Predicated region
    $region46: #{compact_student_net_forward.1} parent=1 // pred_check
      _
    $region47: #{compact_student_net_forward.1} parent=1 // pred_check_branch
      %45 = sbr.rel (0) target = $region49
    $region48: #{compact_student_net_forward.1} parent=1 // pred_region
      _
    $region49: #{compact_student_net_forward.1} parent=1 // pred_fallthru
      _
    // Predicated region
    $region50: #{compact_student_net_forward.1} parent=1 // pred_check
      _
    $region51: #{compact_student_net_forward.1} parent=1 // pred_check_branch
      %47 = sbr.rel (0) target = $region53
    $region52: #{compact_student_net_forward.1} parent=1 // pred_region
      _
    $region53: #{compact_student_net_forward.1} parent=1 // pred_fallthru
      _
    // Predicated region
    $region54: #{compact_student_net_forward.1} parent=1 // pred_check
      _
    $region55: #{compact_student_net_forward.1} parent=1 // pred_check_branch
      %49 = sbr.rel (0) target = $region57
    $region56: #{compact_student_net_forward.1} parent=1 // pred_region
      _
    $region57: #{compact_student_net_forward.1} parent=1 // pred_fallthru
      _
    // Predicated region
    $region58: #{compact_student_net_forward.1} parent=1 // pred_check
      _
    $region59: #{compact_student_net_forward.1} parent=1 // pred_check_branch
      %51 = sbr.rel (0) target = $region61
    $region60: #{compact_student_net_forward.1} parent=1 // pred_region
      _
    $region61: #{compact_student_net_forward.1} parent=1 // pred_fallthru
      _
    // Predicated region
    $region62: #{compact_student_net_forward.1} parent=1 // pred_check
      _
    $region63: #{compact_student_net_forward.1} parent=1 // pred_check_branch
      %53 = sbr.rel (0) target = $region65
    $region64: #{compact_student_net_forward.1} parent=1 // pred_region
      _
    $region65: #{compact_student_net_forward.1} parent=1 // pred_fallthru
      _
    %v54 = vld [vmem:[%s0] sm:$0xff]
    %v55 = vld [vmem:[%s0 + $0x8] sm:$0xff]
    %v56 = vld [vmem:[%s0 + $0x10] sm:$0xff]
    %v57 = vld [vmem:[%s0 + $0x18] sm:$0xff]
    %v58 = vld [vmem:[%s0 + $0x20] sm:$0xf]
    %v59 = vld [vmem:[%s1] sm:$0xff]
    %v60 = vld [vmem:[%s1 + $0x8] sm:$0xff]
    %v61 = vld [vmem:[%s1 + $0x10] sm:$0xff]
    %v62 = vld [vmem:[%s1 + $0x18] sm:$0xff]
    %v63 = vld [vmem:[%s1 + $0x20] sm:$0xff]
    %v64 = vld [vmem:[%s1 + $0x28] sm:$0xff]
    %v65 = vld [vmem:[%s1 + $0x30] sm:$0xff]
    %v66 = vld [vmem:[%s1 + $0x38] sm:$0xff]
    %v67 = vld [vmem:[%s1 + $0x40] sm:$0x3]
    %v68 = vld [vmem:[%s1 + $0x48] sm:$0x3]
    %v69 = vld [vmem:[%s1 + $0x50] sm:$0x3]
    %v70 = vld [vmem:[%s1 + $0x58] sm:$0x3]
    %s71 = scalar_lea.vmem %s1, 96
    %v72 = vld [vmem:[%s71] sm:$0xff]
    %v73 = vld [vmem:[%s71 + $0x8] sm:$0xff]
    %v74 = vld [vmem:[%s71 + $0x10] sm:$0xff]
    %v75 = vld [vmem:[%s71 + $0x18] sm:$0xff]
    %v76 = vld [vmem:[%s71 + $0x20] sm:$0xff]
    %v77 = vld [vmem:[%s71 + $0x28] sm:$0xff]
    %v78 = vld [vmem:[%s71 + $0x30] sm:$0xff]
    %v79 = vld [vmem:[%s71 + $0x38] sm:$0xff]
    %v80 = vld [vmem:[%s71 + $0x40] sm:$0x3]
    %v81 = vld [vmem:[%s71 + $0x48] sm:$0x3]
    %v82 = vld [vmem:[%s71 + $0x50] sm:$0x3]
    %v83 = vld [vmem:[%s71 + $0x58] sm:$0x3]
    %vm89 = vcmask 1046528
    %v90 = vrot.slane %v54, 1
    %v91 = vrot.slane %v55, 1
    %v92 = vsel %vm89, %v90, %v91
    %v93 = vrot.slane %v56, 1
    %v94 = vsel %vm89, %v91, %v93
    %v95 = vrot.slane %v57, 1
    %v96 = vsel %vm89, %v93, %v95
    %v97 = vrot.slane %v58, 1
    %v98 = vsel %vm89, %v95, %v97
    %vm99 = vcmask 146432
    %v100 = vsel %vm99, %v92, 0
    %v102 = vsel %vm99, %v94, 0
    %v104 = vsel %vm99, %v96, 0
    %v106 = vsel %vm99, %v98, 0
    %v108 = vsel %vm99, %v97, 0
    %vm110 = vcmask 1041408
    %v112 = vsel %vm110, %v80, 0
    %v115 = vsel %vm110, %v81, 0
    %v118 = vsel %vm110, %v82, 0
    %v121 = vsel %vm110, %v83, 0
    %123 = vmatpush.msra.mxu0 0.0
    %124 = vmatpush.msra.mxu0 0.0
    %125 = vmatpush.msra.mxu0 0.0
    %126 = vmatpush.msra.mxu0 0.0
    %127 = vmatpush.msra.mxu0 0.0
    %128 = vmatpush.msra.mxu0 0.0
    %129 = vmatpush.msra.mxu0 0.0
    %130 = vmatpush.msra.mxu0 0.0
    %131 = vmatpush.msra.mxu0 0.0
    %132 = vmatpush.msra.mxu0 0.0
    %133 = vmatpush.msra.mxu0 0.0
    %134 = vmatpush.msra.mxu0 0.0
    %135 = vmatpush.msra.mxu0 0.0
    %136 = vmatpush.msra.mxu0 %v112
    %137 = vmatpush.msra.mxu0 %v76
    %138 = vmatpush.msra.mxu0 %v72
    %139 = vmatmul.f32.gmra.mxu0 %v100
    %v140 = vpop.f32.mrf.mxu0
    %v141 = vadd.f32 0.0, %v140
    %142 = vmatmul.f32.gmra.mxu0 %v102
    %v143 = vpop.f32.mrf.mxu0
    %v144 = vadd.f32 0.0, %v143
    %145 = vmatmul.f32.gmra.mxu0 %v104
    %v146 = vpop.f32.mrf.mxu0
    %v147 = vadd.f32 0.0, %v146
    %148 = vmatmul.f32.gmra.mxu0 %v106
    %v149 = vpop.f32.mrf.mxu0
    %v150 = vadd.f32 0.0, %v149
    %151 = vmatmul.f32.gmra.mxu0 %v108
    %v152 = vpop.f32.mrf.mxu0
    %v153 = vadd.f32 0.0, %v152
    %154 = vdwg.mxu0
    %155 = vmatpush.msra.mxu0 0.0
    %156 = vmatpush.msra.mxu0 0.0
    %157 = vmatpush.msra.mxu0 0.0
    %158 = vmatpush.msra.mxu0 0.0
    %159 = vmatpush.msra.mxu0 0.0
    %160 = vmatpush.msra.mxu0 0.0
    %161 = vmatpush.msra.mxu0 0.0
    %162 = vmatpush.msra.mxu0 0.0
    %163 = vmatpush.msra.mxu0 0.0
    %164 = vmatpush.msra.mxu0 0.0
    %165 = vmatpush.msra.mxu0 0.0
    %166 = vmatpush.msra.mxu0 0.0
    %167 = vmatpush.msra.mxu0 0.0
    %168 = vmatpush.msra.mxu0 %v115
    %169 = vmatpush.msra.mxu0 %v77
    %170 = vmatpush.msra.mxu0 %v73
    %171 = vmatmul.f32.gmra.mxu0 %v100
    %v172 = vpop.f32.mrf.mxu0
    %v173 = vadd.f32 0.0, %v172
    %174 = vmatmul.f32.gmra.mxu0 %v102
    %v175 = vpop.f32.mrf.mxu0
    %v176 = vadd.f32 0.0, %v175
    %177 = vmatmul.f32.gmra.mxu0 %v104
    %v178 = vpop.f32.mrf.mxu0
    %v179 = vadd.f32 0.0, %v178
    %180 = vmatmul.f32.gmra.mxu0 %v106
    %v181 = vpop.f32.mrf.mxu0
    %v182 = vadd.f32 0.0, %v181
    %183 = vmatmul.f32.gmra.mxu0 %v108
    %v184 = vpop.f32.mrf.mxu0
    %v185 = vadd.f32 0.0, %v184
    %186 = vdwg.mxu0
    %187 = vmatpush.msra.mxu0 0.0
    %188 = vmatpush.msra.mxu0 0.0
    %189 = vmatpush.msra.mxu0 0.0
    %190 = vmatpush.msra.mxu0 0.0
    %191 = vmatpush.msra.mxu0 0.0
    %192 = vmatpush.msra.mxu0 0.0
    %193 = vmatpush.msra.mxu0 0.0
    %194 = vmatpush.msra.mxu0 0.0
    %195 = vmatpush.msra.mxu0 0.0
    %196 = vmatpush.msra.mxu0 0.0
    %197 = vmatpush.msra.mxu0 0.0
    %198 = vmatpush.msra.mxu0 0.0
    %199 = vmatpush.msra.mxu0 0.0
    %200 = vmatpush.msra.mxu0 %v118
    %201 = vmatpush.msra.mxu0 %v78
    %202 = vmatpush.msra.mxu0 %v74
    %203 = vmatmul.f32.gmra.mxu0 %v100
    %v204 = vpop.f32.mrf.mxu0
    %v205 = vadd.f32 0.0, %v204
    %206 = vmatmul.f32.gmra.mxu0 %v102
    %v207 = vpop.f32.mrf.mxu0
    %v208 = vadd.f32 0.0, %v207
    %209 = vmatmul.f32.gmra.mxu0 %v104
    %v210 = vpop.f32.mrf.mxu0
    %v211 = vadd.f32 0.0, %v210
    %212 = vmatmul.f32.gmra.mxu0 %v106
    %v213 = vpop.f32.mrf.mxu0
    %v214 = vadd.f32 0.0, %v213
    %215 = vmatmul.f32.gmra.mxu0 %v108
    %v216 = vpop.f32.mrf.mxu0
    %v217 = vadd.f32 0.0, %v216
    %218 = vdwg.mxu0
    %219 = vmatpush.msra.mxu0 0.0
    %220 = vmatpush.msra.mxu0 0.0
    %221 = vmatpush.msra.mxu0 0.0
    %222 = vmatpush.msra.mxu0 0.0
    %223 = vmatpush.msra.mxu0 0.0
    %224 = vmatpush.msra.mxu0 0.0
    %225 = vmatpush.msra.mxu0 0.0
    %226 = vmatpush.msra.mxu0 0.0
    %227 = vmatpush.msra.mxu0 0.0
    %228 = vmatpush.msra.mxu0 0.0
    %229 = vmatpush.msra.mxu0 0.0
    %230 = vmatpush.msra.mxu0 0.0
    %231 = vmatpush.msra.mxu0 0.0
    %232 = vmatpush.msra.mxu0 %v121
    %233 = vmatpush.msra.mxu0 %v79
    %234 = vmatpush.msra.mxu0 %v75
    %235 = vmatmul.f32.gmra.mxu0 %v100
    %v236 = vpop.f32.mrf.mxu0
    %v237 = vadd.f32 0.0, %v236
    %238 = vmatmul.f32.gmra.mxu0 %v102
    %v239 = vpop.f32.mrf.mxu0
    %v240 = vadd.f32 0.0, %v239
    %241 = vmatmul.f32.gmra.mxu0 %v104
    %v242 = vpop.f32.mrf.mxu0
    %v243 = vadd.f32 0.0, %v242
    %244 = vmatmul.f32.gmra.mxu0 %v106
    %v245 = vpop.f32.mrf.mxu0
    %v246 = vadd.f32 0.0, %v245
    %247 = vmatmul.f32.gmra.mxu0 %v108
    %v248 = vpop.f32.mrf.mxu0
    %v249 = vadd.f32 0.0, %v248
    %250 = vdwg.mxu0
    %v251 = vsel %vm99, %v54, 0
    %v253 = vsel %vm99, %v55, 0
    %v255 = vsel %vm99, %v56, 0
    %v257 = vsel %vm99, %v57, 0
    %v259 = vsel %vm99, %v58, 0
    %v262 = vsel %vm110, %v67, 0
    %v265 = vsel %vm110, %v68, 0
    %v268 = vsel %vm110, %v69, 0
    %v271 = vsel %vm110, %v70, 0
    %273 = vmatpush.msra.mxu0 0.0
    %274 = vmatpush.msra.mxu0 0.0
    %275 = vmatpush.msra.mxu0 0.0
    %276 = vmatpush.msra.mxu0 0.0
    %277 = vmatpush.msra.mxu0 0.0
    %278 = vmatpush.msra.mxu0 0.0
    %279 = vmatpush.msra.mxu0 0.0
    %280 = vmatpush.msra.mxu0 0.0
    %281 = vmatpush.msra.mxu0 0.0
    %282 = vmatpush.msra.mxu0 0.0
    %283 = vmatpush.msra.mxu0 0.0
    %284 = vmatpush.msra.mxu0 0.0
    %285 = vmatpush.msra.mxu0 0.0
    %286 = vmatpush.msra.mxu0 %v262
    %287 = vmatpush.msra.mxu0 %v63
    %288 = vmatpush.msra.mxu0 %v59
    %289 = vmatmul.f32.gmra.mxu0 %v251
    %v290 = vpop.f32.mrf.mxu0
    %v291 = vadd.f32 %v141, %v290
    %292 = vmatmul.f32.gmra.mxu0 %v253
    %v293 = vpop.f32.mrf.mxu0
    %v294 = vadd.f32 %v144, %v293
    %295 = vmatmul.f32.gmra.mxu0 %v255
    %v296 = vpop.f32.mrf.mxu0
    %v297 = vadd.f32 %v147, %v296
    %298 = vmatmul.f32.gmra.mxu0 %v257
    %v299 = vpop.f32.mrf.mxu0
    %v300 = vadd.f32 %v150, %v299
    %301 = vmatmul.f32.gmra.mxu0 %v259
    %v302 = vpop.f32.mrf.mxu0
    %v303 = vadd.f32 %v153, %v302
    %304 = vdwg.mxu0
    %305 = vmatpush.msra.mxu0 0.0
    %306 = vmatpush.msra.mxu0 0.0
    %307 = vmatpush.msra.mxu0 0.0
    %308 = vmatpush.msra.mxu0 0.0
    %309 = vmatpush.msra.mxu0 0.0
    %310 = vmatpush.msra.mxu0 0.0
    %311 = vmatpush.msra.mxu0 0.0
    %312 = vmatpush.msra.mxu0 0.0
    %313 = vmatpush.msra.mxu0 0.0
    %314 = vmatpush.msra.mxu0 0.0
    %315 = vmatpush.msra.mxu0 0.0
    %316 = vmatpush.msra.mxu0 0.0
    %317 = vmatpush.msra.mxu0 0.0
    %318 = vmatpush.msra.mxu0 %v265
    %319 = vmatpush.msra.mxu0 %v64
    %320 = vmatpush.msra.mxu0 %v60
    %321 = vmatmul.f32.gmra.mxu0 %v251
    %v322 = vpop.f32.mrf.mxu0
    %v323 = vadd.f32 %v173, %v322
    %324 = vmatmul.f32.gmra.mxu0 %v253
    %v325 = vpop.f32.mrf.mxu0
    %v326 = vadd.f32 %v176, %v325
    %327 = vmatmul.f32.gmra.mxu0 %v255
    %v328 = vpop.f32.mrf.mxu0
    %v329 = vadd.f32 %v179, %v328
    %330 = vmatmul.f32.gmra.mxu0 %v257
    %v331 = vpop.f32.mrf.mxu0
    %v332 = vadd.f32 %v182, %v331
    %333 = vmatmul.f32.gmra.mxu0 %v259
    %v334 = vpop.f32.mrf.mxu0
    %v335 = vadd.f32 %v185, %v334
    %336 = vdwg.mxu0
    %337 = vmatpush.msra.mxu0 0.0
    %338 = vmatpush.msra.mxu0 0.0
    %339 = vmatpush.msra.mxu0 0.0
    %340 = vmatpush.msra.mxu0 0.0
    %341 = vmatpush.msra.mxu0 0.0
    %342 = vmatpush.msra.mxu0 0.0
    %343 = vmatpush.msra.mxu0 0.0
    %344 = vmatpush.msra.mxu0 0.0
    %345 = vmatpush.msra.mxu0 0.0
    %346 = vmatpush.msra.mxu0 0.0
    %347 = vmatpush.msra.mxu0 0.0
    %348 = vmatpush.msra.mxu0 0.0
    %349 = vmatpush.msra.mxu0 0.0
    %350 = vmatpush.msra.mxu0 %v268
    %351 = vmatpush.msra.mxu0 %v65
    %352 = vmatpush.msra.mxu0 %v61
    %353 = vmatmul.f32.gmra.mxu0 %v251
    %v354 = vpop.f32.mrf.mxu0
    %v355 = vadd.f32 %v205, %v354
    %356 = vmatmul.f32.gmra.mxu0 %v253
    %v357 = vpop.f32.mrf.mxu0
    %v358 = vadd.f32 %v208, %v357
    %359 = vmatmul.f32.gmra.mxu0 %v255
    %v360 = vpop.f32.mrf.mxu0
    %v361 = vadd.f32 %v211, %v360
    %362 = vmatmul.f32.gmra.mxu0 %v257
    %v363 = vpop.f32.mrf.mxu0
    %v364 = vadd.f32 %v214, %v363
    %365 = vmatmul.f32.gmra.mxu0 %v259
    %v366 = vpop.f32.mrf.mxu0
    %v367 = vadd.f32 %v217, %v366
    %368 = vdwg.mxu0
    %369 = vmatpush.msra.mxu0 0.0
    %370 = vmatpush.msra.mxu0 0.0
    %371 = vmatpush.msra.mxu0 0.0
    %372 = vmatpush.msra.mxu0 0.0
    %373 = vmatpush.msra.mxu0 0.0
    %374 = vmatpush.msra.mxu0 0.0
    %375 = vmatpush.msra.mxu0 0.0
    %376 = vmatpush.msra.mxu0 0.0
    %377 = vmatpush.msra.mxu0 0.0
    %378 = vmatpush.msra.mxu0 0.0
    %379 = vmatpush.msra.mxu0 0.0
    %380 = vmatpush.msra.mxu0 0.0
    %381 = vmatpush.msra.mxu0 0.0
    %382 = vmatpush.msra.mxu0 %v271
    %383 = vmatpush.msra.mxu0 %v66
    %384 = vmatpush.msra.mxu0 %v62
    %385 = vmatmul.f32.gmra.mxu0 %v251
    %v386 = vpop.f32.mrf.mxu0
    %v387 = vadd.f32 %v237, %v386
    %388 = vmatmul.f32.gmra.mxu0 %v253
    %v389 = vpop.f32.mrf.mxu0
    %v390 = vadd.f32 %v240, %v389
    %391 = vmatmul.f32.gmra.mxu0 %v255
    %v392 = vpop.f32.mrf.mxu0
    %v393 = vadd.f32 %v243, %v392
    %394 = vmatmul.f32.gmra.mxu0 %v257
    %v395 = vpop.f32.mrf.mxu0
    %v396 = vadd.f32 %v246, %v395
    %397 = vmatmul.f32.gmra.mxu0 %v259
    %v398 = vpop.f32.mrf.mxu0
    %v399 = vadd.f32 %v249, %v398
    %400 = vdwg.mxu0
    %s401 = scalar_lea.vmem %s1, 192
    %v402 = vld [vmem:[%s401] sm:$0xff]
    %v403 = vld [vmem:[%s401 + $0x8] sm:$0xff]
    %v404 = vld [vmem:[%s401 + $0x10] sm:$0xff]
    %v405 = vld [vmem:[%s401 + $0x18] sm:$0xff]
    %v406 = vld [vmem:[%s401 + $0x20] sm:$0xff]
    %v407 = vld [vmem:[%s401 + $0x28] sm:$0xff]
    %v408 = vld [vmem:[%s401 + $0x30] sm:$0xff]
    %v409 = vld [vmem:[%s401 + $0x38] sm:$0xff]
    %v410 = vld [vmem:[%s401 + $0x40] sm:$0x3]
    %v411 = vld [vmem:[%s401 + $0x48] sm:$0x3]
    %v412 = vld [vmem:[%s401 + $0x50] sm:$0x3]
    %v413 = vld [vmem:[%s401 + $0x58] sm:$0x3]
    %vm414 = vcmask 1045504
    %v415 = vrot.slane %v54, 2
    %v416 = vrot.slane %v55, 2
    %v417 = vsel %vm414, %v415, %v416
    %v418 = vrot.slane %v56, 2
    %v419 = vsel %vm414, %v416, %v418
    %v420 = vrot.slane %v57, 2
    %v421 = vsel %vm414, %v418, %v420
    %v422 = vrot.slane %v58, 2
    %v423 = vsel %vm414, %v420, %v422
    %v424 = vsel %vm99, %v417, 0
    %v426 = vsel %vm99, %v419, 0
    %v428 = vsel %vm99, %v421, 0
    %v430 = vsel %vm99, %v423, 0
    %v432 = vsel %vm99, %v422, 0
    %v435 = vsel %vm110, %v410, 0
    %v438 = vsel %vm110, %v411, 0
    %v441 = vsel %vm110, %v412, 0
    %v444 = vsel %vm110, %v413, 0
    %446 = vmatpush.msra.mxu0 0.0
    %447 = vmatpush.msra.mxu0 0.0
    %448 = vmatpush.msra.mxu0 0.0
    %449 = vmatpush.msra.mxu0 0.0
    %450 = vmatpush.msra.mxu0 0.0
    %451 = vmatpush.msra.mxu0 0.0
    %452 = vmatpush.msra.mxu0 0.0
    %453 = vmatpush.msra.mxu0 0.0
    %454 = vmatpush.msra.mxu0 0.0
    %455 = vmatpush.msra.mxu0 0.0
    %456 = vmatpush.msra.mxu0 0.0
    %457 = vmatpush.msra.mxu0 0.0
    %458 = vmatpush.msra.mxu0 0.0
    %459 = vmatpush.msra.mxu0 %v435
    %460 = vmatpush.msra.mxu0 %v406
    %461 = vmatpush.msra.mxu0 %v402
    %462 = vmatmul.f32.gmra.mxu0 %v424
    %v463 = vpop.f32.mrf.mxu0
    %v464 = vadd.f32 0.0, %v463
    %465 = vmatmul.f32.gmra.mxu0 %v426
    %v466 = vpop.f32.mrf.mxu0
    %v467 = vadd.f32 0.0, %v466
    %468 = vmatmul.f32.gmra.mxu0 %v428
    %v469 = vpop.f32.mrf.mxu0
    %v470 = vadd.f32 0.0, %v469
    %471 = vmatmul.f32.gmra.mxu0 %v430
    %v472 = vpop.f32.mrf.mxu0
    %v473 = vadd.f32 0.0, %v472
    %474 = vmatmul.f32.gmra.mxu0 %v432
    %v475 = vpop.f32.mrf.mxu0
    %v476 = vadd.f32 0.0, %v475
    %477 = vdwg.mxu0
    %478 = vmatpush.msra.mxu0 0.0
    %479 = vmatpush.msra.mxu0 0.0
    %480 = vmatpush.msra.mxu0 0.0
    %481 = vmatpush.msra.mxu0 0.0
    %482 = vmatpush.msra.mxu0 0.0
    %483 = vmatpush.msra.mxu0 0.0
    %484 = vmatpush.msra.mxu0 0.0
    %485 = vmatpush.msra.mxu0 0.0
    %486 = vmatpush.msra.mxu0 0.0
    %487 = vmatpush.msra.mxu0 0.0
    %488 = vmatpush.msra.mxu0 0.0
    %489 = vmatpush.msra.mxu0 0.0
    %490 = vmatpush.msra.mxu0 0.0
    %491 = vmatpush.msra.mxu0 %v438
    %492 = vmatpush.msra.mxu0 %v407
    %493 = vmatpush.msra.mxu0 %v403
    %494 = vmatmul.f32.gmra.mxu0 %v424
    %v495 = vpop.f32.mrf.mxu0
    %v496 = vadd.f32 0.0, %v495
    %497 = vmatmul.f32.gmra.mxu0 %v426
    %v498 = vpop.f32.mrf.mxu0
    %v499 = vadd.f32 0.0, %v498
    %500 = vmatmul.f32.gmra.mxu0 %v428
    %v501 = vpop.f32.mrf.mxu0
    %v502 = vadd.f32 0.0, %v501
    %503 = vmatmul.f32.gmra.mxu0 %v430
    %v504 = vpop.f32.mrf.mxu0
    %v505 = vadd.f32 0.0, %v504
    %506 = vmatmul.f32.gmra.mxu0 %v432
    %v507 = vpop.f32.mrf.mxu0
    %v508 = vadd.f32 0.0, %v507
    %509 = vdwg.mxu0
    %510 = vmatpush.msra.mxu0 0.0
    %511 = vmatpush.msra.mxu0 0.0
    %512 = vmatpush.msra.mxu0 0.0
    %513 = vmatpush.msra.mxu0 0.0
    %514 = vmatpush.msra.mxu0 0.0
    %515 = vmatpush.msra.mxu0 0.0
    %516 = vmatpush.msra.mxu0 0.0
    %517 = vmatpush.msra.mxu0 0.0
    %518 = vmatpush.msra.mxu0 0.0
    %519 = vmatpush.msra.mxu0 0.0
    %520 = vmatpush.msra.mxu0 0.0
    %521 = vmatpush.msra.mxu0 0.0
    %522 = vmatpush.msra.mxu0 0.0
    %523 = vmatpush.msra.mxu0 %v441
    %524 = vmatpush.msra.mxu0 %v408
    %525 = vmatpush.msra.mxu0 %v404
    %526 = vmatmul.f32.gmra.mxu0 %v424
    %v527 = vpop.f32.mrf.mxu0
    %v528 = vadd.f32 0.0, %v527
    %529 = vmatmul.f32.gmra.mxu0 %v426
    %v530 = vpop.f32.mrf.mxu0
    %v531 = vadd.f32 0.0, %v530
    %532 = vmatmul.f32.gmra.mxu0 %v428
    %v533 = vpop.f32.mrf.mxu0
    %v534 = vadd.f32 0.0, %v533
    %535 = vmatmul.f32.gmra.mxu0 %v430
    %v536 = vpop.f32.mrf.mxu0
    %v537 = vadd.f32 0.0, %v536
    %538 = vmatmul.f32.gmra.mxu0 %v432
    %v539 = vpop.f32.mrf.mxu0
    %v540 = vadd.f32 0.0, %v539
    %541 = vdwg.mxu0
    %542 = vmatpush.msra.mxu0 0.0
    %543 = vmatpush.msra.mxu0 0.0
    %544 = vmatpush.msra.mxu0 0.0
    %545 = vmatpush.msra.mxu0 0.0
    %546 = vmatpush.msra.mxu0 0.0
    %547 = vmatpush.msra.mxu0 0.0
    %548 = vmatpush.msra.mxu0 0.0
    %549 = vmatpush.msra.mxu0 0.0
    %550 = vmatpush.msra.mxu0 0.0
    %551 = vmatpush.msra.mxu0 0.0
    %552 = vmatpush.msra.mxu0 0.0
    %553 = vmatpush.msra.mxu0 0.0
    %554 = vmatpush.msra.mxu0 0.0
    %555 = vmatpush.msra.mxu0 %v444
    %556 = vmatpush.msra.mxu0 %v409
    %557 = vmatpush.msra.mxu0 %v405
    %558 = vmatmul.f32.gmra.mxu0 %v424
    %v559 = vpop.f32.mrf.mxu0
    %v560 = vadd.f32 0.0, %v559
    %561 = vmatmul.f32.gmra.mxu0 %v426
    %v562 = vpop.f32.mrf.mxu0
    %v563 = vadd.f32 0.0, %v562
    %564 = vmatmul.f32.gmra.mxu0 %v428
    %v565 = vpop.f32.mrf.mxu0
    %v566 = vadd.f32 0.0, %v565
    %567 = vmatmul.f32.gmra.mxu0 %v430
    %v568 = vpop.f32.mrf.mxu0
    %v569 = vadd.f32 0.0, %v568
    %570 = vmatmul.f32.gmra.mxu0 %v432
    %v571 = vpop.f32.mrf.mxu0
    %v572 = vadd.f32 0.0, %v571
    %573 = vdwg.mxu0
    %v574 = vadd.f32 %v291, %v464
    %v575 = vadd.f32 %v323, %v496
    %v576 = vadd.f32 %v355, %v528
    %v577 = vadd.f32 %v387, %v560
    %v578 = vadd.f32 %v294, %v467
    %v579 = vadd.f32 %v326, %v499
    %v580 = vadd.f32 %v358, %v531
    %v581 = vadd.f32 %v390, %v563
    %v582 = vadd.f32 %v297, %v470
    %v583 = vadd.f32 %v329, %v502
    %v584 = vadd.f32 %v361, %v534
    %v585 = vadd.f32 %v393, %v566
    %v586 = vadd.f32 %v300, %v473
    %v587 = vadd.f32 %v332, %v505
    %v588 = vadd.f32 %v364, %v537
    %v589 = vadd.f32 %v396, %v569
    %v590 = vadd.f32 %v303, %v476
    %v591 = vadd.f32 %v335, %v508
    %v592 = vadd.f32 %v367, %v540
    %v593 = vadd.f32 %v399, %v572
    %v594 = vld [vmem:[%s2] sm:$0xf]
    %v596 = vperm.slane %v594, 0
    %v597 = vperm.slane %v594, 1
    %v598 = vperm.slane %v594, 2
    %v599 = vperm.slane %v594, 3
    %v604 = vmul.f32 %v574, %v596
    %v605 = vmul.f32 %v575, %v597
    %v606 = vmul.f32 %v576, %v598
    %v607 = vmul.f32 %v577, %v599
    %v608 = vmul.f32 %v578, %v596
    %v609 = vmul.f32 %v579, %v597
    %v610 = vmul.f32 %v580, %v598
    %v611 = vmul.f32 %v581, %v599
    %v612 = vmul.f32 %v582, %v596
    %v613 = vmul.f32 %v583, %v597
    %v614 = vmul.f32 %v584, %v598
    %v615 = vmul.f32 %v585, %v599
    %v616 = vmul.f32 %v586, %v596
    %v617 = vmul.f32 %v587, %v597
    %v618 = vmul.f32 %v588, %v598
    %v619 = vmul.f32 %v589, %v599
    %v620 = vmul.f32 %v590, %v596
    %v621 = vmul.f32 %v591, %v597
    %v622 = vmul.f32 %v592, %v598
    %v623 = vmul.f32 %v593, %v599
    %v624 = vld [vmem:[%s3] sm:$0xf]
    %v626 = vperm.slane %v624, 0
    %v627 = vperm.slane %v624, 1
    %v628 = vperm.slane %v624, 2
    %v629 = vperm.slane %v624, 3
    %v634 = vadd.f32 %v604, %v626
    %v635 = vadd.f32 %v605, %v627
    %v636 = vadd.f32 %v606, %v628
    %v637 = vadd.f32 %v607, %v629
    %v638 = vadd.f32 %v608, %v626
    %v639 = vadd.f32 %v609, %v627
    %v640 = vadd.f32 %v610, %v628
    %v641 = vadd.f32 %v611, %v629
    %v642 = vadd.f32 %v612, %v626
    %v643 = vadd.f32 %v613, %v627
    %v644 = vadd.f32 %v614, %v628
    %v645 = vadd.f32 %v615, %v629
    %v646 = vadd.f32 %v616, %v626
    %v647 = vadd.f32 %v617, %v627
    %v648 = vadd.f32 %v618, %v628
    %v649 = vadd.f32 %v619, %v629
    %v650 = vadd.f32 %v620, %v626
    %v651 = vadd.f32 %v621, %v627
    %v652 = vadd.f32 %v622, %v628
    %v653 = vadd.f32 %v623, %v629
    %v654 = vmax.f32 %v634, 0.0
    %v655 = vmax.f32 %v635, 0.0
    %v656 = vmax.f32 %v636, 0.0
    %v657 = vmax.f32 %v637, 0.0
    %v658 = vmax.f32 %v638, 0.0
    %v659 = vmax.f32 %v639, 0.0
    %v660 = vmax.f32 %v640, 0.0
    %v661 = vmax.f32 %v641, 0.0
    %v662 = vmax.f32 %v642, 0.0
    %v663 = vmax.f32 %v643, 0.0
    %v664 = vmax.f32 %v644, 0.0
    %v665 = vmax.f32 %v645, 0.0
    %v666 = vmax.f32 %v646, 0.0
    %v667 = vmax.f32 %v647, 0.0
    %v668 = vmax.f32 %v648, 0.0
    %v669 = vmax.f32 %v649, 0.0
    %v670 = vmax.f32 %v650, 0.0
    %v671 = vmax.f32 %v651, 0.0
    %v672 = vmax.f32 %v652, 0.0
    %v673 = vmax.f32 %v653, 0.0
    %v674 = vmax.f32 %v654, %v656
    %v675 = vmax.f32 %v655, %v657
    %v676 = vmax.f32 %v658, %v660
    %v677 = vmax.f32 %v659, %v661
    %v678 = vmax.f32 %v662, %v664
    %v679 = vmax.f32 %v663, %v665
    %v680 = vmax.f32 %v666, %v668
    %v681 = vmax.f32 %v667, %v669
    %v682 = vmax.f32 %v670, %v672
    %v683 = vmax.f32 %v671, %v673
    %v684 = vld [vmem:[%s4] sm:$0xff]
    %v685 = vld [vmem:[%s4 + $0x8] sm:$0xff]
    %v686 = vld [vmem:[%s4 + $0x10] sm:$0xf]
    %vm687 = vcmask 277504
    %v689 = vsel %vm687, %v684, 0
    %v692 = vsel %vm687, %v685, 0
    %v695 = vsel %vm687, %v686, 0
    %v698 = vsel %vm110, %v682, 0
    %v701 = vsel %vm110, %v683, 0
    %703 = vmatpush.msra.mxu0 0.0
    %704 = vmatpush.msra.mxu0 0.0
    %705 = vmatpush.msra.mxu0 0.0
    %706 = vmatpush.msra.mxu0 0.0
    %707 = vmatpush.msra.mxu0 0.0
    %708 = vmatpush.msra.mxu0 0.0
    %709 = vmatpush.msra.mxu0 0.0
    %710 = vmatpush.msra.mxu0 0.0
    %711 = vmatpush.msra.mxu0 0.0
    %712 = vmatpush.msra.mxu0 0.0
    %713 = vmatpush.msra.mxu0 0.0
    %714 = vmatpush.msra.mxu0 %v698
    %715 = vmatpush.msra.mxu0 %v680
    %716 = vmatpush.msra.mxu0 %v678
    %717 = vmatpush.msra.mxu0 %v676
    %718 = vmatpush.msra.mxu0 %v674
    %719 = vmatmul.f32.gmra.mxu0 %v689
    %v720 = vpop.f32.mrf.mxu0
    %v721 = vadd.f32 0.0, %v720
    %722 = vmatmul.f32.gmra.mxu0 %v692
    %v723 = vpop.f32.mrf.mxu0
    %v724 = vadd.f32 0.0, %v723
    %725 = vmatmul.f32.gmra.mxu0 %v695
    %v726 = vpop.f32.mrf.mxu0
    %v727 = vadd.f32 0.0, %v726
    %728 = vdwg.mxu0
    %729 = vmatpush.msra.mxu0 0.0
    %730 = vmatpush.msra.mxu0 0.0
    %731 = vmatpush.msra.mxu0 0.0
    %732 = vmatpush.msra.mxu0 0.0
    %733 = vmatpush.msra.mxu0 0.0
    %734 = vmatpush.msra.mxu0 0.0
    %735 = vmatpush.msra.mxu0 0.0
    %736 = vmatpush.msra.mxu0 0.0
    %737 = vmatpush.msra.mxu0 0.0
    %738 = vmatpush.msra.mxu0 0.0
    %739 = vmatpush.msra.mxu0 0.0
    %740 = vmatpush.msra.mxu0 %v701
    %741 = vmatpush.msra.mxu0 %v681
    %742 = vmatpush.msra.mxu0 %v679
    %743 = vmatpush.msra.mxu0 %v677
    %744 = vmatpush.msra.mxu0 %v675
    %745 = vmatmul.f32.gmra.mxu0 %v689
    %v746 = vpop.f32.mrf.mxu0
    %v747 = vadd.f32 0.0, %v746
    %748 = vmatmul.f32.gmra.mxu0 %v692
    %v749 = vpop.f32.mrf.mxu0
    %v750 = vadd.f32 0.0, %v749
    %751 = vmatmul.f32.gmra.mxu0 %v695
    %v752 = vpop.f32.mrf.mxu0
    %v753 = vadd.f32 0.0, %v752
    %754 = vdwg.mxu0
    %s755 = scalar_lea.vmem %s4, 24
    %v756 = vld [vmem:[%s755] sm:$0xff]
    %v757 = vld [vmem:[%s755 + $0x8] sm:$0xff]
    %v758 = vld [vmem:[%s755 + $0x10] sm:$0xf]
    %v760 = vsel %vm687, %v756, 0
    %v763 = vsel %vm687, %v757, 0
    %v766 = vsel %vm687, %v758, 0
    %768 = vmatpush.msra.mxu0 0.0
    %769 = vmatpush.msra.mxu0 0.0
    %770 = vmatpush.msra.mxu0 0.0
    %771 = vmatpush.msra.mxu0 0.0
    %772 = vmatpush.msra.mxu0 0.0
    %773 = vmatpush.msra.mxu0 0.0
    %774 = vmatpush.msra.mxu0 0.0
    %775 = vmatpush.msra.mxu0 0.0
    %776 = vmatpush.msra.mxu0 0.0
    %777 = vmatpush.msra.mxu0 0.0
    %778 = vmatpush.msra.mxu0 0.0
    %779 = vmatpush.msra.mxu0 %v698
    %780 = vmatpush.msra.mxu0 %v680
    %781 = vmatpush.msra.mxu0 %v678
    %782 = vmatpush.msra.mxu0 %v676
    %783 = vmatpush.msra.mxu0 %v674
    %784 = vmatmul.f32.gmra.mxu0 %v760
    %v785 = vpop.f32.mrf.mxu0
    %v786 = vadd.f32 0.0, %v785
    %787 = vmatmul.f32.gmra.mxu0 %v763
    %v788 = vpop.f32.mrf.mxu0
    %v789 = vadd.f32 0.0, %v788
    %790 = vmatmul.f32.gmra.mxu0 %v766
    %v791 = vpop.f32.mrf.mxu0
    %v792 = vadd.f32 0.0, %v791
    %793 = vdwg.mxu0
    %794 = vmatpush.msra.mxu0 0.0
    %795 = vmatpush.msra.mxu0 0.0
    %796 = vmatpush.msra.mxu0 0.0
    %797 = vmatpush.msra.mxu0 0.0
    %798 = vmatpush.msra.mxu0 0.0
    %799 = vmatpush.msra.mxu0 0.0
    %800 = vmatpush.msra.mxu0 0.0
    %801 = vmatpush.msra.mxu0 0.0
    %802 = vmatpush.msra.mxu0 0.0
    %803 = vmatpush.msra.mxu0 0.0
    %804 = vmatpush.msra.mxu0 0.0
    %805 = vmatpush.msra.mxu0 %v701
    %806 = vmatpush.msra.mxu0 %v681
    %807 = vmatpush.msra.mxu0 %v679
    %808 = vmatpush.msra.mxu0 %v677
    %809 = vmatpush.msra.mxu0 %v675
    %810 = vmatmul.f32.gmra.mxu0 %v760
    %v811 = vpop.f32.mrf.mxu0
    %v812 = vadd.f32 0.0, %v811
    %813 = vmatmul.f32.gmra.mxu0 %v763
    %v814 = vpop.f32.mrf.mxu0
    %v815 = vadd.f32 0.0, %v814
    %816 = vmatmul.f32.gmra.mxu0 %v766
    %v817 = vpop.f32.mrf.mxu0
    %v818 = vadd.f32 0.0, %v817
    %819 = vdwg.mxu0
    %v820 = vmax.f32 %v721, %v786
    %v821 = vmax.f32 %v747, %v812
    %v822 = vmax.f32 %v724, %v789
    %v823 = vmax.f32 %v750, %v815
    %v824 = vmax.f32 %v727, %v792
    %v825 = vmax.f32 %v753, %v818
    %826 = vst [vmem:[#allocation2] sm:$0xff] %v820
    %827 = vst [vmem:[#allocation2 + $0x8] sm:$0xff] %v821
    %828 = vst [vmem:[#allocation2 + $0x10] sm:$0xff] %v822
    %829 = vst [vmem:[#allocation2 + $0x18] sm:$0xff] %v823
    %830 = vst [vmem:[#allocation2 + $0x20] sm:$0xf] %v824
    %831 = vst [vmem:[#allocation2 + $0x28] sm:$0xf] %v825
    %v832 = vld [vmem:[#allocation2] sm:$0xff]
    %v833 = vld [vmem:[#allocation2 + $0x8] sm:$0xff]
    %v834 = vld [vmem:[#allocation2 + $0x10] sm:$0xff]
    %v835 = vld [vmem:[#allocation2 + $0x18] sm:$0xff]
    %v836 = vld [vmem:[#allocation2 + $0x20] sm:$0xf]
    %v837 = vld [vmem:[#allocation2 + $0x28] sm:$0xf]
    %v838 = vld [vmem:[%s5] sm:$0xff]
    %v839 = vld [vmem:[%s5 + $0x8] sm:$0xff]
    %v840 = vld [vmem:[%s5 + $0x10] sm:$0xff]
    %v841 = vld [vmem:[%s5 + $0x18] sm:$0xff]
    %v842 = vld [vmem:[%s5 + $0x20] sm:$0xff]
    %v843 = vld [vmem:[%s5 + $0x28] sm:$0xff]
    %v844 = vld [vmem:[%s5 + $0x30] sm:$0xff]
    %v845 = vld [vmem:[%s5 + $0x38] sm:$0xff]
    %v846 = vld [vmem:[%s5 + $0x40] sm:$0xff]
    %v847 = vld [vmem:[%s5 + $0x48] sm:$0xff]
    %v848 = vld [vmem:[%s5 + $0x50] sm:$0xff]
    %v849 = vld [vmem:[%s5 + $0x58] sm:$0xff]
    %v850 = vld [vmem:[%s5 + $0x60] sm:$0xff]
    %v851 = vld [vmem:[%s5 + $0x68] sm:$0xff]
    %v852 = vld [vmem:[%s5 + $0x70] sm:$0xff]
    %v853 = vld [vmem:[%s5 + $0x78] sm:$0xff]
    %v854 = vld [vmem:[%s5 + $0x80] sm:$0xff]
    %v855 = vld [vmem:[%s5 + $0x88] sm:$0xff]
    %v856 = vld [vmem:[%s5 + $0x90] sm:$0xff]
    %v857 = vld [vmem:[%s5 + $0x98] sm:$0xff]
    %v858 = vld [vmem:[%s5 + $0xa0] sm:$0xff]
    %v859 = vld [vmem:[%s5 + $0xa8] sm:$0xff]
    %v860 = vld [vmem:[%s5 + $0xb0] sm:$0xff]
    %v861 = vld [vmem:[%s5 + $0xb8] sm:$0xff]
    %v862 = vld [vmem:[%s5 + $0xc0] sm:$0xff]
    %v863 = vld [vmem:[%s5 + $0xc8] sm:$0xff]
    %v864 = vld [vmem:[%s5 + $0xd0] sm:$0xff]
    %v865 = vld [vmem:[%s5 + $0xd8] sm:$0xff]
    %v866 = vld [vmem:[%s5 + $0xe0] sm:$0xff]
    %v867 = vld [vmem:[%s5 + $0xe8] sm:$0xff]
    %v868 = vld [vmem:[%s5 + $0xf0] sm:$0xff]
    %v869 = vld [vmem:[%s5 + $0xf8] sm:$0xff]
    %v870 = vld [vmem:[%s5 + $0x100] sm:$0xff]
    %v871 = vld [vmem:[%s5 + $0x108] sm:$0xff]
    %v872 = vld [vmem:[%s5 + $0x110] sm:$0xff]
    %v873 = vld [vmem:[%s5 + $0x118] sm:$0xff]
    %v874 = vld [vmem:[%s5 + $0x120] sm:$0xff]
    %v875 = vld [vmem:[%s5 + $0x128] sm:$0xff]
    %v876 = vld [vmem:[%s5 + $0x130] sm:$0xff]
    %v877 = vld [vmem:[%s5 + $0x138] sm:$0xff]
    %v878 = vld [vmem:[%s5 + $0x140] sm:$0xff]
    %v879 = vld [vmem:[%s5 + $0x148] sm:$0xff]
    %v880 = vld [vmem:[%s5 + $0x150] sm:$0xff]
    %v881 = vld [vmem:[%s5 + $0x158] sm:$0xff]
    %v882 = vld [vmem:[%s5 + $0x160] sm:$0xff]
    %v883 = vld [vmem:[%s5 + $0x168] sm:$0xff]
    %v884 = vld [vmem:[%s5 + $0x170] sm:$0xff]
    %v885 = vld [vmem:[%s5 + $0x178] sm:$0xff]
    %v886 = vld [vmem:[%s5 + $0x180] sm:$0xff]
    %v887 = vld [vmem:[%s5 + $0x188] sm:$0xff]
    %v888 = vld [vmem:[%s5 + $0x190] sm:$0xff]
    %v889 = vld [vmem:[%s5 + $0x198] sm:$0xff]
    %v890 = vld [vmem:[%s5 + $0x1a0] sm:$0xff]
    %v891 = vld [vmem:[%s5 + $0x1a8] sm:$0xff]
    %v892 = vld [vmem:[%s5 + $0x1b0] sm:$0xff]
    %v893 = vld [vmem:[%s5 + $0x1b8] sm:$0xff]
    %v894 = vld [vmem:[%s5 + $0x1c0] sm:$0xff]
    %v895 = vld [vmem:[%s5 + $0x1c8] sm:$0xff]
    %v896 = vld [vmem:[%s5 + $0x1d0] sm:$0xff]
    %v897 = vld [vmem:[%s5 + $0x1d8] sm:$0xff]
    %v898 = vld [vmem:[%s5 + $0x1e0] sm:$0xff]
    %v899 = vld [vmem:[%s5 + $0x1e8] sm:$0xff]
    %v900 = vld [vmem:[%s5 + $0x1f0] sm:$0xff]
    %v901 = vld [vmem:[%s5 + $0x1f8] sm:$0xff]
    %v902 = vld [vmem:[%s5 + $0x200] sm:$0xff]
    %v903 = vld [vmem:[%s5 + $0x208] sm:$0xff]
    %v904 = vld [vmem:[%s5 + $0x210] sm:$0xff]
    %v905 = vld [vmem:[%s5 + $0x218] sm:$0xff]
    %v906 = vld [vmem:[%s5 + $0x220] sm:$0xff]
    %v907 = vld [vmem:[%s5 + $0x228] sm:$0xff]
    %v908 = vld [vmem:[%s5 + $0x230] sm:$0xff]
    %v909 = vld [vmem:[%s5 + $0x238] sm:$0xff]
    %v910 = vld [vmem:[%s5 + $0x240] sm:$0xff]
    %v911 = vld [vmem:[%s5 + $0x248] sm:$0xff]
    %v912 = vld [vmem:[%s5 + $0x250] sm:$0xff]
    %v913 = vld [vmem:[%s5 + $0x258] sm:$0xff]
    %v914 = vld [vmem:[%s5 + $0x260] sm:$0xff]
    %v915 = vld [vmem:[%s5 + $0x268] sm:$0xff]
    %v916 = vld [vmem:[%s5 + $0x270] sm:$0xff]
    %v917 = vld [vmem:[%s5 + $0x278] sm:$0xff]
    %v918 = vld [vmem:[%s5 + $0x280] sm:$0xff]
    %v919 = vld [vmem:[%s5 + $0x288] sm:$0xff]
    %v920 = vld [vmem:[%s5 + $0x290] sm:$0xff]
    %v921 = vld [vmem:[%s5 + $0x298] sm:$0xff]
    %v922 = vld [vmem:[%s5 + $0x2a0] sm:$0xff]
    %v923 = vld [vmem:[%s5 + $0x2a8] sm:$0xff]
    %v924 = vld [vmem:[%s5 + $0x2b0] sm:$0xff]
    %v925 = vld [vmem:[%s5 + $0x2b8] sm:$0xff]
    %v926 = vld [vmem:[%s5 + $0x2c0] sm:$0xff]
    %v927 = vld [vmem:[%s5 + $0x2c8] sm:$0xff]
    %v928 = vld [vmem:[%s5 + $0x2d0] sm:$0xff]
    %v929 = vld [vmem:[%s5 + $0x2d8] sm:$0xff]
    %v930 = vld [vmem:[%s5 + $0x2e0] sm:$0xff]
    %v931 = vld [vmem:[%s5 + $0x2e8] sm:$0xff]
    %v932 = vld [vmem:[%s5 + $0x2f0] sm:$0xff]
    %v933 = vld [vmem:[%s5 + $0x2f8] sm:$0xff]
    %v934 = vld [vmem:[%s5 + $0x300] sm:$0xff]
    %v935 = vld [vmem:[%s5 + $0x308] sm:$0xff]
    %v936 = vld [vmem:[%s5 + $0x310] sm:$0xff]
    %v937 = vld [vmem:[%s5 + $0x318] sm:$0xff]
    %v938 = vld [vmem:[%s5 + $0x320] sm:$0xff]
    %v939 = vld [vmem:[%s5 + $0x328] sm:$0xff]
    %v940 = vld [vmem:[%s5 + $0x330] sm:$0xff]
    %v941 = vld [vmem:[%s5 + $0x338] sm:$0xff]
    %v942 = vld [vmem:[%s5 + $0x340] sm:$0xff]
    %v943 = vld [vmem:[%s5 + $0x348] sm:$0xff]
    %v944 = vld [vmem:[%s5 + $0x350] sm:$0xff]
    %v945 = vld [vmem:[%s5 + $0x358] sm:$0xff]
    %v946 = vld [vmem:[%s5 + $0x360] sm:$0xff]
    %v947 = vld [vmem:[%s5 + $0x368] sm:$0xff]
    %v948 = vld [vmem:[%s5 + $0x370] sm:$0xff]
    %v949 = vld [vmem:[%s5 + $0x378] sm:$0xff]
    %v950 = vld [vmem:[%s5 + $0x380] sm:$0xff]
    %v951 = vld [vmem:[%s5 + $0x388] sm:$0xff]
    %v952 = vld [vmem:[%s5 + $0x390] sm:$0xff]
    %v953 = vld [vmem:[%s5 + $0x398] sm:$0xff]
    %v954 = vld [vmem:[%s5 + $0x3a0] sm:$0xff]
    %v955 = vld [vmem:[%s5 + $0x3a8] sm:$0xff]
    %v956 = vld [vmem:[%s5 + $0x3b0] sm:$0xff]
    %v957 = vld [vmem:[%s5 + $0x3b8] sm:$0xff]
    %v958 = vld [vmem:[%s5 + $0x3c0] sm:$0xff]
    %v959 = vld [vmem:[%s5 + $0x3c8] sm:$0xff]
    %v960 = vld [vmem:[%s5 + $0x3d0] sm:$0xff]
    %v961 = vld [vmem:[%s5 + $0x3d8] sm:$0xff]
    %v962 = vld [vmem:[%s5 + $0x3e0] sm:$0xff]
    %v963 = vld [vmem:[%s5 + $0x3e8] sm:$0xff]
    %v964 = vld [vmem:[%s5 + $0x3f0] sm:$0xff]
    %v965 = vld [vmem:[%s5 + $0x3f8] sm:$0xff]
    %s966 = scalar_lea.vmem %s5, 1024
    %v967 = vld [vmem:[%s966] sm:$0xff]
    %v968 = vld [vmem:[%s966 + $0x8] sm:$0xff]
    %v969 = vld [vmem:[%s966 + $0x10] sm:$0xff]
    %v970 = vld [vmem:[%s966 + $0x18] sm:$0xff]
    %v971 = vld [vmem:[%s966 + $0x20] sm:$0xff]
    %v972 = vld [vmem:[%s966 + $0x28] sm:$0xff]
    %v973 = vld [vmem:[%s966 + $0x30] sm:$0xff]
    %v974 = vld [vmem:[%s966 + $0x38] sm:$0xff]
    %v975 = vld [vmem:[%s966 + $0x40] sm:$0xff]
    %v976 = vld [vmem:[%s966 + $0x48] sm:$0xff]
    %v977 = vld [vmem:[%s966 + $0x50] sm:$0xff]
    %v978 = vld [vmem:[%s966 + $0x58] sm:$0xff]
    %v979 = vld [vmem:[%s966 + $0x60] sm:$0xff]
    %v980 = vld [vmem:[%s966 + $0x68] sm:$0xff]
    %v981 = vld [vmem:[%s966 + $0x70] sm:$0xff]
    %v982 = vld [vmem:[%s966 + $0x78] sm:$0xff]
    %v983 = vld [vmem:[%s966 + $0x80] sm:$0xff]
    %v984 = vld [vmem:[%s966 + $0x88] sm:$0xff]
    %v985 = vld [vmem:[%s966 + $0x90] sm:$0xff]
    %v986 = vld [vmem:[%s966 + $0x98] sm:$0xff]
    %v987 = vld [vmem:[%s966 + $0xa0] sm:$0xff]
    %v988 = vld [vmem:[%s966 + $0xa8] sm:$0xff]
    %v989 = vld [vmem:[%s966 + $0xb0] sm:$0xff]
    %v990 = vld [vmem:[%s966 + $0xb8] sm:$0xff]
    %v991 = vld [vmem:[%s966 + $0xc0] sm:$0xff]
    %v992 = vld [vmem:[%s966 + $0xc8] sm:$0xff]
    %v993 = vld [vmem:[%s966 + $0xd0] sm:$0xff]
    %v994 = vld [vmem:[%s966 + $0xd8] sm:$0xff]
    %v995 = vld [vmem:[%s966 + $0xe0] sm:$0xff]
    %v996 = vld [vmem:[%s966 + $0xe8] sm:$0xff]
    %v997 = vld [vmem:[%s966 + $0xf0] sm:$0xff]
    %v998 = vld [vmem:[%s966 + $0xf8] sm:$0xff]
    %v999 = vld [vmem:[%s966 + $0x100] sm:$0xff]
    %v1000 = vld [vmem:[%s966 + $0x108] sm:$0xff]
    %v1001 = vld [vmem:[%s966 + $0x110] sm:$0xff]
    %v1002 = vld [vmem:[%s966 + $0x118] sm:$0xff]
    %v1003 = vld [vmem:[%s966 + $0x120] sm:$0xff]
    %v1004 = vld [vmem:[%s966 + $0x128] sm:$0xff]
    %v1005 = vld [vmem:[%s966 + $0x130] sm:$0xff]
    %v1006 = vld [vmem:[%s966 + $0x138] sm:$0xff]
    %v1007 = vld [vmem:[%s966 + $0x140] sm:$0xff]
    %v1008 = vld [vmem:[%s966 + $0x148] sm:$0xff]
    %v1009 = vld [vmem:[%s966 + $0x150] sm:$0xff]
    %v1010 = vld [vmem:[%s966 + $0x158] sm:$0xff]
    %v1011 = vld [vmem:[%s966 + $0x160] sm:$0xff]
    %v1012 = vld [vmem:[%s966 + $0x168] sm:$0xff]
    %v1013 = vld [vmem:[%s966 + $0x170] sm:$0xff]
    %v1014 = vld [vmem:[%s966 + $0x178] sm:$0xff]
    %v1015 = vld [vmem:[%s966 + $0x180] sm:$0xff]
    %v1016 = vld [vmem:[%s966 + $0x188] sm:$0xff]
    %v1017 = vld [vmem:[%s966 + $0x190] sm:$0xff]
    %v1018 = vld [vmem:[%s966 + $0x198] sm:$0xff]
    %v1019 = vld [vmem:[%s966 + $0x1a0] sm:$0xff]
    %v1020 = vld [vmem:[%s966 + $0x1a8] sm:$0xff]
    %v1021 = vld [vmem:[%s966 + $0x1b0] sm:$0xff]
    %v1022 = vld [vmem:[%s966 + $0x1b8] sm:$0xff]
    %v1023 = vld [vmem:[%s966 + $0x1c0] sm:$0xff]
    %v1024 = vld [vmem:[%s966 + $0x1c8] sm:$0xff]
    %v1025 = vld [vmem:[%s966 + $0x1d0] sm:$0xff]
    %v1026 = vld [vmem:[%s966 + $0x1d8] sm:$0xff]
    %v1027 = vld [vmem:[%s966 + $0x1e0] sm:$0xff]
    %v1028 = vld [vmem:[%s966 + $0x1e8] sm:$0xff]
    %v1029 = vld [vmem:[%s966 + $0x1f0] sm:$0xff]
    %v1030 = vld [vmem:[%s966 + $0x1f8] sm:$0xff]
    %v1031 = vld [vmem:[%s966 + $0x200] sm:$0xff]
    %v1032 = vld [vmem:[%s966 + $0x208] sm:$0xff]
    %v1033 = vld [vmem:[%s966 + $0x210] sm:$0xff]
    %v1034 = vld [vmem:[%s966 + $0x218] sm:$0xff]
    %v1035 = vld [vmem:[%s966 + $0x220] sm:$0xff]
    %v1036 = vld [vmem:[%s966 + $0x228] sm:$0xff]
    %v1037 = vld [vmem:[%s966 + $0x230] sm:$0xff]
    %v1038 = vld [vmem:[%s966 + $0x238] sm:$0xff]
    %v1039 = vld [vmem:[%s966 + $0x240] sm:$0xff]
    %v1040 = vld [vmem:[%s966 + $0x248] sm:$0xff]
    %v1041 = vld [vmem:[%s966 + $0x250] sm:$0xff]
    %v1042 = vld [vmem:[%s966 + $0x258] sm:$0xff]
    %v1043 = vld [vmem:[%s966 + $0x260] sm:$0xff]
    %v1044 = vld [vmem:[%s966 + $0x268] sm:$0xff]
    %v1045 = vld [vmem:[%s966 + $0x270] sm:$0xff]
    %v1046 = vld [vmem:[%s966 + $0x278] sm:$0xff]
    %v1047 = vld [vmem:[%s966 + $0x280] sm:$0xff]
    %v1048 = vld [vmem:[%s966 + $0x288] sm:$0xff]
    %v1049 = vld [vmem:[%s966 + $0x290] sm:$0xff]
    %v1050 = vld [vmem:[%s966 + $0x298] sm:$0xff]
    %v1051 = vld [vmem:[%s966 + $0x2a0] sm:$0xff]
    %v1052 = vld [vmem:[%s966 + $0x2a8] sm:$0xff]
    %v1053 = vld [vmem:[%s966 + $0x2b0] sm:$0xff]
    %v1054 = vld [vmem:[%s966 + $0x2b8] sm:$0xff]
    %v1055 = vld [vmem:[%s966 + $0x2c0] sm:$0xff]
    %v1056 = vld [vmem:[%s966 + $0x2c8] sm:$0xff]
    %v1057 = vld [vmem:[%s966 + $0x2d0] sm:$0xff]
    %v1058 = vld [vmem:[%s966 + $0x2d8] sm:$0xff]
    %v1059 = vld [vmem:[%s966 + $0x2e0] sm:$0xff]
    %v1060 = vld [vmem:[%s966 + $0x2e8] sm:$0xff]
    %v1061 = vld [vmem:[%s966 + $0x2f0] sm:$0xff]
    %v1062 = vld [vmem:[%s966 + $0x2f8] sm:$0xff]
    %v1063 = vld [vmem:[%s966 + $0x300] sm:$0xff]
    %v1064 = vld [vmem:[%s966 + $0x308] sm:$0xff]
    %v1065 = vld [vmem:[%s966 + $0x310] sm:$0xff]
    %v1066 = vld [vmem:[%s966 + $0x318] sm:$0xff]
    %v1067 = vld [vmem:[%s966 + $0x320] sm:$0xff]
    %v1068 = vld [vmem:[%s966 + $0x328] sm:$0xff]
    %v1069 = vld [vmem:[%s966 + $0x330] sm:$0xff]
    %v1070 = vld [vmem:[%s966 + $0x338] sm:$0xff]
    %v1071 = vld [vmem:[%s966 + $0x340] sm:$0xff]
    %v1072 = vld [vmem:[%s966 + $0x348] sm:$0xff]
    %v1073 = vld [vmem:[%s966 + $0x350] sm:$0xff]
    %v1074 = vld [vmem:[%s966 + $0x358] sm:$0xff]
    %v1075 = vld [vmem:[%s966 + $0x360] sm:$0xff]
    %v1076 = vld [vmem:[%s966 + $0x368] sm:$0xff]
    %v1077 = vld [vmem:[%s966 + $0x370] sm:$0xff]
    %v1078 = vld [vmem:[%s966 + $0x378] sm:$0xff]
    %v1079 = vld [vmem:[%s966 + $0x380] sm:$0xff]
    %v1080 = vld [vmem:[%s966 + $0x388] sm:$0xff]
    %v1081 = vld [vmem:[%s966 + $0x390] sm:$0xff]
    %v1082 = vld [vmem:[%s966 + $0x398] sm:$0xff]
    %v1083 = vld [vmem:[%s966 + $0x3a0] sm:$0xff]
    %v1084 = vld [vmem:[%s966 + $0x3a8] sm:$0xff]
    %v1085 = vld [vmem:[%s966 + $0x3b0] sm:$0xff]
    %v1086 = vld [vmem:[%s966 + $0x3b8] sm:$0xff]
    %v1087 = vld [vmem:[%s966 + $0x3c0] sm:$0xff]
    %v1088 = vld [vmem:[%s966 + $0x3c8] sm:$0xff]
    %v1089 = vld [vmem:[%s966 + $0x3d0] sm:$0xff]
    %v1090 = vld [vmem:[%s966 + $0x3d8] sm:$0xff]
    %v1091 = vld [vmem:[%s966 + $0x3e0] sm:$0xff]
    %v1092 = vld [vmem:[%s966 + $0x3e8] sm:$0xff]
    %v1093 = vld [vmem:[%s966 + $0x3f0] sm:$0xff]
    %v1094 = vld [vmem:[%s966 + $0x3f8] sm:$0xff]
    %v1101 = vrot.slane %v832, 1
    %v1102 = vrot.slane %v834, 1
    %v1103 = vsel %vm89, %v1101, %v1102
    %v1104 = vrot.slane %v833, 1
    %v1105 = vrot.slane %v835, 1
    %v1106 = vsel %vm89, %v1104, %v1105
    %v1107 = vrot.slane %v836, 1
    %v1108 = vsel %vm89, %v1102, %v1107
    %v1109 = vrot.slane %v837, 1
    %v1110 = vsel %vm89, %v1105, %v1109
    %1117 = vmatpush.msra.mxu0 %v1027
    %1118 = vmatpush.msra.mxu0 %v1023
    %1119 = vmatpush.msra.mxu0 %v1019
    %1120 = vmatpush.msra.mxu0 %v1015
    %1121 = vmatpush.msra.mxu0 %v1011
    %1122 = vmatpush.msra.mxu0 %v1007
    %1123 = vmatpush.msra.mxu0 %v1003
    %1124 = vmatpush.msra.mxu0 %v999
    %1125 = vmatpush.msra.mxu0 %v995
    %1126 = vmatpush.msra.mxu0 %v991
    %1127 = vmatpush.msra.mxu0 %v987
    %1128 = vmatpush.msra.mxu0 %v983
    %1129 = vmatpush.msra.mxu0 %v979
    %1130 = vmatpush.msra.mxu0 %v975
    %1131 = vmatpush.msra.mxu0 %v971
    %1132 = vmatpush.msra.mxu0 %v967
    %1133 = vmatmul.f32.gmra.mxu0 %v1103
    %v1134 = vpop.f32.mrf.mxu0
    %v1135 = vadd.f32 0.0, %v1134
    %1136 = vmatmul.f32.gmra.mxu0 %v1108
    %v1137 = vpop.f32.mrf.mxu0
    %v1138 = vadd.f32 0.0, %v1137
    %1139 = vmatmul.f32.gmra.mxu0 %v1107
    %v1140 = vpop.f32.mrf.mxu0
    %v1141 = vadd.f32 0.0, %v1140
    %1142 = vdwg.mxu0
    %1143 = vmatpush.msra.mxu0 %v1091
    %1144 = vmatpush.msra.mxu0 %v1087
    %1145 = vmatpush.msra.mxu0 %v1083
    %1146 = vmatpush.msra.mxu0 %v1079
    %1147 = vmatpush.msra.mxu0 %v1075
    %1148 = vmatpush.msra.mxu0 %v1071
    %1149 = vmatpush.msra.mxu0 %v1067
    %1150 = vmatpush.msra.mxu0 %v1063
    %1151 = vmatpush.msra.mxu0 %v1059
    %1152 = vmatpush.msra.mxu0 %v1055
    %1153 = vmatpush.msra.mxu0 %v1051
    %1154 = vmatpush.msra.mxu0 %v1047
    %1155 = vmatpush.msra.mxu0 %v1043
    %1156 = vmatpush.msra.mxu0 %v1039
    %1157 = vmatpush.msra.mxu0 %v1035
    %1158 = vmatpush.msra.mxu0 %v1031
    %1159 = vmatmul.f32.gmra.mxu0 %v1106
    %v1160 = vpop.f32.mrf.mxu0
    %v1161 = vadd.f32 %v1135, %v1160
    %1162 = vmatmul.f32.gmra.mxu0 %v1110
    %v1163 = vpop.f32.mrf.mxu0
    %v1164 = vadd.f32 %v1138, %v1163
    %1165 = vmatmul.f32.gmra.mxu0 %v1109
    %v1166 = vpop.f32.mrf.mxu0
    %v1167 = vadd.f32 %v1141, %v1166
    %1168 = vdwg.mxu0
    %1169 = vmatpush.msra.mxu0 %v1028
    %1170 = vmatpush.msra.mxu0 %v1024
    %1171 = vmatpush.msra.mxu0 %v1020
    %1172 = vmatpush.msra.mxu0 %v1016
    %1173 = vmatpush.msra.mxu0 %v1012
    %1174 = vmatpush.msra.mxu0 %v1008
    %1175 = vmatpush.msra.mxu0 %v1004
    %1176 = vmatpush.msra.mxu0 %v1000
    %1177 = vmatpush.msra.mxu0 %v996
    %1178 = vmatpush.msra.mxu0 %v992
    %1179 = vmatpush.msra.mxu0 %v988
    %1180 = vmatpush.msra.mxu0 %v984
    %1181 = vmatpush.msra.mxu0 %v980
    %1182 = vmatpush.msra.mxu0 %v976
    %1183 = vmatpush.msra.mxu0 %v972
    %1184 = vmatpush.msra.mxu0 %v968
    %1185 = vmatmul.f32.gmra.mxu0 %v1103
    %v1186 = vpop.f32.mrf.mxu0
    %v1187 = vadd.f32 0.0, %v1186
    %1188 = vmatmul.f32.gmra.mxu0 %v1108
    %v1189 = vpop.f32.mrf.mxu0
    %v1190 = vadd.f32 0.0, %v1189
    %1191 = vmatmul.f32.gmra.mxu0 %v1107
    %v1192 = vpop.f32.mrf.mxu0
    %v1193 = vadd.f32 0.0, %v1192
    %1194 = vdwg.mxu0
    %1195 = vmatpush.msra.mxu0 %v1092
    %1196 = vmatpush.msra.mxu0 %v1088
    %1197 = vmatpush.msra.mxu0 %v1084
    %1198 = vmatpush.msra.mxu0 %v1080
    %1199 = vmatpush.msra.mxu0 %v1076
    %1200 = vmatpush.msra.mxu0 %v1072
    %1201 = vmatpush.msra.mxu0 %v1068
    %1202 = vmatpush.msra.mxu0 %v1064
    %1203 = vmatpush.msra.mxu0 %v1060
    %1204 = vmatpush.msra.mxu0 %v1056
    %1205 = vmatpush.msra.mxu0 %v1052
    %1206 = vmatpush.msra.mxu0 %v1048
    %1207 = vmatpush.msra.mxu0 %v1044
    %1208 = vmatpush.msra.mxu0 %v1040
    %1209 = vmatpush.msra.mxu0 %v1036
    %1210 = vmatpush.msra.mxu0 %v1032
    %1211 = vmatmul.f32.gmra.mxu0 %v1106
    %v1212 = vpop.f32.mrf.mxu0
    %v1213 = vadd.f32 %v1187, %v1212
    %1214 = vmatmul.f32.gmra.mxu0 %v1110
    %v1215 = vpop.f32.mrf.mxu0
    %v1216 = vadd.f32 %v1190, %v1215
    %1217 = vmatmul.f32.gmra.mxu0 %v1109
    %v1218 = vpop.f32.mrf.mxu0
    %v1219 = vadd.f32 %v1193, %v1218
    %1220 = vdwg.mxu0
    %1221 = vmatpush.msra.mxu0 %v1029
    %1222 = vmatpush.msra.mxu0 %v1025
    %1223 = vmatpush.msra.mxu0 %v1021
    %1224 = vmatpush.msra.mxu0 %v1017
    %1225 = vmatpush.msra.mxu0 %v1013
    %1226 = vmatpush.msra.mxu0 %v1009
    %1227 = vmatpush.msra.mxu0 %v1005
    %1228 = vmatpush.msra.mxu0 %v1001
    %1229 = vmatpush.msra.mxu0 %v997
    %1230 = vmatpush.msra.mxu0 %v993
    %1231 = vmatpush.msra.mxu0 %v989
    %1232 = vmatpush.msra.mxu0 %v985
    %1233 = vmatpush.msra.mxu0 %v981
    %1234 = vmatpush.msra.mxu0 %v977
    %1235 = vmatpush.msra.mxu0 %v973
    %1236 = vmatpush.msra.mxu0 %v969
    %1237 = vmatmul.f32.gmra.mxu0 %v1103
    %v1238 = vpop.f32.mrf.mxu0
    %v1239 = vadd.f32 0.0, %v1238
    %1240 = vmatmul.f32.gmra.mxu0 %v1108
    %v1241 = vpop.f32.mrf.mxu0
    %v1242 = vadd.f32 0.0, %v1241
    %1243 = vmatmul.f32.gmra.mxu0 %v1107
    %v1244 = vpop.f32.mrf.mxu0
    %v1245 = vadd.f32 0.0, %v1244
    %1246 = vdwg.mxu0
    %1247 = vmatpush.msra.mxu0 %v1093
    %1248 = vmatpush.msra.mxu0 %v1089
    %1249 = vmatpush.msra.mxu0 %v1085
    %1250 = vmatpush.msra.mxu0 %v1081
    %1251 = vmatpush.msra.mxu0 %v1077
    %1252 = vmatpush.msra.mxu0 %v1073
    %1253 = vmatpush.msra.mxu0 %v1069
    %1254 = vmatpush.msra.mxu0 %v1065
    %1255 = vmatpush.msra.mxu0 %v1061
    %1256 = vmatpush.msra.mxu0 %v1057
    %1257 = vmatpush.msra.mxu0 %v1053
    %1258 = vmatpush.msra.mxu0 %v1049
    %1259 = vmatpush.msra.mxu0 %v1045
    %1260 = vmatpush.msra.mxu0 %v1041
    %1261 = vmatpush.msra.mxu0 %v1037
    %1262 = vmatpush.msra.mxu0 %v1033
    %1263 = vmatmul.f32.gmra.mxu0 %v1106
    %v1264 = vpop.f32.mrf.mxu0
    %v1265 = vadd.f32 %v1239, %v1264
    %1266 = vmatmul.f32.gmra.mxu0 %v1110
    %v1267 = vpop.f32.mrf.mxu0
    %v1268 = vadd.f32 %v1242, %v1267
    %1269 = vmatmul.f32.gmra.mxu0 %v1109
    %v1270 = vpop.f32.mrf.mxu0
    %v1271 = vadd.f32 %v1245, %v1270
    %1272 = vdwg.mxu0
    %1273 = vmatpush.msra.mxu0 %v1030
    %1274 = vmatpush.msra.mxu0 %v1026
    %1275 = vmatpush.msra.mxu0 %v1022
    %1276 = vmatpush.msra.mxu0 %v1018
    %1277 = vmatpush.msra.mxu0 %v1014
    %1278 = vmatpush.msra.mxu0 %v1010
    %1279 = vmatpush.msra.mxu0 %v1006
    %1280 = vmatpush.msra.mxu0 %v1002
    %1281 = vmatpush.msra.mxu0 %v998
    %1282 = vmatpush.msra.mxu0 %v994
    %1283 = vmatpush.msra.mxu0 %v990
    %1284 = vmatpush.msra.mxu0 %v986
    %1285 = vmatpush.msra.mxu0 %v982
    %1286 = vmatpush.msra.mxu0 %v978
    %1287 = vmatpush.msra.mxu0 %v974
    %1288 = vmatpush.msra.mxu0 %v970
    %1289 = vmatmul.f32.gmra.mxu0 %v1103
    %v1290 = vpop.f32.mrf.mxu0
    %v1291 = vadd.f32 0.0, %v1290
    %1292 = vmatmul.f32.gmra.mxu0 %v1108
    %v1293 = vpop.f32.mrf.mxu0
    %v1294 = vadd.f32 0.0, %v1293
    %1295 = vmatmul.f32.gmra.mxu0 %v1107
    %v1296 = vpop.f32.mrf.mxu0
    %v1297 = vadd.f32 0.0, %v1296
    %1298 = vdwg.mxu0
    %1299 = vmatpush.msra.mxu0 %v1094
    %1300 = vmatpush.msra.mxu0 %v1090
    %1301 = vmatpush.msra.mxu0 %v1086
    %1302 = vmatpush.msra.mxu0 %v1082
    %1303 = vmatpush.msra.mxu0 %v1078
    %1304 = vmatpush.msra.mxu0 %v1074
    %1305 = vmatpush.msra.mxu0 %v1070
    %1306 = vmatpush.msra.mxu0 %v1066
    %1307 = vmatpush.msra.mxu0 %v1062
    %1308 = vmatpush.msra.mxu0 %v1058
    %1309 = vmatpush.msra.mxu0 %v1054
    %1310 = vmatpush.msra.mxu0 %v1050
    %1311 = vmatpush.msra.mxu0 %v1046
    %1312 = vmatpush.msra.mxu0 %v1042
    %1313 = vmatpush.msra.mxu0 %v1038
    %1314 = vmatpush.msra.mxu0 %v1034
    %1315 = vmatmul.f32.gmra.mxu0 %v1106
    %v1316 = vpop.f32.mrf.mxu0
    %v1317 = vadd.f32 %v1291, %v1316
    %1318 = vmatmul.f32.gmra.mxu0 %v1110
    %v1319 = vpop.f32.mrf.mxu0
    %v1320 = vadd.f32 %v1294, %v1319
    %1321 = vmatmul.f32.gmra.mxu0 %v1109
    %v1322 = vpop.f32.mrf.mxu0
    %v1323 = vadd.f32 %v1297, %v1322
    %1324 = vdwg.mxu0
    %1325 = vmatpush.msra.mxu0 %v898
    %1326 = vmatpush.msra.mxu0 %v894
    %1327 = vmatpush.msra.mxu0 %v890
    %1328 = vmatpush.msra.mxu0 %v886
    %1329 = vmatpush.msra.mxu0 %v882
    %1330 = vmatpush.msra.mxu0 %v878
    %1331 = vmatpush.msra.mxu0 %v874
    %1332 = vmatpush.msra.mxu0 %v870
    %1333 = vmatpush.msra.mxu0 %v866
    %1334 = vmatpush.msra.mxu0 %v862
    %1335 = vmatpush.msra.mxu0 %v858
    %1336 = vmatpush.msra.mxu0 %v854
    %1337 = vmatpush.msra.mxu0 %v850
    %1338 = vmatpush.msra.mxu0 %v846
    %1339 = vmatpush.msra.mxu0 %v842
    %1340 = vmatpush.msra.mxu0 %v838
    %1341 = vmatmul.f32.gmra.mxu0 %v832
    %v1342 = vpop.f32.mrf.mxu0
    %v1343 = vadd.f32 %v1161, %v1342
    %1344 = vmatmul.f32.gmra.mxu0 %v834
    %v1345 = vpop.f32.mrf.mxu0
    %v1346 = vadd.f32 %v1164, %v1345
    %1347 = vmatmul.f32.gmra.mxu0 %v836
    %v1348 = vpop.f32.mrf.mxu0
    %v1349 = vadd.f32 %v1167, %v1348
    %1350 = vdwg.mxu0
    %1351 = vmatpush.msra.mxu0 %v962
    %1352 = vmatpush.msra.mxu0 %v958
    %1353 = vmatpush.msra.mxu0 %v954
    %1354 = vmatpush.msra.mxu0 %v950
    %1355 = vmatpush.msra.mxu0 %v946
    %1356 = vmatpush.msra.mxu0 %v942
    %1357 = vmatpush.msra.mxu0 %v938
    %1358 = vmatpush.msra.mxu0 %v934
    %1359 = vmatpush.msra.mxu0 %v930
    %1360 = vmatpush.msra.mxu0 %v926
    %1361 = vmatpush.msra.mxu0 %v922
    %1362 = vmatpush.msra.mxu0 %v918
    %1363 = vmatpush.msra.mxu0 %v914
    %1364 = vmatpush.msra.mxu0 %v910
    %1365 = vmatpush.msra.mxu0 %v906
    %1366 = vmatpush.msra.mxu0 %v902
    %1367 = vmatmul.f32.gmra.mxu0 %v833
    %v1368 = vpop.f32.mrf.mxu0
    %v1369 = vadd.f32 %v1343, %v1368
    %1370 = vmatmul.f32.gmra.mxu0 %v835
    %v1371 = vpop.f32.mrf.mxu0
    %v1372 = vadd.f32 %v1346, %v1371
    %1373 = vmatmul.f32.gmra.mxu0 %v837
    %v1374 = vpop.f32.mrf.mxu0
    %v1375 = vadd.f32 %v1349, %v1374
    %1376 = vdwg.mxu0
    %1377 = vmatpush.msra.mxu0 %v899
    %1378 = vmatpush.msra.mxu0 %v895
    %1379 = vmatpush.msra.mxu0 %v891
    %1380 = vmatpush.msra.mxu0 %v887
    %1381 = vmatpush.msra.mxu0 %v883
    %1382 = vmatpush.msra.mxu0 %v879
    %1383 = vmatpush.msra.mxu0 %v875
    %1384 = vmatpush.msra.mxu0 %v871
    %1385 = vmatpush.msra.mxu0 %v867
    %1386 = vmatpush.msra.mxu0 %v863
    %1387 = vmatpush.msra.mxu0 %v859
    %1388 = vmatpush.msra.mxu0 %v855
    %1389 = vmatpush.msra.mxu0 %v851
    %1390 = vmatpush.msra.mxu0 %v847
    %1391 = vmatpush.msra.mxu0 %v843
    %1392 = vmatpush.msra.mxu0 %v839
    %1393 = vmatmul.f32.gmra.mxu0 %v832
    %v1394 = vpop.f32.mrf.mxu0
    %v1395 = vadd.f32 %v1213, %v1394
    %1396 = vmatmul.f32.gmra.mxu0 %v834
    %v1397 = vpop.f32.mrf.mxu0
    %v1398 = vadd.f32 %v1216, %v1397
    %1399 = vmatmul.f32.gmra.mxu0 %v836
    %v1400 = vpop.f32.mrf.mxu0
    %v1401 = vadd.f32 %v1219, %v1400
    %1402 = vdwg.mxu0
    %1403 = vmatpush.msra.mxu0 %v963
    %1404 = vmatpush.msra.mxu0 %v959
    %1405 = vmatpush.msra.mxu0 %v955
    %1406 = vmatpush.msra.mxu0 %v951
    %1407 = vmatpush.msra.mxu0 %v947
    %1408 = vmatpush.msra.mxu0 %v943
    %1409 = vmatpush.msra.mxu0 %v939
    %1410 = vmatpush.msra.mxu0 %v935
    %1411 = vmatpush.msra.mxu0 %v931
    %1412 = vmatpush.msra.mxu0 %v927
    %1413 = vmatpush.msra.mxu0 %v923
    %1414 = vmatpush.msra.mxu0 %v919
    %1415 = vmatpush.msra.mxu0 %v915
    %1416 = vmatpush.msra.mxu0 %v911
    %1417 = vmatpush.msra.mxu0 %v907
    %1418 = vmatpush.msra.mxu0 %v903
    %1419 = vmatmul.f32.gmra.mxu0 %v833
    %v1420 = vpop.f32.mrf.mxu0
    %v1421 = vadd.f32 %v1395, %v1420
    %1422 = vmatmul.f32.gmra.mxu0 %v835
    %v1423 = vpop.f32.mrf.mxu0
    %v1424 = vadd.f32 %v1398, %v1423
    %1425 = vmatmul.f32.gmra.mxu0 %v837
    %v1426 = vpop.f32.mrf.mxu0
    %v1427 = vadd.f32 %v1401, %v1426
    %1428 = vdwg.mxu0
    %1429 = vmatpush.msra.mxu0 %v900
    %1430 = vmatpush.msra.mxu0 %v896
    %1431 = vmatpush.msra.mxu0 %v892
    %1432 = vmatpush.msra.mxu0 %v888
    %1433 = vmatpush.msra.mxu0 %v884
    %1434 = vmatpush.msra.mxu0 %v880
    %1435 = vmatpush.msra.mxu0 %v876
    %1436 = vmatpush.msra.mxu0 %v872
    %1437 = vmatpush.msra.mxu0 %v868
    %1438 = vmatpush.msra.mxu0 %v864
    %1439 = vmatpush.msra.mxu0 %v860
    %1440 = vmatpush.msra.mxu0 %v856
    %1441 = vmatpush.msra.mxu0 %v852
    %1442 = vmatpush.msra.mxu0 %v848
    %1443 = vmatpush.msra.mxu0 %v844
    %1444 = vmatpush.msra.mxu0 %v840
    %1445 = vmatmul.f32.gmra.mxu0 %v832
    %v1446 = vpop.f32.mrf.mxu0
    %v1447 = vadd.f32 %v1265, %v1446
    %1448 = vmatmul.f32.gmra.mxu0 %v834
    %v1449 = vpop.f32.mrf.mxu0
    %v1450 = vadd.f32 %v1268, %v1449
    %1451 = vmatmul.f32.gmra.mxu0 %v836
    %v1452 = vpop.f32.mrf.mxu0
    %v1453 = vadd.f32 %v1271, %v1452
    %1454 = vdwg.mxu0
    %1455 = vmatpush.msra.mxu0 %v964
    %1456 = vmatpush.msra.mxu0 %v960
    %1457 = vmatpush.msra.mxu0 %v956
    %1458 = vmatpush.msra.mxu0 %v952
    %1459 = vmatpush.msra.mxu0 %v948
    %1460 = vmatpush.msra.mxu0 %v944
    %1461 = vmatpush.msra.mxu0 %v940
    %1462 = vmatpush.msra.mxu0 %v936
    %1463 = vmatpush.msra.mxu0 %v932
    %1464 = vmatpush.msra.mxu0 %v928
    %1465 = vmatpush.msra.mxu0 %v924
    %1466 = vmatpush.msra.mxu0 %v920
    %1467 = vmatpush.msra.mxu0 %v916
    %1468 = vmatpush.msra.mxu0 %v912
    %1469 = vmatpush.msra.mxu0 %v908
    %1470 = vmatpush.msra.mxu0 %v904
    %1471 = vmatmul.f32.gmra.mxu0 %v833
    %v1472 = vpop.f32.mrf.mxu0
    %v1473 = vadd.f32 %v1447, %v1472
    %1474 = vmatmul.f32.gmra.mxu0 %v835
    %v1475 = vpop.f32.mrf.mxu0
    %v1476 = vadd.f32 %v1450, %v1475
    %1477 = vmatmul.f32.gmra.mxu0 %v837
    %v1478 = vpop.f32.mrf.mxu0
    %v1479 = vadd.f32 %v1453, %v1478
    %1480 = vdwg.mxu0
    %1481 = vmatpush.msra.mxu0 %v901
    %1482 = vmatpush.msra.mxu0 %v897
    %1483 = vmatpush.msra.mxu0 %v893
    %1484 = vmatpush.msra.mxu0 %v889
    %1485 = vmatpush.msra.mxu0 %v885
    %1486 = vmatpush.msra.mxu0 %v881
    %1487 = vmatpush.msra.mxu0 %v877
    %1488 = vmatpush.msra.mxu0 %v873
    %1489 = vmatpush.msra.mxu0 %v869
    %1490 = vmatpush.msra.mxu0 %v865
    %1491 = vmatpush.msra.mxu0 %v861
    %1492 = vmatpush.msra.mxu0 %v857
    %1493 = vmatpush.msra.mxu0 %v853
    %1494 = vmatpush.msra.mxu0 %v849
    %1495 = vmatpush.msra.mxu0 %v845
    %1496 = vmatpush.msra.mxu0 %v841
    %1497 = vmatmul.f32.gmra.mxu0 %v832
    %v1498 = vpop.f32.mrf.mxu0
    %v1499 = vadd.f32 %v1317, %v1498
    %1500 = vmatmul.f32.gmra.mxu0 %v834
    %v1501 = vpop.f32.mrf.mxu0
    %v1502 = vadd.f32 %v1320, %v1501
    %1503 = vmatmul.f32.gmra.mxu0 %v836
    %v1504 = vpop.f32.mrf.mxu0
    %v1505 = vadd.f32 %v1323, %v1504
    %1506 = vdwg.mxu0
    %1507 = vmatpush.msra.mxu0 %v965
    %1508 = vmatpush.msra.mxu0 %v961
    %1509 = vmatpush.msra.mxu0 %v957
    %1510 = vmatpush.msra.mxu0 %v953
    %1511 = vmatpush.msra.mxu0 %v949
    %1512 = vmatpush.msra.mxu0 %v945
    %1513 = vmatpush.msra.mxu0 %v941
    %1514 = vmatpush.msra.mxu0 %v937
    %1515 = vmatpush.msra.mxu0 %v933
    %1516 = vmatpush.msra.mxu0 %v929
    %1517 = vmatpush.msra.mxu0 %v925
    %1518 = vmatpush.msra.mxu0 %v921
    %1519 = vmatpush.msra.mxu0 %v917
    %1520 = vmatpush.msra.mxu0 %v913
    %1521 = vmatpush.msra.mxu0 %v909
    %1522 = vmatpush.msra.mxu0 %v905
    %1523 = vmatmul.f32.gmra.mxu0 %v833
    %v1524 = vpop.f32.mrf.mxu0
    %v1525 = vadd.f32 %v1499, %v1524
    %1526 = vmatmul.f32.gmra.mxu0 %v835
    %v1527 = vpop.f32.mrf.mxu0
    %v1528 = vadd.f32 %v1502, %v1527
    %1529 = vmatmul.f32.gmra.mxu0 %v837
    %v1530 = vpop.f32.mrf.mxu0
    %v1531 = vadd.f32 %v1505, %v1530
    %1532 = vdwg.mxu0
    %s1533 = scalar_lea.vmem %s5, 2048
    %v1534 = vld [vmem:[%s1533] sm:$0xff]
    %v1535 = vld [vmem:[%s1533 + $0x8] sm:$0xff]
    %v1536 = vld [vmem:[%s1533 + $0x10] sm:$0xff]
    %v1537 = vld [vmem:[%s1533 + $0x18] sm:$0xff]
    %v1538 = vld [vmem:[%s1533 + $0x20] sm:$0xff]
    %v1539 = vld [vmem:[%s1533 + $0x28] sm:$0xff]
    %v1540 = vld [vmem:[%s1533 + $0x30] sm:$0xff]
    %v1541 = vld [vmem:[%s1533 + $0x38] sm:$0xff]
    %v1542 = vld [vmem:[%s1533 + $0x40] sm:$0xff]
    %v1543 = vld [vmem:[%s1533 + $0x48] sm:$0xff]
    %v1544 = vld [vmem:[%s1533 + $0x50] sm:$0xff]
    %v1545 = vld [vmem:[%s1533 + $0x58] sm:$0xff]
    %v1546 = vld [vmem:[%s1533 + $0x60] sm:$0xff]
    %v1547 = vld [vmem:[%s1533 + $0x68] sm:$0xff]
    %v1548 = vld [vmem:[%s1533 + $0x70] sm:$0xff]
    %v1549 = vld [vmem:[%s1533 + $0x78] sm:$0xff]
    %v1550 = vld [vmem:[%s1533 + $0x80] sm:$0xff]
    %v1551 = vld [vmem:[%s1533 + $0x88] sm:$0xff]
    %v1552 = vld [vmem:[%s1533 + $0x90] sm:$0xff]
    %v1553 = vld [vmem:[%s1533 + $0x98] sm:$0xff]
    %v1554 = vld [vmem:[%s1533 + $0xa0] sm:$0xff]
    %v1555 = vld [vmem:[%s1533 + $0xa8] sm:$0xff]
    %v1556 = vld [vmem:[%s1533 + $0xb0] sm:$0xff]
    %v1557 = vld [vmem:[%s1533 + $0xb8] sm:$0xff]
    %v1558 = vld [vmem:[%s1533 + $0xc0] sm:$0xff]
    %v1559 = vld [vmem:[%s1533 + $0xc8] sm:$0xff]
    %v1560 = vld [vmem:[%s1533 + $0xd0] sm:$0xff]
    %v1561 = vld [vmem:[%s1533 + $0xd8] sm:$0xff]
    %v1562 = vld [vmem:[%s1533 + $0xe0] sm:$0xff]
    %v1563 = vld [vmem:[%s1533 + $0xe8] sm:$0xff]
    %v1564 = vld [vmem:[%s1533 + $0xf0] sm:$0xff]
    %v1565 = vld [vmem:[%s1533 + $0xf8] sm:$0xff]
    %v1566 = vld [vmem:[%s1533 + $0x100] sm:$0xff]
    %v1567 = vld [vmem:[%s1533 + $0x108] sm:$0xff]
    %v1568 = vld [vmem:[%s1533 + $0x110] sm:$0xff]
    %v1569 = vld [vmem:[%s1533 + $0x118] sm:$0xff]
    %v1570 = vld [vmem:[%s1533 + $0x120] sm:$0xff]
    %v1571 = vld [vmem:[%s1533 + $0x128] sm:$0xff]
    %v1572 = vld [vmem:[%s1533 + $0x130] sm:$0xff]
    %v1573 = vld [vmem:[%s1533 + $0x138] sm:$0xff]
    %v1574 = vld [vmem:[%s1533 + $0x140] sm:$0xff]
    %v1575 = vld [vmem:[%s1533 + $0x148] sm:$0xff]
    %v1576 = vld [vmem:[%s1533 + $0x150] sm:$0xff]
    %v1577 = vld [vmem:[%s1533 + $0x158] sm:$0xff]
    %v1578 = vld [vmem:[%s1533 + $0x160] sm:$0xff]
    %v1579 = vld [vmem:[%s1533 + $0x168] sm:$0xff]
    %v1580 = vld [vmem:[%s1533 + $0x170] sm:$0xff]
    %v1581 = vld [vmem:[%s1533 + $0x178] sm:$0xff]
    %v1582 = vld [vmem:[%s1533 + $0x180] sm:$0xff]
    %v1583 = vld [vmem:[%s1533 + $0x188] sm:$0xff]
    %v1584 = vld [vmem:[%s1533 + $0x190] sm:$0xff]
    %v1585 = vld [vmem:[%s1533 + $0x198] sm:$0xff]
    %v1586 = vld [vmem:[%s1533 + $0x1a0] sm:$0xff]
    %v1587 = vld [vmem:[%s1533 + $0x1a8] sm:$0xff]
    %v1588 = vld [vmem:[%s1533 + $0x1b0] sm:$0xff]
    %v1589 = vld [vmem:[%s1533 + $0x1b8] sm:$0xff]
    %v1590 = vld [vmem:[%s1533 + $0x1c0] sm:$0xff]
    %v1591 = vld [vmem:[%s1533 + $0x1c8] sm:$0xff]
    %v1592 = vld [vmem:[%s1533 + $0x1d0] sm:$0xff]
    %v1593 = vld [vmem:[%s1533 + $0x1d8] sm:$0xff]
    %v1594 = vld [vmem:[%s1533 + $0x1e0] sm:$0xff]
    %v1595 = vld [vmem:[%s1533 + $0x1e8] sm:$0xff]
    %v1596 = vld [vmem:[%s1533 + $0x1f0] sm:$0xff]
    %v1597 = vld [vmem:[%s1533 + $0x1f8] sm:$0xff]
    %v1598 = vld [vmem:[%s1533 + $0x200] sm:$0xff]
    %v1599 = vld [vmem:[%s1533 + $0x208] sm:$0xff]
    %v1600 = vld [vmem:[%s1533 + $0x210] sm:$0xff]
    %v1601 = vld [vmem:[%s1533 + $0x218] sm:$0xff]
    %v1602 = vld [vmem:[%s1533 + $0x220] sm:$0xff]
    %v1603 = vld [vmem:[%s1533 + $0x228] sm:$0xff]
    %v1604 = vld [vmem:[%s1533 + $0x230] sm:$0xff]
    %v1605 = vld [vmem:[%s1533 + $0x238] sm:$0xff]
    %v1606 = vld [vmem:[%s1533 + $0x240] sm:$0xff]
    %v1607 = vld [vmem:[%s1533 + $0x248] sm:$0xff]
    %v1608 = vld [vmem:[%s1533 + $0x250] sm:$0xff]
    %v1609 = vld [vmem:[%s1533 + $0x258] sm:$0xff]
    %v1610 = vld [vmem:[%s1533 + $0x260] sm:$0xff]
    %v1611 = vld [vmem:[%s1533 + $0x268] sm:$0xff]
    %v1612 = vld [vmem:[%s1533 + $0x270] sm:$0xff]
    %v1613 = vld [vmem:[%s1533 + $0x278] sm:$0xff]
    %v1614 = vld [vmem:[%s1533 + $0x280] sm:$0xff]
    %v1615 = vld [vmem:[%s1533 + $0x288] sm:$0xff]
    %v1616 = vld [vmem:[%s1533 + $0x290] sm:$0xff]
    %v1617 = vld [vmem:[%s1533 + $0x298] sm:$0xff]
    %v1618 = vld [vmem:[%s1533 + $0x2a0] sm:$0xff]
    %v1619 = vld [vmem:[%s1533 + $0x2a8] sm:$0xff]
    %v1620 = vld [vmem:[%s1533 + $0x2b0] sm:$0xff]
    %v1621 = vld [vmem:[%s1533 + $0x2b8] sm:$0xff]
    %v1622 = vld [vmem:[%s1533 + $0x2c0] sm:$0xff]
    %v1623 = vld [vmem:[%s1533 + $0x2c8] sm:$0xff]
    %v1624 = vld [vmem:[%s1533 + $0x2d0] sm:$0xff]
    %v1625 = vld [vmem:[%s1533 + $0x2d8] sm:$0xff]
    %v1626 = vld [vmem:[%s1533 + $0x2e0] sm:$0xff]
    %v1627 = vld [vmem:[%s1533 + $0x2e8] sm:$0xff]
    %v1628 = vld [vmem:[%s1533 + $0x2f0] sm:$0xff]
    %v1629 = vld [vmem:[%s1533 + $0x2f8] sm:$0xff]
    %v1630 = vld [vmem:[%s1533 + $0x300] sm:$0xff]
    %v1631 = vld [vmem:[%s1533 + $0x308] sm:$0xff]
    %v1632 = vld [vmem:[%s1533 + $0x310] sm:$0xff]
    %v1633 = vld [vmem:[%s1533 + $0x318] sm:$0xff]
    %v1634 = vld [vmem:[%s1533 + $0x320] sm:$0xff]
    %v1635 = vld [vmem:[%s1533 + $0x328] sm:$0xff]
    %v1636 = vld [vmem:[%s1533 + $0x330] sm:$0xff]
    %v1637 = vld [vmem:[%s1533 + $0x338] sm:$0xff]
    %v1638 = vld [vmem:[%s1533 + $0x340] sm:$0xff]
    %v1639 = vld [vmem:[%s1533 + $0x348] sm:$0xff]
    %v1640 = vld [vmem:[%s1533 + $0x350] sm:$0xff]
    %v1641 = vld [vmem:[%s1533 + $0x358] sm:$0xff]
    %v1642 = vld [vmem:[%s1533 + $0x360] sm:$0xff]
    %v1643 = vld [vmem:[%s1533 + $0x368] sm:$0xff]
    %v1644 = vld [vmem:[%s1533 + $0x370] sm:$0xff]
    %v1645 = vld [vmem:[%s1533 + $0x378] sm:$0xff]
    %v1646 = vld [vmem:[%s1533 + $0x380] sm:$0xff]
    %v1647 = vld [vmem:[%s1533 + $0x388] sm:$0xff]
    %v1648 = vld [vmem:[%s1533 + $0x390] sm:$0xff]
    %v1649 = vld [vmem:[%s1533 + $0x398] sm:$0xff]
    %v1650 = vld [vmem:[%s1533 + $0x3a0] sm:$0xff]
    %v1651 = vld [vmem:[%s1533 + $0x3a8] sm:$0xff]
    %v1652 = vld [vmem:[%s1533 + $0x3b0] sm:$0xff]
    %v1653 = vld [vmem:[%s1533 + $0x3b8] sm:$0xff]
    %v1654 = vld [vmem:[%s1533 + $0x3c0] sm:$0xff]
    %v1655 = vld [vmem:[%s1533 + $0x3c8] sm:$0xff]
    %v1656 = vld [vmem:[%s1533 + $0x3d0] sm:$0xff]
    %v1657 = vld [vmem:[%s1533 + $0x3d8] sm:$0xff]
    %v1658 = vld [vmem:[%s1533 + $0x3e0] sm:$0xff]
    %v1659 = vld [vmem:[%s1533 + $0x3e8] sm:$0xff]
    %v1660 = vld [vmem:[%s1533 + $0x3f0] sm:$0xff]
    %v1661 = vld [vmem:[%s1533 + $0x3f8] sm:$0xff]
    %v1662 = vrot.slane %v832, 2
    %v1663 = vrot.slane %v834, 2
    %v1664 = vsel %vm414, %v1662, %v1663
    %v1665 = vrot.slane %v833, 2
    %v1666 = vrot.slane %v835, 2
    %v1667 = vsel %vm414, %v1665, %v1666
    %v1668 = vrot.slane %v836, 2
    %v1669 = vsel %vm414, %v1663, %v1668
    %v1670 = vrot.slane %v837, 2
    %v1671 = vsel %vm414, %v1666, %v1670
    %1678 = vmatpush.msra.mxu0 %v1594
    %1679 = vmatpush.msra.mxu0 %v1590
    %1680 = vmatpush.msra.mxu0 %v1586
    %1681 = vmatpush.msra.mxu0 %v1582
    %1682 = vmatpush.msra.mxu0 %v1578
    %1683 = vmatpush.msra.mxu0 %v1574
    %1684 = vmatpush.msra.mxu0 %v1570
    %1685 = vmatpush.msra.mxu0 %v1566
    %1686 = vmatpush.msra.mxu0 %v1562
    %1687 = vmatpush.msra.mxu0 %v1558
    %1688 = vmatpush.msra.mxu0 %v1554
    %1689 = vmatpush.msra.mxu0 %v1550
    %1690 = vmatpush.msra.mxu0 %v1546
    %1691 = vmatpush.msra.mxu0 %v1542
    %1692 = vmatpush.msra.mxu0 %v1538
    %1693 = vmatpush.msra.mxu0 %v1534
    %1694 = vmatmul.f32.gmra.mxu0 %v1664
    %v1695 = vpop.f32.mrf.mxu0
    %v1696 = vadd.f32 0.0, %v1695
    %1697 = vmatmul.f32.gmra.mxu0 %v1669
    %v1698 = vpop.f32.mrf.mxu0
    %v1699 = vadd.f32 0.0, %v1698
    %1700 = vmatmul.f32.gmra.mxu0 %v1668
    %v1701 = vpop.f32.mrf.mxu0
    %v1702 = vadd.f32 0.0, %v1701
    %1703 = vdwg.mxu0
    %1704 = vmatpush.msra.mxu0 %v1658
    %1705 = vmatpush.msra.mxu0 %v1654
    %1706 = vmatpush.msra.mxu0 %v1650
    %1707 = vmatpush.msra.mxu0 %v1646
    %1708 = vmatpush.msra.mxu0 %v1642
    %1709 = vmatpush.msra.mxu0 %v1638
    %1710 = vmatpush.msra.mxu0 %v1634
    %1711 = vmatpush.msra.mxu0 %v1630
    %1712 = vmatpush.msra.mxu0 %v1626
    %1713 = vmatpush.msra.mxu0 %v1622
    %1714 = vmatpush.msra.mxu0 %v1618
    %1715 = vmatpush.msra.mxu0 %v1614
    %1716 = vmatpush.msra.mxu0 %v1610
    %1717 = vmatpush.msra.mxu0 %v1606
    %1718 = vmatpush.msra.mxu0 %v1602
    %1719 = vmatpush.msra.mxu0 %v1598
    %1720 = vmatmul.f32.gmra.mxu0 %v1667
    %v1721 = vpop.f32.mrf.mxu0
    %v1722 = vadd.f32 %v1696, %v1721
    %1723 = vmatmul.f32.gmra.mxu0 %v1671
    %v1724 = vpop.f32.mrf.mxu0
    %v1725 = vadd.f32 %v1699, %v1724
    %1726 = vmatmul.f32.gmra.mxu0 %v1670
    %v1727 = vpop.f32.mrf.mxu0
    %v1728 = vadd.f32 %v1702, %v1727
    %1729 = vdwg.mxu0
    %1730 = vmatpush.msra.mxu0 %v1595
    %1731 = vmatpush.msra.mxu0 %v1591
    %1732 = vmatpush.msra.mxu0 %v1587
    %1733 = vmatpush.msra.mxu0 %v1583
    %1734 = vmatpush.msra.mxu0 %v1579
    %1735 = vmatpush.msra.mxu0 %v1575
    %1736 = vmatpush.msra.mxu0 %v1571
    %1737 = vmatpush.msra.mxu0 %v1567
    %1738 = vmatpush.msra.mxu0 %v1563
    %1739 = vmatpush.msra.mxu0 %v1559
    %1740 = vmatpush.msra.mxu0 %v1555
    %1741 = vmatpush.msra.mxu0 %v1551
    %1742 = vmatpush.msra.mxu0 %v1547
    %1743 = vmatpush.msra.mxu0 %v1543
    %1744 = vmatpush.msra.mxu0 %v1539
    %1745 = vmatpush.msra.mxu0 %v1535
    %1746 = vmatmul.f32.gmra.mxu0 %v1664
    %v1747 = vpop.f32.mrf.mxu0
    %v1748 = vadd.f32 0.0, %v1747
    %1749 = vmatmul.f32.gmra.mxu0 %v1669
    %v1750 = vpop.f32.mrf.mxu0
    %v1751 = vadd.f32 0.0, %v1750
    %1752 = vmatmul.f32.gmra.mxu0 %v1668
    %v1753 = vpop.f32.mrf.mxu0
    %v1754 = vadd.f32 0.0, %v1753
    %1755 = vdwg.mxu0
    %1756 = vmatpush.msra.mxu0 %v1659
    %1757 = vmatpush.msra.mxu0 %v1655
    %1758 = vmatpush.msra.mxu0 %v1651
    %1759 = vmatpush.msra.mxu0 %v1647
    %1760 = vmatpush.msra.mxu0 %v1643
    %1761 = vmatpush.msra.mxu0 %v1639
    %1762 = vmatpush.msra.mxu0 %v1635
    %1763 = vmatpush.msra.mxu0 %v1631
    %1764 = vmatpush.msra.mxu0 %v1627
    %1765 = vmatpush.msra.mxu0 %v1623
    %1766 = vmatpush.msra.mxu0 %v1619
    %1767 = vmatpush.msra.mxu0 %v1615
    %1768 = vmatpush.msra.mxu0 %v1611
    %1769 = vmatpush.msra.mxu0 %v1607
    %1770 = vmatpush.msra.mxu0 %v1603
    %1771 = vmatpush.msra.mxu0 %v1599
    %1772 = vmatmul.f32.gmra.mxu0 %v1667
    %v1773 = vpop.f32.mrf.mxu0
    %v1774 = vadd.f32 %v1748, %v1773
    %1775 = vmatmul.f32.gmra.mxu0 %v1671
    %v1776 = vpop.f32.mrf.mxu0
    %v1777 = vadd.f32 %v1751, %v1776
    %1778 = vmatmul.f32.gmra.mxu0 %v1670
    %v1779 = vpop.f32.mrf.mxu0
    %v1780 = vadd.f32 %v1754, %v1779
    %1781 = vdwg.mxu0
    %1782 = vmatpush.msra.mxu0 %v1596
    %1783 = vmatpush.msra.mxu0 %v1592
    %1784 = vmatpush.msra.mxu0 %v1588
    %1785 = vmatpush.msra.mxu0 %v1584
    %1786 = vmatpush.msra.mxu0 %v1580
    %1787 = vmatpush.msra.mxu0 %v1576
    %1788 = vmatpush.msra.mxu0 %v1572
    %1789 = vmatpush.msra.mxu0 %v1568
    %1790 = vmatpush.msra.mxu0 %v1564
    %1791 = vmatpush.msra.mxu0 %v1560
    %1792 = vmatpush.msra.mxu0 %v1556
    %1793 = vmatpush.msra.mxu0 %v1552
    %1794 = vmatpush.msra.mxu0 %v1548
    %1795 = vmatpush.msra.mxu0 %v1544
    %1796 = vmatpush.msra.mxu0 %v1540
    %1797 = vmatpush.msra.mxu0 %v1536
    %1798 = vmatmul.f32.gmra.mxu0 %v1664
    %v1799 = vpop.f32.mrf.mxu0
    %v1800 = vadd.f32 0.0, %v1799
    %1801 = vmatmul.f32.gmra.mxu0 %v1669
    %v1802 = vpop.f32.mrf.mxu0
    %v1803 = vadd.f32 0.0, %v1802
    %1804 = vmatmul.f32.gmra.mxu0 %v1668
    %v1805 = vpop.f32.mrf.mxu0
    %v1806 = vadd.f32 0.0, %v1805
    %1807 = vdwg.mxu0
    %1808 = vmatpush.msra.mxu0 %v1660
    %1809 = vmatpush.msra.mxu0 %v1656
    %1810 = vmatpush.msra.mxu0 %v1652
    %1811 = vmatpush.msra.mxu0 %v1648
    %1812 = vmatpush.msra.mxu0 %v1644
    %1813 = vmatpush.msra.mxu0 %v1640
    %1814 = vmatpush.msra.mxu0 %v1636
    %1815 = vmatpush.msra.mxu0 %v1632
    %1816 = vmatpush.msra.mxu0 %v1628
    %1817 = vmatpush.msra.mxu0 %v1624
    %1818 = vmatpush.msra.mxu0 %v1620
    %1819 = vmatpush.msra.mxu0 %v1616
    %1820 = vmatpush.msra.mxu0 %v1612
    %1821 = vmatpush.msra.mxu0 %v1608
    %1822 = vmatpush.msra.mxu0 %v1604
    %1823 = vmatpush.msra.mxu0 %v1600
    %1824 = vmatmul.f32.gmra.mxu0 %v1667
    %v1825 = vpop.f32.mrf.mxu0
    %v1826 = vadd.f32 %v1800, %v1825
    %1827 = vmatmul.f32.gmra.mxu0 %v1671
    %v1828 = vpop.f32.mrf.mxu0
    %v1829 = vadd.f32 %v1803, %v1828
    %1830 = vmatmul.f32.gmra.mxu0 %v1670
    %v1831 = vpop.f32.mrf.mxu0
    %v1832 = vadd.f32 %v1806, %v1831
    %1833 = vdwg.mxu0
    %1834 = vmatpush.msra.mxu0 %v1597
    %1835 = vmatpush.msra.mxu0 %v1593
    %1836 = vmatpush.msra.mxu0 %v1589
    %1837 = vmatpush.msra.mxu0 %v1585
    %1838 = vmatpush.msra.mxu0 %v1581
    %1839 = vmatpush.msra.mxu0 %v1577
    %1840 = vmatpush.msra.mxu0 %v1573
    %1841 = vmatpush.msra.mxu0 %v1569
    %1842 = vmatpush.msra.mxu0 %v1565
    %1843 = vmatpush.msra.mxu0 %v1561
    %1844 = vmatpush.msra.mxu0 %v1557
    %1845 = vmatpush.msra.mxu0 %v1553
    %1846 = vmatpush.msra.mxu0 %v1549
    %1847 = vmatpush.msra.mxu0 %v1545
    %1848 = vmatpush.msra.mxu0 %v1541
    %1849 = vmatpush.msra.mxu0 %v1537
    %1850 = vmatmul.f32.gmra.mxu0 %v1664
    %v1851 = vpop.f32.mrf.mxu0
    %v1852 = vadd.f32 0.0, %v1851
    %1853 = vmatmul.f32.gmra.mxu0 %v1669
    %v1854 = vpop.f32.mrf.mxu0
    %v1855 = vadd.f32 0.0, %v1854
    %1856 = vmatmul.f32.gmra.mxu0 %v1668
    %v1857 = vpop.f32.mrf.mxu0
    %v1858 = vadd.f32 0.0, %v1857
    %1859 = vdwg.mxu0
    %1860 = vmatpush.msra.mxu0 %v1661
    %1861 = vmatpush.msra.mxu0 %v1657
    %1862 = vmatpush.msra.mxu0 %v1653
    %1863 = vmatpush.msra.mxu0 %v1649
    %1864 = vmatpush.msra.mxu0 %v1645
    %1865 = vmatpush.msra.mxu0 %v1641
    %1866 = vmatpush.msra.mxu0 %v1637
    %1867 = vmatpush.msra.mxu0 %v1633
    %1868 = vmatpush.msra.mxu0 %v1629
    %1869 = vmatpush.msra.mxu0 %v1625
    %1870 = vmatpush.msra.mxu0 %v1621
    %1871 = vmatpush.msra.mxu0 %v1617
    %1872 = vmatpush.msra.mxu0 %v1613
    %1873 = vmatpush.msra.mxu0 %v1609
    %1874 = vmatpush.msra.mxu0 %v1605
    %1875 = vmatpush.msra.mxu0 %v1601
    %1876 = vmatmul.f32.gmra.mxu0 %v1667
    %v1877 = vpop.f32.mrf.mxu0
    %v1878 = vadd.f32 %v1852, %v1877
    %1879 = vmatmul.f32.gmra.mxu0 %v1671
    %v1880 = vpop.f32.mrf.mxu0
    %v1881 = vadd.f32 %v1855, %v1880
    %1882 = vmatmul.f32.gmra.mxu0 %v1670
    %v1883 = vpop.f32.mrf.mxu0
    %v1884 = vadd.f32 %v1858, %v1883
    %1885 = vdwg.mxu0
    %v1886 = vadd.f32 %v1369, %v1722
    %v1887 = vadd.f32 %v1421, %v1774
    %v1888 = vadd.f32 %v1473, %v1826
    %v1889 = vadd.f32 %v1525, %v1878
    %v1890 = vadd.f32 %v1372, %v1725
    %v1891 = vadd.f32 %v1424, %v1777
    %v1892 = vadd.f32 %v1476, %v1829
    %v1893 = vadd.f32 %v1528, %v1881
    %v1894 = vadd.f32 %v1375, %v1728
    %v1895 = vadd.f32 %v1427, %v1780
    %v1896 = vadd.f32 %v1479, %v1832
    %v1897 = vadd.f32 %v1531, %v1884
    %v1898 = vld [vmem:[%s6] sm:$0xf]
    %v1900 = vperm.slane %v1898, 0
    %v1901 = vperm.slane %v1898, 1
    %v1902 = vperm.slane %v1898, 2
    %v1903 = vperm.slane %v1898, 3
    %v1908 = vmul.f32 %v1886, %v1900
    %v1909 = vmul.f32 %v1887, %v1901
    %v1910 = vmul.f32 %v1888, %v1902
    %v1911 = vmul.f32 %v1889, %v1903
    %v1912 = vmul.f32 %v1890, %v1900
    %v1913 = vmul.f32 %v1891, %v1901
    %v1914 = vmul.f32 %v1892, %v1902
    %v1915 = vmul.f32 %v1893, %v1903
    %v1916 = vmul.f32 %v1894, %v1900
    %v1917 = vmul.f32 %v1895, %v1901
    %v1918 = vmul.f32 %v1896, %v1902
    %v1919 = vmul.f32 %v1897, %v1903
    %v1920 = vld [vmem:[%s7] sm:$0xf]
    %v1922 = vperm.slane %v1920, 0
    %v1923 = vperm.slane %v1920, 1
    %v1924 = vperm.slane %v1920, 2
    %v1925 = vperm.slane %v1920, 3
    %v1930 = vadd.f32 %v1908, %v1922
    %v1931 = vadd.f32 %v1909, %v1923
    %v1932 = vadd.f32 %v1910, %v1924
    %v1933 = vadd.f32 %v1911, %v1925
    %v1934 = vadd.f32 %v1912, %v1922
    %v1935 = vadd.f32 %v1913, %v1923
    %v1936 = vadd.f32 %v1914, %v1924
    %v1937 = vadd.f32 %v1915, %v1925
    %v1938 = vadd.f32 %v1916, %v1922
    %v1939 = vadd.f32 %v1917, %v1923
    %v1940 = vadd.f32 %v1918, %v1924
    %v1941 = vadd.f32 %v1919, %v1925
    %v1942 = vmax.f32 %v1930, 0.0
    %v1943 = vmax.f32 %v1931, 0.0
    %v1944 = vmax.f32 %v1932, 0.0
    %v1945 = vmax.f32 %v1933, 0.0
    %v1946 = vmax.f32 %v1934, 0.0
    %v1947 = vmax.f32 %v1935, 0.0
    %v1948 = vmax.f32 %v1936, 0.0
    %v1949 = vmax.f32 %v1937, 0.0
    %v1950 = vmax.f32 %v1938, 0.0
    %v1951 = vmax.f32 %v1939, 0.0
    %v1952 = vmax.f32 %v1940, 0.0
    %v1953 = vmax.f32 %v1941, 0.0
    %v1954 = vmax.f32 %v1942, %v1944
    %v1955 = vmax.f32 %v1943, %v1945
    %v1956 = vmax.f32 %v1946, %v1948
    %v1957 = vmax.f32 %v1947, %v1949
    %v1958 = vmax.f32 %v1950, %v1952
    %v1959 = vmax.f32 %v1951, %v1953
    %v1960 = vld [vmem:[%s8] sm:$0xff]
    %v1961 = vld [vmem:[%s8 + $0x8] sm:$0xf]
    %v1963 = vsel %vm99, %v1960, 0
    %v1966 = vsel %vm99, %v1961, 0
    %v1969 = vsel %vm110, %v1958, 0
    %v1972 = vsel %vm110, %v1959, 0
    %1974 = vmatpush.msra.mxu0 0.0
    %1975 = vmatpush.msra.mxu0 0.0
    %1976 = vmatpush.msra.mxu0 0.0
    %1977 = vmatpush.msra.mxu0 0.0
    %1978 = vmatpush.msra.mxu0 0.0
    %1979 = vmatpush.msra.mxu0 0.0
    %1980 = vmatpush.msra.mxu0 0.0
    %1981 = vmatpush.msra.mxu0 0.0
    %1982 = vmatpush.msra.mxu0 0.0
    %1983 = vmatpush.msra.mxu0 0.0
    %1984 = vmatpush.msra.mxu0 0.0
    %1985 = vmatpush.msra.mxu0 0.0
    %1986 = vmatpush.msra.mxu0 0.0
    %1987 = vmatpush.msra.mxu0 %v1969
    %1988 = vmatpush.msra.mxu0 %v1956
    %1989 = vmatpush.msra.mxu0 %v1954
    %1990 = vmatmul.f32.gmra.mxu0 %v1963
    %v1991 = vpop.f32.mrf.mxu0
    %v1992 = vadd.f32 0.0, %v1991
    %1993 = vmatmul.f32.gmra.mxu0 %v1966
    %v1994 = vpop.f32.mrf.mxu0
    %v1995 = vadd.f32 0.0, %v1994
    %1996 = vdwg.mxu0
    %1997 = vmatpush.msra.mxu0 0.0
    %1998 = vmatpush.msra.mxu0 0.0
    %1999 = vmatpush.msra.mxu0 0.0
    %2000 = vmatpush.msra.mxu0 0.0
    %2001 = vmatpush.msra.mxu0 0.0
    %2002 = vmatpush.msra.mxu0 0.0
    %2003 = vmatpush.msra.mxu0 0.0
    %2004 = vmatpush.msra.mxu0 0.0
    %2005 = vmatpush.msra.mxu0 0.0
    %2006 = vmatpush.msra.mxu0 0.0
    %2007 = vmatpush.msra.mxu0 0.0
    %2008 = vmatpush.msra.mxu0 0.0
    %2009 = vmatpush.msra.mxu0 0.0
    %2010 = vmatpush.msra.mxu0 %v1972
    %2011 = vmatpush.msra.mxu0 %v1957
    %2012 = vmatpush.msra.mxu0 %v1955
    %2013 = vmatmul.f32.gmra.mxu0 %v1963
    %v2014 = vpop.f32.mrf.mxu0
    %v2015 = vadd.f32 0.0, %v2014
    %2016 = vmatmul.f32.gmra.mxu0 %v1966
    %v2017 = vpop.f32.mrf.mxu0
    %v2018 = vadd.f32 0.0, %v2017
    %2019 = vdwg.mxu0
    %s2020 = scalar_lea.vmem %s8, 16
    %v2021 = vld [vmem:[%s2020] sm:$0xff]
    %v2022 = vld [vmem:[%s2020 + $0x8] sm:$0xf]
    %v2024 = vsel %vm99, %v2021, 0
    %v2027 = vsel %vm99, %v2022, 0
    %2029 = vmatpush.msra.mxu0 0.0
    %2030 = vmatpush.msra.mxu0 0.0
    %2031 = vmatpush.msra.mxu0 0.0
    %2032 = vmatpush.msra.mxu0 0.0
    %2033 = vmatpush.msra.mxu0 0.0
    %2034 = vmatpush.msra.mxu0 0.0
    %2035 = vmatpush.msra.mxu0 0.0
    %2036 = vmatpush.msra.mxu0 0.0
    %2037 = vmatpush.msra.mxu0 0.0
    %2038 = vmatpush.msra.mxu0 0.0
    %2039 = vmatpush.msra.mxu0 0.0
    %2040 = vmatpush.msra.mxu0 0.0
    %2041 = vmatpush.msra.mxu0 0.0
    %2042 = vmatpush.msra.mxu0 %v1969
    %2043 = vmatpush.msra.mxu0 %v1956
    %2044 = vmatpush.msra.mxu0 %v1954
    %2045 = vmatmul.f32.gmra.mxu0 %v2024
    %v2046 = vpop.f32.mrf.mxu0
    %v2047 = vadd.f32 0.0, %v2046
    %2048 = vmatmul.f32.gmra.mxu0 %v2027
    %v2049 = vpop.f32.mrf.mxu0
    %v2050 = vadd.f32 0.0, %v2049
    %2051 = vdwg.mxu0
    %2052 = vmatpush.msra.mxu0 0.0
    %2053 = vmatpush.msra.mxu0 0.0
    %2054 = vmatpush.msra.mxu0 0.0
    %2055 = vmatpush.msra.mxu0 0.0
    %2056 = vmatpush.msra.mxu0 0.0
    %2057 = vmatpush.msra.mxu0 0.0
    %2058 = vmatpush.msra.mxu0 0.0
    %2059 = vmatpush.msra.mxu0 0.0
    %2060 = vmatpush.msra.mxu0 0.0
    %2061 = vmatpush.msra.mxu0 0.0
    %2062 = vmatpush.msra.mxu0 0.0
    %2063 = vmatpush.msra.mxu0 0.0
    %2064 = vmatpush.msra.mxu0 0.0
    %2065 = vmatpush.msra.mxu0 %v1972
    %2066 = vmatpush.msra.mxu0 %v1957
    %2067 = vmatpush.msra.mxu0 %v1955
    %2068 = vmatmul.f32.gmra.mxu0 %v2024
    %v2069 = vpop.f32.mrf.mxu0
    %v2070 = vadd.f32 0.0, %v2069
    %2071 = vmatmul.f32.gmra.mxu0 %v2027
    %v2072 = vpop.f32.mrf.mxu0
    %v2073 = vadd.f32 0.0, %v2072
    %2074 = vdwg.mxu0
    %v2075 = vmax.f32 %v1992, %v2047
    %v2076 = vmax.f32 %v2015, %v2070
    %v2077 = vmax.f32 %v1995, %v2050
    %v2078 = vmax.f32 %v2018, %v2073
    %2079 = vst [vmem:[#allocation3] sm:$0xff] %v2075
    %2080 = vst [vmem:[#allocation3 + $0x8] sm:$0xff] %v2076
    %2081 = vst [vmem:[#allocation3 + $0x10] sm:$0xf] %v2077
    %2082 = vst [vmem:[#allocation3 + $0x18] sm:$0xf] %v2078
    %v2083 = vld [vmem:[#allocation3] sm:$0xff]
    %v2084 = vld [vmem:[#allocation3 + $0x8] sm:$0xff]
    %v2085 = vld [vmem:[#allocation3 + $0x10] sm:$0xf]
    %v2086 = vld [vmem:[#allocation3 + $0x18] sm:$0xf]
    %v2087 = vld [vmem:[%s9] sm:$0xff]
    %v2088 = vld [vmem:[%s9 + $0x8] sm:$0xff]
    %v2089 = vld [vmem:[%s9 + $0x10] sm:$0xff]
    %v2090 = vld [vmem:[%s9 + $0x18] sm:$0xff]
    %v2091 = vld [vmem:[%s9 + $0x20] sm:$0xff]
    %v2092 = vld [vmem:[%s9 + $0x28] sm:$0xff]
    %v2093 = vld [vmem:[%s9 + $0x30] sm:$0xff]
    %v2094 = vld [vmem:[%s9 + $0x38] sm:$0xff]
    %v2095 = vld [vmem:[%s9 + $0x40] sm:$0xff]
    %v2096 = vld [vmem:[%s9 + $0x48] sm:$0xff]
    %v2097 = vld [vmem:[%s9 + $0x50] sm:$0xff]
    %v2098 = vld [vmem:[%s9 + $0x58] sm:$0xff]
    %v2099 = vld [vmem:[%s9 + $0x60] sm:$0xff]
    %v2100 = vld [vmem:[%s9 + $0x68] sm:$0xff]
    %v2101 = vld [vmem:[%s9 + $0x70] sm:$0xff]
    %v2102 = vld [vmem:[%s9 + $0x78] sm:$0xff]
    %v2103 = vld [vmem:[%s9 + $0x80] sm:$0xff]
    %v2104 = vld [vmem:[%s9 + $0x88] sm:$0xff]
    %v2105 = vld [vmem:[%s9 + $0x90] sm:$0xff]
    %v2106 = vld [vmem:[%s9 + $0x98] sm:$0xff]
    %v2107 = vld [vmem:[%s9 + $0xa0] sm:$0xff]
    %v2108 = vld [vmem:[%s9 + $0xa8] sm:$0xff]
    %v2109 = vld [vmem:[%s9 + $0xb0] sm:$0xff]
    %v2110 = vld [vmem:[%s9 + $0xb8] sm:$0xff]
    %v2111 = vld [vmem:[%s9 + $0xc0] sm:$0xff]
    %v2112 = vld [vmem:[%s9 + $0xc8] sm:$0xff]
    %v2113 = vld [vmem:[%s9 + $0xd0] sm:$0xff]
    %v2114 = vld [vmem:[%s9 + $0xd8] sm:$0xff]
    %v2115 = vld [vmem:[%s9 + $0xe0] sm:$0xff]
    %v2116 = vld [vmem:[%s9 + $0xe8] sm:$0xff]
    %v2117 = vld [vmem:[%s9 + $0xf0] sm:$0xff]
    %v2118 = vld [vmem:[%s9 + $0xf8] sm:$0xff]
    %v2119 = vld [vmem:[%s9 + $0x100] sm:$0xff]
    %v2120 = vld [vmem:[%s9 + $0x108] sm:$0xff]
    %v2121 = vld [vmem:[%s9 + $0x110] sm:$0xff]
    %v2122 = vld [vmem:[%s9 + $0x118] sm:$0xff]
    %v2123 = vld [vmem:[%s9 + $0x120] sm:$0xff]
    %v2124 = vld [vmem:[%s9 + $0x128] sm:$0xff]
    %v2125 = vld [vmem:[%s9 + $0x130] sm:$0xff]
    %v2126 = vld [vmem:[%s9 + $0x138] sm:$0xff]
    %v2127 = vld [vmem:[%s9 + $0x140] sm:$0xff]
    %v2128 = vld [vmem:[%s9 + $0x148] sm:$0xff]
    %v2129 = vld [vmem:[%s9 + $0x150] sm:$0xff]
    %v2130 = vld [vmem:[%s9 + $0x158] sm:$0xff]
    %v2131 = vld [vmem:[%s9 + $0x160] sm:$0xff]
    %v2132 = vld [vmem:[%s9 + $0x168] sm:$0xff]
    %v2133 = vld [vmem:[%s9 + $0x170] sm:$0xff]
    %v2134 = vld [vmem:[%s9 + $0x178] sm:$0xff]
    %v2135 = vld [vmem:[%s9 + $0x180] sm:$0xff]
    %v2136 = vld [vmem:[%s9 + $0x188] sm:$0xff]
    %v2137 = vld [vmem:[%s9 + $0x190] sm:$0xff]
    %v2138 = vld [vmem:[%s9 + $0x198] sm:$0xff]
    %v2139 = vld [vmem:[%s9 + $0x1a0] sm:$0xff]
    %v2140 = vld [vmem:[%s9 + $0x1a8] sm:$0xff]
    %v2141 = vld [vmem:[%s9 + $0x1b0] sm:$0xff]
    %v2142 = vld [vmem:[%s9 + $0x1b8] sm:$0xff]
    %v2143 = vld [vmem:[%s9 + $0x1c0] sm:$0xff]
    %v2144 = vld [vmem:[%s9 + $0x1c8] sm:$0xff]
    %v2145 = vld [vmem:[%s9 + $0x1d0] sm:$0xff]
    %v2146 = vld [vmem:[%s9 + $0x1d8] sm:$0xff]
    %v2147 = vld [vmem:[%s9 + $0x1e0] sm:$0xff]
    %v2148 = vld [vmem:[%s9 + $0x1e8] sm:$0xff]
    %v2149 = vld [vmem:[%s9 + $0x1f0] sm:$0xff]
    %v2150 = vld [vmem:[%s9 + $0x1f8] sm:$0xff]
    %s2151 = scalar_lea.vmem %s9, 512
    %v2152 = vld [vmem:[%s2151] sm:$0xff]
    %v2153 = vld [vmem:[%s2151 + $0x8] sm:$0xff]
    %v2154 = vld [vmem:[%s2151 + $0x10] sm:$0xff]
    %v2155 = vld [vmem:[%s2151 + $0x18] sm:$0xff]
    %v2156 = vld [vmem:[%s2151 + $0x20] sm:$0xff]
    %v2157 = vld [vmem:[%s2151 + $0x28] sm:$0xff]
    %v2158 = vld [vmem:[%s2151 + $0x30] sm:$0xff]
    %v2159 = vld [vmem:[%s2151 + $0x38] sm:$0xff]
    %v2160 = vld [vmem:[%s2151 + $0x40] sm:$0xff]
    %v2161 = vld [vmem:[%s2151 + $0x48] sm:$0xff]
    %v2162 = vld [vmem:[%s2151 + $0x50] sm:$0xff]
    %v2163 = vld [vmem:[%s2151 + $0x58] sm:$0xff]
    %v2164 = vld [vmem:[%s2151 + $0x60] sm:$0xff]
    %v2165 = vld [vmem:[%s2151 + $0x68] sm:$0xff]
    %v2166 = vld [vmem:[%s2151 + $0x70] sm:$0xff]
    %v2167 = vld [vmem:[%s2151 + $0x78] sm:$0xff]
    %v2168 = vld [vmem:[%s2151 + $0x80] sm:$0xff]
    %v2169 = vld [vmem:[%s2151 + $0x88] sm:$0xff]
    %v2170 = vld [vmem:[%s2151 + $0x90] sm:$0xff]
    %v2171 = vld [vmem:[%s2151 + $0x98] sm:$0xff]
    %v2172 = vld [vmem:[%s2151 + $0xa0] sm:$0xff]
    %v2173 = vld [vmem:[%s2151 + $0xa8] sm:$0xff]
    %v2174 = vld [vmem:[%s2151 + $0xb0] sm:$0xff]
    %v2175 = vld [vmem:[%s2151 + $0xb8] sm:$0xff]
    %v2176 = vld [vmem:[%s2151 + $0xc0] sm:$0xff]
    %v2177 = vld [vmem:[%s2151 + $0xc8] sm:$0xff]
    %v2178 = vld [vmem:[%s2151 + $0xd0] sm:$0xff]
    %v2179 = vld [vmem:[%s2151 + $0xd8] sm:$0xff]
    %v2180 = vld [vmem:[%s2151 + $0xe0] sm:$0xff]
    %v2181 = vld [vmem:[%s2151 + $0xe8] sm:$0xff]
    %v2182 = vld [vmem:[%s2151 + $0xf0] sm:$0xff]
    %v2183 = vld [vmem:[%s2151 + $0xf8] sm:$0xff]
    %v2184 = vld [vmem:[%s2151 + $0x100] sm:$0xff]
    %v2185 = vld [vmem:[%s2151 + $0x108] sm:$0xff]
    %v2186 = vld [vmem:[%s2151 + $0x110] sm:$0xff]
    %v2187 = vld [vmem:[%s2151 + $0x118] sm:$0xff]
    %v2188 = vld [vmem:[%s2151 + $0x120] sm:$0xff]
    %v2189 = vld [vmem:[%s2151 + $0x128] sm:$0xff]
    %v2190 = vld [vmem:[%s2151 + $0x130] sm:$0xff]
    %v2191 = vld [vmem:[%s2151 + $0x138] sm:$0xff]
    %v2192 = vld [vmem:[%s2151 + $0x140] sm:$0xff]
    %v2193 = vld [vmem:[%s2151 + $0x148] sm:$0xff]
    %v2194 = vld [vmem:[%s2151 + $0x150] sm:$0xff]
    %v2195 = vld [vmem:[%s2151 + $0x158] sm:$0xff]
    %v2196 = vld [vmem:[%s2151 + $0x160] sm:$0xff]
    %v2197 = vld [vmem:[%s2151 + $0x168] sm:$0xff]
    %v2198 = vld [vmem:[%s2151 + $0x170] sm:$0xff]
    %v2199 = vld [vmem:[%s2151 + $0x178] sm:$0xff]
    %v2200 = vld [vmem:[%s2151 + $0x180] sm:$0xff]
    %v2201 = vld [vmem:[%s2151 + $0x188] sm:$0xff]
    %v2202 = vld [vmem:[%s2151 + $0x190] sm:$0xff]
    %v2203 = vld [vmem:[%s2151 + $0x198] sm:$0xff]
    %v2204 = vld [vmem:[%s2151 + $0x1a0] sm:$0xff]
    %v2205 = vld [vmem:[%s2151 + $0x1a8] sm:$0xff]
    %v2206 = vld [vmem:[%s2151 + $0x1b0] sm:$0xff]
    %v2207 = vld [vmem:[%s2151 + $0x1b8] sm:$0xff]
    %v2208 = vld [vmem:[%s2151 + $0x1c0] sm:$0xff]
    %v2209 = vld [vmem:[%s2151 + $0x1c8] sm:$0xff]
    %v2210 = vld [vmem:[%s2151 + $0x1d0] sm:$0xff]
    %v2211 = vld [vmem:[%s2151 + $0x1d8] sm:$0xff]
    %v2212 = vld [vmem:[%s2151 + $0x1e0] sm:$0xff]
    %v2213 = vld [vmem:[%s2151 + $0x1e8] sm:$0xff]
    %v2214 = vld [vmem:[%s2151 + $0x1f0] sm:$0xff]
    %v2215 = vld [vmem:[%s2151 + $0x1f8] sm:$0xff]
    %v2220 = vrot.slane %v2083, 1
    %v2221 = vrot.slane %v2085, 1
    %v2222 = vsel %vm89, %v2220, %v2221
    %v2223 = vrot.slane %v2084, 1
    %v2224 = vrot.slane %v2086, 1
    %v2225 = vsel %vm89, %v2223, %v2224
    %2230 = vmatpush.msra.mxu0 %v2182
    %2231 = vmatpush.msra.mxu0 %v2180
    %2232 = vmatpush.msra.mxu0 %v2178
    %2233 = vmatpush.msra.mxu0 %v2176
    %2234 = vmatpush.msra.mxu0 %v2174
    %2235 = vmatpush.msra.mxu0 %v2172
    %2236 = vmatpush.msra.mxu0 %v2170
    %2237 = vmatpush.msra.mxu0 %v2168
    %2238 = vmatpush.msra.mxu0 %v2166
    %2239 = vmatpush.msra.mxu0 %v2164
    %2240 = vmatpush.msra.mxu0 %v2162
    %2241 = vmatpush.msra.mxu0 %v2160
    %2242 = vmatpush.msra.mxu0 %v2158
    %2243 = vmatpush.msra.mxu0 %v2156
    %2244 = vmatpush.msra.mxu0 %v2154
    %2245 = vmatpush.msra.mxu0 %v2152
    %2246 = vmatmul.f32.gmra.mxu0 %v2222
    %v2247 = vpop.f32.mrf.mxu0
    %v2248 = vadd.f32 0.0, %v2247
    %2249 = vmatmul.f32.gmra.mxu0 %v2221
    %v2250 = vpop.f32.mrf.mxu0
    %v2251 = vadd.f32 0.0, %v2250
    %2252 = vdwg.mxu0
    %2253 = vmatpush.msra.mxu0 %v2214
    %2254 = vmatpush.msra.mxu0 %v2212
    %2255 = vmatpush.msra.mxu0 %v2210
    %2256 = vmatpush.msra.mxu0 %v2208
    %2257 = vmatpush.msra.mxu0 %v2206
    %2258 = vmatpush.msra.mxu0 %v2204
    %2259 = vmatpush.msra.mxu0 %v2202
    %2260 = vmatpush.msra.mxu0 %v2200
    %2261 = vmatpush.msra.mxu0 %v2198
    %2262 = vmatpush.msra.mxu0 %v2196
    %2263 = vmatpush.msra.mxu0 %v2194
    %2264 = vmatpush.msra.mxu0 %v2192
    %2265 = vmatpush.msra.mxu0 %v2190
    %2266 = vmatpush.msra.mxu0 %v2188
    %2267 = vmatpush.msra.mxu0 %v2186
    %2268 = vmatpush.msra.mxu0 %v2184
    %2269 = vmatmul.f32.gmra.mxu0 %v2225
    %v2270 = vpop.f32.mrf.mxu0
    %v2271 = vadd.f32 %v2248, %v2270
    %2272 = vmatmul.f32.gmra.mxu0 %v2224
    %v2273 = vpop.f32.mrf.mxu0
    %v2274 = vadd.f32 %v2251, %v2273
    %2275 = vdwg.mxu0
    %2276 = vmatpush.msra.mxu0 %v2183
    %2277 = vmatpush.msra.mxu0 %v2181
    %2278 = vmatpush.msra.mxu0 %v2179
    %2279 = vmatpush.msra.mxu0 %v2177
    %2280 = vmatpush.msra.mxu0 %v2175
    %2281 = vmatpush.msra.mxu0 %v2173
    %2282 = vmatpush.msra.mxu0 %v2171
    %2283 = vmatpush.msra.mxu0 %v2169
    %2284 = vmatpush.msra.mxu0 %v2167
    %2285 = vmatpush.msra.mxu0 %v2165
    %2286 = vmatpush.msra.mxu0 %v2163
    %2287 = vmatpush.msra.mxu0 %v2161
    %2288 = vmatpush.msra.mxu0 %v2159
    %2289 = vmatpush.msra.mxu0 %v2157
    %2290 = vmatpush.msra.mxu0 %v2155
    %2291 = vmatpush.msra.mxu0 %v2153
    %2292 = vmatmul.f32.gmra.mxu0 %v2222
    %v2293 = vpop.f32.mrf.mxu0
    %v2294 = vadd.f32 0.0, %v2293
    %2295 = vmatmul.f32.gmra.mxu0 %v2221
    %v2296 = vpop.f32.mrf.mxu0
    %v2297 = vadd.f32 0.0, %v2296
    %2298 = vdwg.mxu0
    %2299 = vmatpush.msra.mxu0 %v2215
    %2300 = vmatpush.msra.mxu0 %v2213
    %2301 = vmatpush.msra.mxu0 %v2211
    %2302 = vmatpush.msra.mxu0 %v2209
    %2303 = vmatpush.msra.mxu0 %v2207
    %2304 = vmatpush.msra.mxu0 %v2205
    %2305 = vmatpush.msra.mxu0 %v2203
    %2306 = vmatpush.msra.mxu0 %v2201
    %2307 = vmatpush.msra.mxu0 %v2199
    %2308 = vmatpush.msra.mxu0 %v2197
    %2309 = vmatpush.msra.mxu0 %v2195
    %2310 = vmatpush.msra.mxu0 %v2193
    %2311 = vmatpush.msra.mxu0 %v2191
    %2312 = vmatpush.msra.mxu0 %v2189
    %2313 = vmatpush.msra.mxu0 %v2187
    %2314 = vmatpush.msra.mxu0 %v2185
    %2315 = vmatmul.f32.gmra.mxu0 %v2225
    %v2316 = vpop.f32.mrf.mxu0
    %v2317 = vadd.f32 %v2294, %v2316
    %2318 = vmatmul.f32.gmra.mxu0 %v2224
    %v2319 = vpop.f32.mrf.mxu0
    %v2320 = vadd.f32 %v2297, %v2319
    %2321 = vdwg.mxu0
    %2322 = vmatpush.msra.mxu0 %v2117
    %2323 = vmatpush.msra.mxu0 %v2115
    %2324 = vmatpush.msra.mxu0 %v2113
    %2325 = vmatpush.msra.mxu0 %v2111
    %2326 = vmatpush.msra.mxu0 %v2109
    %2327 = vmatpush.msra.mxu0 %v2107
    %2328 = vmatpush.msra.mxu0 %v2105
    %2329 = vmatpush.msra.mxu0 %v2103
    %2330 = vmatpush.msra.mxu0 %v2101
    %2331 = vmatpush.msra.mxu0 %v2099
    %2332 = vmatpush.msra.mxu0 %v2097
    %2333 = vmatpush.msra.mxu0 %v2095
    %2334 = vmatpush.msra.mxu0 %v2093
    %2335 = vmatpush.msra.mxu0 %v2091
    %2336 = vmatpush.msra.mxu0 %v2089
    %2337 = vmatpush.msra.mxu0 %v2087
    %2338 = vmatmul.f32.gmra.mxu0 %v2083
    %v2339 = vpop.f32.mrf.mxu0
    %v2340 = vadd.f32 %v2271, %v2339
    %2341 = vmatmul.f32.gmra.mxu0 %v2085
    %v2342 = vpop.f32.mrf.mxu0
    %v2343 = vadd.f32 %v2274, %v2342
    %2344 = vdwg.mxu0
    %2345 = vmatpush.msra.mxu0 %v2149
    %2346 = vmatpush.msra.mxu0 %v2147
    %2347 = vmatpush.msra.mxu0 %v2145
    %2348 = vmatpush.msra.mxu0 %v2143
    %2349 = vmatpush.msra.mxu0 %v2141
    %2350 = vmatpush.msra.mxu0 %v2139
    %2351 = vmatpush.msra.mxu0 %v2137
    %2352 = vmatpush.msra.mxu0 %v2135
    %2353 = vmatpush.msra.mxu0 %v2133
    %2354 = vmatpush.msra.mxu0 %v2131
    %2355 = vmatpush.msra.mxu0 %v2129
    %2356 = vmatpush.msra.mxu0 %v2127
    %2357 = vmatpush.msra.mxu0 %v2125
    %2358 = vmatpush.msra.mxu0 %v2123
    %2359 = vmatpush.msra.mxu0 %v2121
    %2360 = vmatpush.msra.mxu0 %v2119
    %2361 = vmatmul.f32.gmra.mxu0 %v2084
    %v2362 = vpop.f32.mrf.mxu0
    %v2363 = vadd.f32 %v2340, %v2362
    %2364 = vmatmul.f32.gmra.mxu0 %v2086
    %v2365 = vpop.f32.mrf.mxu0
    %v2366 = vadd.f32 %v2343, %v2365
    %2367 = vdwg.mxu0
    %2368 = vmatpush.msra.mxu0 %v2118
    %2369 = vmatpush.msra.mxu0 %v2116
    %2370 = vmatpush.msra.mxu0 %v2114
    %2371 = vmatpush.msra.mxu0 %v2112
    %2372 = vmatpush.msra.mxu0 %v2110
    %2373 = vmatpush.msra.mxu0 %v2108
    %2374 = vmatpush.msra.mxu0 %v2106
    %2375 = vmatpush.msra.mxu0 %v2104
    %2376 = vmatpush.msra.mxu0 %v2102
    %2377 = vmatpush.msra.mxu0 %v2100
    %2378 = vmatpush.msra.mxu0 %v2098
    %2379 = vmatpush.msra.mxu0 %v2096
    %2380 = vmatpush.msra.mxu0 %v2094
    %2381 = vmatpush.msra.mxu0 %v2092
    %2382 = vmatpush.msra.mxu0 %v2090
    %2383 = vmatpush.msra.mxu0 %v2088
    %2384 = vmatmul.f32.gmra.mxu0 %v2083
    %v2385 = vpop.f32.mrf.mxu0
    %v2386 = vadd.f32 %v2317, %v2385
    %2387 = vmatmul.f32.gmra.mxu0 %v2085
    %v2388 = vpop.f32.mrf.mxu0
    %v2389 = vadd.f32 %v2320, %v2388
    %2390 = vdwg.mxu0
    %2391 = vmatpush.msra.mxu0 %v2150
    %2392 = vmatpush.msra.mxu0 %v2148
    %2393 = vmatpush.msra.mxu0 %v2146
    %2394 = vmatpush.msra.mxu0 %v2144
    %2395 = vmatpush.msra.mxu0 %v2142
    %2396 = vmatpush.msra.mxu0 %v2140
    %2397 = vmatpush.msra.mxu0 %v2138
    %2398 = vmatpush.msra.mxu0 %v2136
    %2399 = vmatpush.msra.mxu0 %v2134
    %2400 = vmatpush.msra.mxu0 %v2132
    %2401 = vmatpush.msra.mxu0 %v2130
    %2402 = vmatpush.msra.mxu0 %v2128
    %2403 = vmatpush.msra.mxu0 %v2126
    %2404 = vmatpush.msra.mxu0 %v2124
    %2405 = vmatpush.msra.mxu0 %v2122
    %2406 = vmatpush.msra.mxu0 %v2120
    %2407 = vmatmul.f32.gmra.mxu0 %v2084
    %v2408 = vpop.f32.mrf.mxu0
    %v2409 = vadd.f32 %v2386, %v2408
    %2410 = vmatmul.f32.gmra.mxu0 %v2086
    %v2411 = vpop.f32.mrf.mxu0
    %v2412 = vadd.f32 %v2389, %v2411
    %2413 = vdwg.mxu0
    %s2414 = scalar_lea.vmem %s9, 1024
    %v2415 = vld [vmem:[%s2414] sm:$0xff]
    %v2416 = vld [vmem:[%s2414 + $0x8] sm:$0xff]
    %v2417 = vld [vmem:[%s2414 + $0x10] sm:$0xff]
    %v2418 = vld [vmem:[%s2414 + $0x18] sm:$0xff]
    %v2419 = vld [vmem:[%s2414 + $0x20] sm:$0xff]
    %v2420 = vld [vmem:[%s2414 + $0x28] sm:$0xff]
    %v2421 = vld [vmem:[%s2414 + $0x30] sm:$0xff]
    %v2422 = vld [vmem:[%s2414 + $0x38] sm:$0xff]
    %v2423 = vld [vmem:[%s2414 + $0x40] sm:$0xff]
    %v2424 = vld [vmem:[%s2414 + $0x48] sm:$0xff]
    %v2425 = vld [vmem:[%s2414 + $0x50] sm:$0xff]
    %v2426 = vld [vmem:[%s2414 + $0x58] sm:$0xff]
    %v2427 = vld [vmem:[%s2414 + $0x60] sm:$0xff]
    %v2428 = vld [vmem:[%s2414 + $0x68] sm:$0xff]
    %v2429 = vld [vmem:[%s2414 + $0x70] sm:$0xff]
    %v2430 = vld [vmem:[%s2414 + $0x78] sm:$0xff]
    %v2431 = vld [vmem:[%s2414 + $0x80] sm:$0xff]
    %v2432 = vld [vmem:[%s2414 + $0x88] sm:$0xff]
    %v2433 = vld [vmem:[%s2414 + $0x90] sm:$0xff]
    %v2434 = vld [vmem:[%s2414 + $0x98] sm:$0xff]
    %v2435 = vld [vmem:[%s2414 + $0xa0] sm:$0xff]
    %v2436 = vld [vmem:[%s2414 + $0xa8] sm:$0xff]
    %v2437 = vld [vmem:[%s2414 + $0xb0] sm:$0xff]
    %v2438 = vld [vmem:[%s2414 + $0xb8] sm:$0xff]
    %v2439 = vld [vmem:[%s2414 + $0xc0] sm:$0xff]
    %v2440 = vld [vmem:[%s2414 + $0xc8] sm:$0xff]
    %v2441 = vld [vmem:[%s2414 + $0xd0] sm:$0xff]
    %v2442 = vld [vmem:[%s2414 + $0xd8] sm:$0xff]
    %v2443 = vld [vmem:[%s2414 + $0xe0] sm:$0xff]
    %v2444 = vld [vmem:[%s2414 + $0xe8] sm:$0xff]
    %v2445 = vld [vmem:[%s2414 + $0xf0] sm:$0xff]
    %v2446 = vld [vmem:[%s2414 + $0xf8] sm:$0xff]
    %v2447 = vld [vmem:[%s2414 + $0x100] sm:$0xff]
    %v2448 = vld [vmem:[%s2414 + $0x108] sm:$0xff]
    %v2449 = vld [vmem:[%s2414 + $0x110] sm:$0xff]
    %v2450 = vld [vmem:[%s2414 + $0x118] sm:$0xff]
    %v2451 = vld [vmem:[%s2414 + $0x120] sm:$0xff]
    %v2452 = vld [vmem:[%s2414 + $0x128] sm:$0xff]
    %v2453 = vld [vmem:[%s2414 + $0x130] sm:$0xff]
    %v2454 = vld [vmem:[%s2414 + $0x138] sm:$0xff]
    %v2455 = vld [vmem:[%s2414 + $0x140] sm:$0xff]
    %v2456 = vld [vmem:[%s2414 + $0x148] sm:$0xff]
    %v2457 = vld [vmem:[%s2414 + $0x150] sm:$0xff]
    %v2458 = vld [vmem:[%s2414 + $0x158] sm:$0xff]
    %v2459 = vld [vmem:[%s2414 + $0x160] sm:$0xff]
    %v2460 = vld [vmem:[%s2414 + $0x168] sm:$0xff]
    %v2461 = vld [vmem:[%s2414 + $0x170] sm:$0xff]
    %v2462 = vld [vmem:[%s2414 + $0x178] sm:$0xff]
    %v2463 = vld [vmem:[%s2414 + $0x180] sm:$0xff]
    %v2464 = vld [vmem:[%s2414 + $0x188] sm:$0xff]
    %v2465 = vld [vmem:[%s2414 + $0x190] sm:$0xff]
    %v2466 = vld [vmem:[%s2414 + $0x198] sm:$0xff]
    %v2467 = vld [vmem:[%s2414 + $0x1a0] sm:$0xff]
    %v2468 = vld [vmem:[%s2414 + $0x1a8] sm:$0xff]
    %v2469 = vld [vmem:[%s2414 + $0x1b0] sm:$0xff]
    %v2470 = vld [vmem:[%s2414 + $0x1b8] sm:$0xff]
    %v2471 = vld [vmem:[%s2414 + $0x1c0] sm:$0xff]
    %v2472 = vld [vmem:[%s2414 + $0x1c8] sm:$0xff]
    %v2473 = vld [vmem:[%s2414 + $0x1d0] sm:$0xff]
    %v2474 = vld [vmem:[%s2414 + $0x1d8] sm:$0xff]
    %v2475 = vld [vmem:[%s2414 + $0x1e0] sm:$0xff]
    %v2476 = vld [vmem:[%s2414 + $0x1e8] sm:$0xff]
    %v2477 = vld [vmem:[%s2414 + $0x1f0] sm:$0xff]
    %v2478 = vld [vmem:[%s2414 + $0x1f8] sm:$0xff]
    %v2479 = vrot.slane %v2083, 2
    %v2480 = vrot.slane %v2085, 2
    %v2481 = vsel %vm414, %v2479, %v2480
    %v2482 = vrot.slane %v2084, 2
    %v2483 = vrot.slane %v2086, 2
    %v2484 = vsel %vm414, %v2482, %v2483
    %2489 = vmatpush.msra.mxu0 %v2445
    %2490 = vmatpush.msra.mxu0 %v2443
    %2491 = vmatpush.msra.mxu0 %v2441
    %2492 = vmatpush.msra.mxu0 %v2439
    %2493 = vmatpush.msra.mxu0 %v2437
    %2494 = vmatpush.msra.mxu0 %v2435
    %2495 = vmatpush.msra.mxu0 %v2433
    %2496 = vmatpush.msra.mxu0 %v2431
    %2497 = vmatpush.msra.mxu0 %v2429
    %2498 = vmatpush.msra.mxu0 %v2427
    %2499 = vmatpush.msra.mxu0 %v2425
    %2500 = vmatpush.msra.mxu0 %v2423
    %2501 = vmatpush.msra.mxu0 %v2421
    %2502 = vmatpush.msra.mxu0 %v2419
    %2503 = vmatpush.msra.mxu0 %v2417
    %2504 = vmatpush.msra.mxu0 %v2415
    %2505 = vmatmul.f32.gmra.mxu0 %v2481
    %v2506 = vpop.f32.mrf.mxu0
    %v2507 = vadd.f32 0.0, %v2506
    %2508 = vmatmul.f32.gmra.mxu0 %v2480
    %v2509 = vpop.f32.mrf.mxu0
    %v2510 = vadd.f32 0.0, %v2509
    %2511 = vdwg.mxu0
    %2512 = vmatpush.msra.mxu0 %v2477
    %2513 = vmatpush.msra.mxu0 %v2475
    %2514 = vmatpush.msra.mxu0 %v2473
    %2515 = vmatpush.msra.mxu0 %v2471
    %2516 = vmatpush.msra.mxu0 %v2469
    %2517 = vmatpush.msra.mxu0 %v2467
    %2518 = vmatpush.msra.mxu0 %v2465
    %2519 = vmatpush.msra.mxu0 %v2463
    %2520 = vmatpush.msra.mxu0 %v2461
    %2521 = vmatpush.msra.mxu0 %v2459
    %2522 = vmatpush.msra.mxu0 %v2457
    %2523 = vmatpush.msra.mxu0 %v2455
    %2524 = vmatpush.msra.mxu0 %v2453
    %2525 = vmatpush.msra.mxu0 %v2451
    %2526 = vmatpush.msra.mxu0 %v2449
    %2527 = vmatpush.msra.mxu0 %v2447
    %2528 = vmatmul.f32.gmra.mxu0 %v2484
    %v2529 = vpop.f32.mrf.mxu0
    %v2530 = vadd.f32 %v2507, %v2529
    %2531 = vmatmul.f32.gmra.mxu0 %v2483
    %v2532 = vpop.f32.mrf.mxu0
    %v2533 = vadd.f32 %v2510, %v2532
    %2534 = vdwg.mxu0
    %2535 = vmatpush.msra.mxu0 %v2446
    %2536 = vmatpush.msra.mxu0 %v2444
    %2537 = vmatpush.msra.mxu0 %v2442
    %2538 = vmatpush.msra.mxu0 %v2440
    %2539 = vmatpush.msra.mxu0 %v2438
    %2540 = vmatpush.msra.mxu0 %v2436
    %2541 = vmatpush.msra.mxu0 %v2434
    %2542 = vmatpush.msra.mxu0 %v2432
    %2543 = vmatpush.msra.mxu0 %v2430
    %2544 = vmatpush.msra.mxu0 %v2428
    %2545 = vmatpush.msra.mxu0 %v2426
    %2546 = vmatpush.msra.mxu0 %v2424
    %2547 = vmatpush.msra.mxu0 %v2422
    %2548 = vmatpush.msra.mxu0 %v2420
    %2549 = vmatpush.msra.mxu0 %v2418
    %2550 = vmatpush.msra.mxu0 %v2416
    %2551 = vmatmul.f32.gmra.mxu0 %v2481
    %v2552 = vpop.f32.mrf.mxu0
    %v2553 = vadd.f32 0.0, %v2552
    %2554 = vmatmul.f32.gmra.mxu0 %v2480
    %v2555 = vpop.f32.mrf.mxu0
    %v2556 = vadd.f32 0.0, %v2555
    %2557 = vdwg.mxu0
    %2558 = vmatpush.msra.mxu0 %v2478
    %2559 = vmatpush.msra.mxu0 %v2476
    %2560 = vmatpush.msra.mxu0 %v2474
    %2561 = vmatpush.msra.mxu0 %v2472
    %2562 = vmatpush.msra.mxu0 %v2470
    %2563 = vmatpush.msra.mxu0 %v2468
    %2564 = vmatpush.msra.mxu0 %v2466
    %2565 = vmatpush.msra.mxu0 %v2464
    %2566 = vmatpush.msra.mxu0 %v2462
    %2567 = vmatpush.msra.mxu0 %v2460
    %2568 = vmatpush.msra.mxu0 %v2458
    %2569 = vmatpush.msra.mxu0 %v2456
    %2570 = vmatpush.msra.mxu0 %v2454
    %2571 = vmatpush.msra.mxu0 %v2452
    %2572 = vmatpush.msra.mxu0 %v2450
    %2573 = vmatpush.msra.mxu0 %v2448
    %2574 = vmatmul.f32.gmra.mxu0 %v2484
    %v2575 = vpop.f32.mrf.mxu0
    %v2576 = vadd.f32 %v2553, %v2575
    %2577 = vmatmul.f32.gmra.mxu0 %v2483
    %v2578 = vpop.f32.mrf.mxu0
    %v2579 = vadd.f32 %v2556, %v2578
    %2580 = vdwg.mxu0
    %v2581 = vadd.f32 %v2363, %v2530
    %v2582 = vadd.f32 %v2409, %v2576
    %v2583 = vadd.f32 %v2366, %v2533
    %v2584 = vadd.f32 %v2412, %v2579
    %v2585 = vld [vmem:[%s10] sm:$0x3]
    %v2587 = vperm.slane %v2585, 0
    %v2588 = vperm.slane %v2585, 1
    %v2591 = vmul.f32 %v2581, %v2587
    %v2592 = vmul.f32 %v2582, %v2588
    %v2593 = vmul.f32 %v2583, %v2587
    %v2594 = vmul.f32 %v2584, %v2588
    %v2595 = vld [vmem:[%s11] sm:$0x3]
    %v2597 = vperm.slane %v2595, 0
    %v2598 = vperm.slane %v2595, 1
    %v2601 = vadd.f32 %v2591, %v2597
    %v2602 = vadd.f32 %v2592, %v2598
    %v2603 = vadd.f32 %v2593, %v2597
    %v2604 = vadd.f32 %v2594, %v2598
    %v2605 = vmax.f32 %v2601, 0.0
    %v2606 = vmax.f32 %v2602, 0.0
    %v2607 = vmax.f32 %v2603, 0.0
    %v2608 = vmax.f32 %v2604, 0.0
    %v2609 = vmax.f32 %v2605, %v2606
    %v2610 = vmax.f32 %v2607, %v2608
    %v2611 = vld [vmem:[%s12] sm:$0xf]
    %vm2612 = vcmask 80896
    %v2614 = vsel %vm2612, %v2611, 0
    %v2617 = vsel %vm110, %v2610, 0
    %2619 = vmatpush.msra.mxu0 0.0
    %2620 = vmatpush.msra.mxu0 0.0
    %2621 = vmatpush.msra.mxu0 0.0
    %2622 = vmatpush.msra.mxu0 0.0
    %2623 = vmatpush.msra.mxu0 0.0
    %2624 = vmatpush.msra.mxu0 0.0
    %2625 = vmatpush.msra.mxu0 0.0
    %2626 = vmatpush.msra.mxu0 0.0
    %2627 = vmatpush.msra.mxu0 0.0
    %2628 = vmatpush.msra.mxu0 0.0
    %2629 = vmatpush.msra.mxu0 0.0
    %2630 = vmatpush.msra.mxu0 0.0
    %2631 = vmatpush.msra.mxu0 0.0
    %2632 = vmatpush.msra.mxu0 0.0
    %2633 = vmatpush.msra.mxu0 %v2617
    %2634 = vmatpush.msra.mxu0 %v2609
    %2635 = vmatmul.f32.gmra.mxu0 %v2614
    %v2636 = vpop.f32.mrf.mxu0
    %v2637 = vadd.f32 0.0, %v2636
    %2638 = vdwg.mxu0
    %s2639 = scalar_lea.vmem %s12, 4
    %v2640 = vld [vmem:[%s2639] sm:$0xf]
    %v2642 = vsel %vm2612, %v2640, 0
    %2644 = vmatpush.msra.mxu0 0.0
    %2645 = vmatpush.msra.mxu0 0.0
    %2646 = vmatpush.msra.mxu0 0.0
    %2647 = vmatpush.msra.mxu0 0.0
    %2648 = vmatpush.msra.mxu0 0.0
    %2649 = vmatpush.msra.mxu0 0.0
    %2650 = vmatpush.msra.mxu0 0.0
    %2651 = vmatpush.msra.mxu0 0.0
    %2652 = vmatpush.msra.mxu0 0.0
    %2653 = vmatpush.msra.mxu0 0.0
    %2654 = vmatpush.msra.mxu0 0.0
    %2655 = vmatpush.msra.mxu0 0.0
    %2656 = vmatpush.msra.mxu0 0.0
    %2657 = vmatpush.msra.mxu0 0.0
    %2658 = vmatpush.msra.mxu0 %v2617
    %2659 = vmatpush.msra.mxu0 %v2609
    %2660 = vmatmul.f32.gmra.mxu0 %v2642
    %v2661 = vpop.f32.mrf.mxu0
    %v2662 = vadd.f32 0.0, %v2661
    %2663 = vdwg.mxu0
    %v2664 = vmax.f32 %v2637, %v2662
    %v2665 = vld [vmem:[%s15] sm:$0x1]
    %v2666 = vld [vmem:[%s14] sm:$0x3]
    %vm2667 = vcmask 31744
    %v2669 = vsel %vm2667, %v2666, 0
    %vm2671 = vcmask 1043456
    %v2673 = vsel %vm2671, %v2664, 0
    %2675 = vmatpush.msra.mxu0 0.0
    %2676 = vmatpush.msra.mxu0 0.0
    %2677 = vmatpush.msra.mxu0 0.0
    %2678 = vmatpush.msra.mxu0 0.0
    %2679 = vmatpush.msra.mxu0 0.0
    %2680 = vmatpush.msra.mxu0 0.0
    %2681 = vmatpush.msra.mxu0 0.0
    %2682 = vmatpush.msra.mxu0 0.0
    %2683 = vmatpush.msra.mxu0 0.0
    %2684 = vmatpush.msra.mxu0 0.0
    %2685 = vmatpush.msra.mxu0 0.0
    %2686 = vmatpush.msra.mxu0 0.0
    %2687 = vmatpush.msra.mxu0 0.0
    %2688 = vmatpush.msra.mxu0 0.0
    %2689 = vmatpush.msra.mxu0 0.0
    %2690 = vmatpush.msra.mxu0 %v2673
    %2691 = vmatmul.f32.gmra.mxu0 %v2669
    %v2692 = vpop.f32.mrf.mxu0
    %v2693 = vadd.f32 0.0, %v2692
    %2694 = vdwg.mxu0
    %v2695 = vld [vmem:[%s13] sm:$0xff]
    %v2696 = vld [vmem:[%s13 + $0x8] sm:$0xff]
    %v2697 = vld [vmem:[%s13 + $0x10] sm:$0xff]
    %v2698 = vld [vmem:[%s13 + $0x18] sm:$0xff]
    %v2699 = vld [vmem:[%s13 + $0x20] sm:$0xff]
    %v2700 = vld [vmem:[%s13 + $0x28] sm:$0xff]
    %v2701 = vld [vmem:[%s13 + $0x30] sm:$0xff]
    %v2702 = vld [vmem:[%s13 + $0x38] sm:$0xff]
    %v2703 = vld [vmem:[%s13 + $0x40] sm:$0xff]
    %v2704 = vld [vmem:[%s13 + $0x48] sm:$0xff]
    %v2705 = vld [vmem:[%s13 + $0x50] sm:$0xff]
    %v2706 = vld [vmem:[%s13 + $0x58] sm:$0xff]
    %v2707 = vld [vmem:[%s13 + $0x60] sm:$0xff]
    %v2708 = vld [vmem:[%s13 + $0x68] sm:$0xff]
    %v2709 = vld [vmem:[%s13 + $0x70] sm:$0xff]
    %v2710 = vld [vmem:[%s13 + $0x78] sm:$0xff]
    %2711 = vmatpush.msra.mxu0 %v2710
    %2712 = vmatpush.msra.mxu0 %v2709
    %2713 = vmatpush.msra.mxu0 %v2708
    %2714 = vmatpush.msra.mxu0 %v2707
    %2715 = vmatpush.msra.mxu0 %v2706
    %2716 = vmatpush.msra.mxu0 %v2705
    %2717 = vmatpush.msra.mxu0 %v2704
    %2718 = vmatpush.msra.mxu0 %v2703
    %2719 = vmatpush.msra.mxu0 %v2702
    %2720 = vmatpush.msra.mxu0 %v2701
    %2721 = vmatpush.msra.mxu0 %v2700
    %2722 = vmatpush.msra.mxu0 %v2699
    %2723 = vmatpush.msra.mxu0 %v2698
    %2724 = vmatpush.msra.mxu0 %v2697
    %2725 = vmatpush.msra.mxu0 %v2696
    %2726 = vmatpush.msra.mxu0 %v2695
    %2727 = vmatmul.f32.gmra.mxu0 %v2693
    %v2728 = vpop.f32.mrf.mxu0
    %v2729 = vadd.f32 0.0, %v2728
    %2730 = vdwg.mxu0
    %v2732 = vperm.slane %v2665, 0
    %v2734 = vadd.f32 %v2732, %v2729
    %s2735 = scalar_lea.vmem %s14, 2
    %v2736 = vld [vmem:[%s2735] sm:$0x3]
    %v2738 = vsel %vm2667, %v2736, 0
    %2740 = vmatpush.msra.mxu0 0.0
    %2741 = vmatpush.msra.mxu0 0.0
    %2742 = vmatpush.msra.mxu0 0.0
    %2743 = vmatpush.msra.mxu0 0.0
    %2744 = vmatpush.msra.mxu0 0.0
    %2745 = vmatpush.msra.mxu0 0.0
    %2746 = vmatpush.msra.mxu0 0.0
    %2747 = vmatpush.msra.mxu0 0.0
    %2748 = vmatpush.msra.mxu0 0.0
    %2749 = vmatpush.msra.mxu0 0.0
    %2750 = vmatpush.msra.mxu0 0.0
    %2751 = vmatpush.msra.mxu0 0.0
    %2752 = vmatpush.msra.mxu0 0.0
    %2753 = vmatpush.msra.mxu0 0.0
    %2754 = vmatpush.msra.mxu0 0.0
    %2755 = vmatpush.msra.mxu0 %v2673
    %2756 = vmatmul.f32.gmra.mxu0 %v2738
    %v2757 = vpop.f32.mrf.mxu0
    %v2758 = vadd.f32 0.0, %v2757
    %2759 = vdwg.mxu0
    %s2760 = scalar_lea.vmem %s13, 128
    %v2761 = vld [vmem:[%s2760] sm:$0xff]
    %v2762 = vld [vmem:[%s2760 + $0x8] sm:$0xff]
    %v2763 = vld [vmem:[%s2760 + $0x10] sm:$0xff]
    %v2764 = vld [vmem:[%s2760 + $0x18] sm:$0xff]
    %v2765 = vld [vmem:[%s2760 + $0x20] sm:$0xff]
    %v2766 = vld [vmem:[%s2760 + $0x28] sm:$0xff]
    %v2767 = vld [vmem:[%s2760 + $0x30] sm:$0xff]
    %v2768 = vld [vmem:[%s2760 + $0x38] sm:$0xff]
    %v2769 = vld [vmem:[%s2760 + $0x40] sm:$0xff]
    %v2770 = vld [vmem:[%s2760 + $0x48] sm:$0xff]
    %v2771 = vld [vmem:[%s2760 + $0x50] sm:$0xff]
    %v2772 = vld [vmem:[%s2760 + $0x58] sm:$0xff]
    %v2773 = vld [vmem:[%s2760 + $0x60] sm:$0xff]
    %v2774 = vld [vmem:[%s2760 + $0x68] sm:$0xff]
    %v2775 = vld [vmem:[%s2760 + $0x70] sm:$0xff]
    %v2776 = vld [vmem:[%s2760 + $0x78] sm:$0xff]
    %2777 = vmatpush.msra.mxu0 %v2776
    %2778 = vmatpush.msra.mxu0 %v2775
    %2779 = vmatpush.msra.mxu0 %v2774
    %2780 = vmatpush.msra.mxu0 %v2773
    %2781 = vmatpush.msra.mxu0 %v2772
    %2782 = vmatpush.msra.mxu0 %v2771
    %2783 = vmatpush.msra.mxu0 %v2770
    %2784 = vmatpush.msra.mxu0 %v2769
    %2785 = vmatpush.msra.mxu0 %v2768
    %2786 = vmatpush.msra.mxu0 %v2767
    %2787 = vmatpush.msra.mxu0 %v2766
    %2788 = vmatpush.msra.mxu0 %v2765
    %2789 = vmatpush.msra.mxu0 %v2764
    %2790 = vmatpush.msra.mxu0 %v2763
    %2791 = vmatpush.msra.mxu0 %v2762
    %2792 = vmatpush.msra.mxu0 %v2761
    %2793 = vmatmul.f32.gmra.mxu0 %v2758
    %v2794 = vpop.f32.mrf.mxu0
    %v2795 = vadd.f32 0.0, %v2794
    %2796 = vdwg.mxu0
    %v2797 = vadd.f32 %v2734, %v2795
    %vm2798 = vcmask 74752
    %2799 = vst.msk [vmem:[#allocation4] sm:$0x3] %vm2798, %v2797
    // Predicated region
    $region66: #{compact_student_net_forward.1} parent=1 // pred_check
      _
    $region67: #{compact_student_net_forward.1} parent=1 // pred_check_branch
      %2801 = sbr.rel (0) target = $region69
    $region68: #{compact_student_net_forward.1} parent=1 // pred_region
      %2803 = vsyncadd [#allocation5], 0
      %s2805 = sshll.u32 [#allocation4], 4
      %s2806 = int_to_ptr.vmem [resolvable:$true] %s2805
      %s2807 = sshll.u32 %s16, 4
      %s2808 = int_to_ptr.hbm [resolvable:$true] %s2807
      %2810 = dma.vmem_to_hbm [thread:$0]  %s2806, 32, %s2808, [#allocation5]
    $region69: #{compact_student_net_forward.1} parent=1 // pred_fallthru
      _
    // Predicated region
    $region70: #{compact_student_net_forward.1} parent=1 // pred_check
      _
    $region71: #{compact_student_net_forward.1} parent=1 // pred_check_branch
      %2812 = sbr.rel (0) target = $region73
    $region72: #{compact_student_net_forward.1} parent=1 // pred_region
      %2814 = dma.done [#allocation5], 32
    $region73: #{compact_student_net_forward.1} parent=1 // pred_fallthru
      _
    %2815 = vsyncpa [#allocation5], 1

</llo_original>
